<compile_context>
chip_gen: v7x
topology: tpu7x:2x2x1
jax: 0.10.0
libtpu: 0.0.40
codegen_flags: <defaults>
</compile_context>

<pallas_src>
import numpy as np
import jax
import jax.numpy as jnp
from jax import lax
from jax.experimental import pallas as pl
from jax.experimental.pallas import tpu as pltpu

PAD = 5                    # half-width of the widest conv (kernel_size=11)
KSIZES = [3, 5, 7, 9, 11]
NTAPS = 2 * PAD + 1        # 11
N_CONV = len(KSIZES)       # 5
NEG_SLOPE = 0.01           # PyTorch leaky_relu default

# v6e/v7x: single fused K=11*C im2col matmul. On v5e (single vst slot, 128-wide MXU)
# set False to use the 11-tap accumulation formulation instead.
IM2COL_CONV = True


def _leaky(x):
    return jnp.where(x >= 0, x, NEG_SLOPE * x)


def selfatt_kernel(x_ref, convw_ref, fc1w_ref, fc2w_ref, vqkw_ref, rdw_ref,
                   pack_ref, o_ref):
    x = x_ref[...]                                   # (TB, L, C) f32, already NLC
    TB, L, C = x.shape
    n_rd, HC, _ = rdw_ref.shape
    H = HC // C                                      # n_head
    M = TB * L

    # ---- packed small params (f32), sliced at static offsets -----------------
    conv_b = pack_ref[0:1, 0:N_CONV * C]             # (1, 5C)
    fc1_b = pack_ref[1:2, 0:2 * C]                   # (1, 2C)
    fc2_b = pack_ref[2:3, 0:C]                       # (1, C)
    vqk_b = pack_ref[3:4, 0:C + 2 * H]               # (1, C+2H)
    out_w = pack_ref[4 + n_rd:5 + n_rd, 0:HC]        # (1, HC)
    out_b = pack_ref[5 + n_rd:6 + n_rd, 0:1]         # (1, 1)

    # ---- MultiScaleConv: leaky per-conv, then sum -----------------------------
    zpad = jnp.zeros((TB, PAD, C), jnp.float32)
    xpad = jnp.concatenate([zpad, x, zpad], axis=1)  # (TB, L + 2*PAD, C)
    convw = convw_ref[...]                           # bf16 (11C, 5C)
    if IM2COL_CONV:
        taps = [xpad[:, t:t + L, :] for t in range(NTAPS)]
        u = jnp.concatenate(taps, axis=-1).reshape(M, NTAPS * C)     # (M, 11C)
        y = jnp.dot(u.astype(jnp.bfloat16), convw,
                    preferred_element_type=jnp.float32) + conv_b     # (M, 5C)
    else:
        acc = jnp.zeros((M, N_CONV * C), jnp.float32)
        for t in range(NTAPS):
            tap = xpad[:, t:t + L, :].reshape(M, C).astype(jnp.bfloat16)
            acc = acc + jnp.dot(tap, convw[t * C:(t + 1) * C, :],
                                preferred_element_type=jnp.float32)
        y = acc + conv_b
    y = _leaky(y)                                    # [leaky(conv_i + b_i)]_i
    msum = y[:, 0:C]
    for i in range(1, N_CONV):
        msum = msum + y[:, i * C:(i + 1) * C]        # (M, C)

    # ---- fc_feature_map: per-token MLP ---------------------------------------
    h1 = _leaky(jnp.dot(msum.astype(jnp.bfloat16), fc1w_ref[...],
                        preferred_element_type=jnp.float32) + fc1_b)  # (M, 2C)
    vals = _leaky(jnp.dot(h1.astype(jnp.bfloat16), fc2w_ref[...],
                          preferred_element_type=jnp.float32) + fc2_b)  # (M, C)

    # ---- AttentivePooling: fused value|query|key projection -------------------
    vqk = jnp.dot(vals.astype(jnp.bfloat16), vqkw_ref[...],
                  preferred_element_type=jnp.float32) + vqk_b        # (M, C+2H)
    v = vqk[:, 0:C].reshape(TB, L, C)
    q = vqk[:, C:C + H]
    k = vqk[:, C + H:C + 2 * H]
    s = (q * k).reshape(TB, L, H)
    m = jnp.max(s, axis=1, keepdims=True)
    e = jnp.exp(s - m)
    attn = e / jnp.sum(e, axis=1, keepdims=True)     # exact divide, f32 softmax
    pooled = jnp.einsum('blh,blc->bhc', attn, v,
                        preferred_element_type=jnp.float32)          # (TB, H, C)
    cat_f = pooled.reshape(TB, HC)                   # head-major (matches torch.cat)

    # ---- residual dense blocks (f32 residual, bf16 MXU operands) --------------
    for j in range(n_rd):
        rb = pack_ref[4 + j:5 + j, 0:HC]             # (1, HC)
        yj = jnp.dot(cat_f.astype(jnp.bfloat16), rdw_ref[j],
                     preferred_element_type=jnp.float32) + rb
        cat_f = cat_f + _leaky(yj)

    # ---- output head -----------------------------------------------------------
    out = jnp.sum(cat_f * out_w, axis=-1, keepdims=True) + out_b     # (TB, 1)
    o_ref[...] = out.reshape(TB, 1, 1)


def _choose_tb(B, L, min_rows=128, grid_splits=2):
    """Batch tile: keep >=grid_splits grid steps when possible (feeds both v7x
    TensorCores) while making the matmul row count TB*L >= min_rows; otherwise
    take the whole batch in one step (best on v5e/v6e)."""
    if grid_splits > 1 and B % grid_splits == 0 and (B // grid_splits) * L >= min_rows:
        return B // grid_splits
    return B


def selfatt_forward(emb, kp, tb=None):
    """emb: (B, C, L) float32 in NCL layout (matching PyTorch Conv1d)."""
    B, C, L = emb.shape
    n_rd, HC, _ = kp['rd_wT'].shape
    H = HC // C

    # one-time NCL -> NLC transpose in XLA (kernel sees lane-dense channels)
    emb_nlc = jnp.transpose(emb, (0, 2, 1))          # (B, L, C)

    TB = tb if tb is not None else _choose_tb(B, L)
    assert B % TB == 0, "batch must be divisible by the batch tile"
    grid = (B // TB,)
    # NOTE: at large TB, keep the per-step live set (double-buffered (TB,L,C) input,
    # im2col buffer (TB*L, 11C), y (TB*L, 5C), weights) under ~24 MiB on v7x
    # (64 MiB physical VMEM) or raise vmem_limit_bytes; v5e/v6e tolerate ~2x the TB.

    args = (emb_nlc, kp['conv_w'], kp['fc1_wT'], kp['fc2_wT'], kp['vqk_w'],
            kp['rd_wT'], kp['pack'])

    def full_spec(a):
        nd = a.ndim
        return pl.BlockSpec(a.shape, lambda i, nd=nd: (0,) * nd)

    in_specs = [pl.BlockSpec((TB, L, C), lambda i: (i, 0, 0))] \
        + [full_spec(a) for a in args[1:]]

    M = B * L
    flops = (2 * M * (NTAPS * C) * (N_CONV * C)      # fused multi-scale conv
             + 2 * M * C * (2 * C)                   # fc1
             + 2 * M * (2 * C) * C                   # fc2
             + 2 * M * C * (C + 2 * H)               # fused val|q|k
             + 2 * B * H * L * C                     # attentive pooling
             + 2 * B * HC * HC * n_rd                # RD blocks
             + 2 * B * HC)                           # output head
    bytes_accessed = sum(int(a.size) * a.dtype.itemsize for a in args) + B * 4
    cost = pl.CostEstimate(flops=int(flops), transcendentals=int(B * L * H),
                           bytes_accessed=int(bytes_accessed))

    out = pl.pallas_call(
        selfatt_kernel,
        out_shape=jax.ShapeDtypeStruct((B, 1, 1), jnp.float32),
        grid=grid,
        in_specs=in_specs,
        out_specs=pl.BlockSpec((TB, 1, 1), lambda i: (i, 0, 0)),
        compiler_params=pltpu.CompilerParams(dimension_semantics=("parallel",)),
        cost_estimate=cost,
    )(*args)
    return out.reshape(B, 1)


def init_params(key, dim, n_head, n_rd):
    HC = n_head * dim
    keys = jax.random.split(key, 32)
    ki = iter(keys)
    wscale, bscale = 0.1, 0.01

    raw = {}
    # conv weights, PyTorch layout (C_out, C_in, k)
    raw['conv_ws'] = [wscale * jax.random.normal(next(ki), (dim, dim, k), jnp.float32)
                      for k in KSIZES]
    raw['conv_bs'] = [bscale * jax.random.normal(next(ki), (dim,), jnp.float32)
                      for _ in KSIZES]
    raw['fc1_w'] = wscale * jax.random.normal(next(ki), (2 * dim, dim), jnp.float32)
    raw['fc1_b'] = bscale * jax.random.normal(next(ki), (2 * dim,), jnp.float32)
    raw['fc2_w'] = wscale * jax.random.normal(next(ki), (dim, 2 * dim), jnp.float32)
    raw['fc2_b'] = bscale * jax.random.normal(next(ki), (dim,), jnp.float32)
    raw['val_w'] = wscale * jax.random.normal(next(ki), (dim, dim), jnp.float32)
    raw['val_b'] = bscale * jax.random.normal(next(ki), (dim,), jnp.float32)
    raw['q_w'] = wscale * jax.random.normal(next(ki), (n_head, dim), jnp.float32)
    raw['q_b'] = bscale * jax.random.normal(next(ki), (n_head,), jnp.float32)
    raw['k_w'] = wscale * jax.random.normal(next(ki), (n_head, dim), jnp.float32)
    raw['k_b'] = bscale * jax.random.normal(next(ki), (n_head,), jnp.float32)
    raw['rd_w'] = wscale * jax.random.normal(next(ki), (n_rd, HC, HC), jnp.float32)
    raw['rd_b'] = bscale * jax.random.normal(next(ki), (n_rd, HC), jnp.float32)
    raw['out_w'] = wscale * jax.random.normal(next(ki), (1, HC), jnp.float32)
    raw['out_b'] = bscale * jax.random.normal(next(ki), (1,), jnp.float32)

    # ---- im2col conv weight (11*C, 5*C): row block t = tap, col block i = conv,
    # entry [t*C + c_in, i*C + c_out] = w_i[c_out, c_in, t - off_i]
    conv_w_np = np.zeros((NTAPS * dim, N_CONV * dim), np.float32)
    for i, k in enumerate(KSIZES):
        off = PAD - (k - 1) // 2
        w = np.asarray(raw['conv_ws'][i])            # (O, I, k)
        for j in range(k):
            t = off + j
            conv_w_np[t * dim:(t + 1) * dim, i * dim:(i + 1) * dim] = w[:, :, j].T

    # ---- fused value|query|key projection: (C, C + 2*n_head)
    vqk_w_np = np.concatenate([np.asarray(raw['val_w']).T,
                               np.asarray(raw['q_w']).T,
                               np.asarray(raw['k_w']).T], axis=1)

    # ---- pack all tiny params into ONE lane-dense f32 array (static row offsets)
    W = max(N_CONV * dim, 2 * dim, dim + 2 * n_head, HC)
    rows = 6 + n_rd
    pack = np.zeros((rows, W), np.float32)
    pack[0, :N_CONV * dim] = np.concatenate([np.asarray(b) for b in raw['conv_bs']])
    pack[1, :2 * dim] = np.asarray(raw['fc1_b'])
    pack[2, :dim] = np.asarray(raw['fc2_b'])
    pack[3, :dim] = np.asarray(raw['val_b'])
    pack[3, dim:dim + n_head] = np.asarray(raw['q_b'])
    pack[3, dim + n_head:dim + 2 * n_head] = np.asarray(raw['k_b'])
    for j in range(n_rd):
        pack[4 + j, :HC] = np.asarray(raw['rd_b'][j])
    pack[4 + n_rd, :HC] = np.asarray(raw['out_w'][0])
    pack[5 + n_rd, 0] = float(np.asarray(raw['out_b'])[0])

    kp = {
        'conv_w': jnp.asarray(conv_w_np, dtype=jnp.bfloat16),        # (11*C, 5*C) bf16
        'fc1_wT': jnp.asarray(raw['fc1_w']).T.astype(jnp.bfloat16),  # (C, 2C)
        'fc2_wT': jnp.asarray(raw['fc2_w']).T.astype(jnp.bfloat16),  # (2C, C)
        'vqk_w': jnp.asarray(vqk_w_np, dtype=jnp.bfloat16),          # (C, C+2H)
        'rd_wT': jnp.transpose(raw['rd_w'], (0, 2, 1)).astype(jnp.bfloat16),  # (n_RD, HC, HC)
        'pack': jnp.asarray(pack),                                   # f32 small params
    }
    return raw, kp


def reference_forward(emb, raw, n_head, n_rd):
    """Pure-JAX f32 reference mirroring the PyTorch forward exactly."""
    x = emb
    msum = 0.0
    for w, b, k in zip(raw['conv_ws'], raw['conv_bs'], KSIZES):
        p = (k - 1) // 2
        y = lax.conv_general_dilated(x, w, window_strides=(1,), padding=[(p, p)],
                                     dimension_numbers=('NCH', 'OIH', 'NCH'))
        msum = msum + jax.nn.leaky_relu(y + b[None, :, None])
    vt = jnp.transpose(msum, (0, 2, 1))
    vt = jax.nn.leaky_relu(vt @ raw['fc1_w'].T + raw['fc1_b'])
    vt = jax.nn.leaky_relu(vt @ raw['fc2_w'].T + raw['fc2_b'])
    x = jnp.transpose(vt, (0, 2, 1))
    v = jnp.einsum('oc,bcl->bol', raw['val_w'], x) + raw['val_b'][None, :, None]
    pooled = []
    for i in range(n_head):
        q = jnp.einsum('c,bcl->bl', raw['q_w'][i], x) + raw['q_b'][i]
        kk = jnp.einsum('c,bcl->bl', raw['k_w'][i], x) + raw['k_b'][i]
        attn = jax.nn.softmax(q * kk, axis=-1)
        pooled.append(jnp.sum(v * attn[:, None, :], axis=-1))
    cat_f = jnp.concatenate(pooled, axis=1)
    for j in range(n_rd):
        cat_f = cat_f + jax.nn.leaky_relu(cat_f @ raw['rd_w'][j].T + raw['rd_b'][j])
    return cat_f @ raw['out_w'].T + raw['out_b']


if __name__ == "__main__":
    # B=16, L=16 -> TB=8, grid=(2,): M = TB*L = 128 MXU rows per step, 2 steps for v7x's 2 TCs.
    B, dim, L = 16, 32, 16
    n_head, n_rd = 4, 2

    key = jax.random.PRNGKey(0)
    k_x, k_p = jax.random.split(key)
    emb = jax.random.normal(k_x, (B, dim, L), jnp.float32)   # NCL, like PyTorch Conv1d
    raw, kp = init_params(k_p, dim, n_head, n_rd)

    out = selfatt_forward(emb, kp)
    out = jax.block_until_ready(out)

    ref = reference_forward(emb, raw, n_head, n_rd)
    assert out.shape == (B, 1)
    # tolerance reflects bf16 MXU operands (f32 accumulation); reference is full f32
    assert jnp.allclose(out, ref, atol=5e-2, rtol=5e-2), (out, ref)
    print("KERNEL_OK")
</pallas_src>

<mosaic_0001>
module attributes {stable_mosaic.version = 11 : i64} {
  func.func @selfatt_kernel(%arg0: i32, %arg1: memref<8x16x32xf32, #tpu.memory_space<vmem>>, %arg2: memref<352x160xbf16, #tpu.memory_space<vmem>>, %arg3: memref<32x64xbf16, #tpu.memory_space<vmem>>, %arg4: memref<64x32xbf16, #tpu.memory_space<vmem>>, %arg5: memref<32x40xbf16, #tpu.memory_space<vmem>>, %arg6: memref<2x128x128xbf16, #tpu.memory_space<vmem>>, %arg7: memref<8x160xf32, #tpu.memory_space<vmem>>, %arg8: memref<8x1x1xf32, #tpu.memory_space<vmem>>) attributes {dimension_semantics = [#tpu.dimension_semantics<parallel>], iteration_bounds = array<i64: 2>, scalar_prefetch = 0 : i64, scratch_operands = 0 : i64, tpu.core_type = #tpu.core_type<tc>, window_params = [{transform_indices = @transform_0, window_bounds = array<i64: 8, 16, 32>}, {pipeline_mode = #tpu.pipeline_mode<synchronous>, transform_indices = @transform_1, window_bounds = array<i64: 352, 160>}, {pipeline_mode = #tpu.pipeline_mode<synchronous>, transform_indices = @transform_2, window_bounds = array<i64: 32, 64>}, {pipeline_mode = #tpu.pipeline_mode<synchronous>, transform_indices = @transform_3, window_bounds = array<i64: 64, 32>}, {pipeline_mode = #tpu.pipeline_mode<synchronous>, transform_indices = @transform_4, window_bounds = array<i64: 32, 40>}, {pipeline_mode = #tpu.pipeline_mode<synchronous>, transform_indices = @transform_5, window_bounds = array<i64: 2, 128, 128>}, {pipeline_mode = #tpu.pipeline_mode<synchronous>, transform_indices = @transform_6, window_bounds = array<i64: 8, 160>}, {transform_indices = @transform_7, window_bounds = array<i64: 8, 1, 1>}]} {
    %c0 = arith.constant 0 : index
    %c0_0 = arith.constant 0 : index
    %c0_1 = arith.constant 0 : index
    %0 = vector.load %arg1[%c0, %c0_0, %c0_1] : memref<8x16x32xf32, #tpu.memory_space<vmem>>, vector<8x16x32xf32>
    %c0_2 = arith.constant 0 : index
    %c0_3 = arith.constant 0 : index
    %1 = vector.load %arg7[%c0_2, %c0_3] : memref<8x160xf32, #tpu.memory_space<vmem>>, vector<1x160xf32>
    %c1 = arith.constant 1 : index
    %c0_4 = arith.constant 0 : index
    %2 = vector.load %arg7[%c1, %c0_4] : memref<8x160xf32, #tpu.memory_space<vmem>>, vector<1x64xf32>
    %c2 = arith.constant 2 : index
    %c0_5 = arith.constant 0 : index
    %3 = vector.load %arg7[%c2, %c0_5] : memref<8x160xf32, #tpu.memory_space<vmem>>, vector<1x32xf32>
    %c3 = arith.constant 3 : index
    %c0_6 = arith.constant 0 : index
    %4 = vector.load %arg7[%c3, %c0_6] : memref<8x160xf32, #tpu.memory_space<vmem>>, vector<1x40xf32>
    %c6 = arith.constant 6 : index
    %c0_7 = arith.constant 0 : index
    %5 = vector.load %arg7[%c6, %c0_7] : memref<8x160xf32, #tpu.memory_space<vmem>>, vector<1x128xf32>
    %c7 = arith.constant 7 : index
    %c0_8 = arith.constant 0 : index
    %6 = vector.load %arg7[%c7, %c0_8] : memref<8x160xf32, #tpu.memory_space<vmem>>, vector<1x1xf32>
    %cst = arith.constant 0.000000e+00 : f32
    %7 = vector.broadcast %cst : f32 to vector<8x5x32xf32>
    %8 = tpu.concatenate %7, %0, %7 in 1 : vector<8x5x32xf32>, vector<8x16x32xf32>, vector<8x5x32xf32> -> vector<8x26x32xf32>
    %c0_9 = arith.constant 0 : index
    %c0_10 = arith.constant 0 : index
    %9 = vector.load %arg2[%c0_9, %c0_10] : memref<352x160xbf16, #tpu.memory_space<vmem>>, vector<352x160xbf16>
    %10 = vector.extract_strided_slice %8 {offsets = [0, 0, 0], sizes = [8, 16, 32], strides = [1, 1, 1]} : vector<8x26x32xf32> to vector<8x16x32xf32>
    %11 = vector.extract_strided_slice %8 {offsets = [0, 1, 0], sizes = [8, 16, 32], strides = [1, 1, 1]} : vector<8x26x32xf32> to vector<8x16x32xf32>
    %12 = vector.extract_strided_slice %8 {offsets = [0, 2, 0], sizes = [8, 16, 32], strides = [1, 1, 1]} : vector<8x26x32xf32> to vector<8x16x32xf32>
    %13 = vector.extract_strided_slice %8 {offsets = [0, 3, 0], sizes = [8, 16, 32], strides = [1, 1, 1]} : vector<8x26x32xf32> to vector<8x16x32xf32>
    %14 = vector.extract_strided_slice %8 {offsets = [0, 4, 0], sizes = [8, 16, 32], strides = [1, 1, 1]} : vector<8x26x32xf32> to vector<8x16x32xf32>
    %15 = vector.extract_strided_slice %8 {offsets = [0, 5, 0], sizes = [8, 16, 32], strides = [1, 1, 1]} : vector<8x26x32xf32> to vector<8x16x32xf32>
    %16 = vector.extract_strided_slice %8 {offsets = [0, 6, 0], sizes = [8, 16, 32], strides = [1, 1, 1]} : vector<8x26x32xf32> to vector<8x16x32xf32>
    %17 = vector.extract_strided_slice %8 {offsets = [0, 7, 0], sizes = [8, 16, 32], strides = [1, 1, 1]} : vector<8x26x32xf32> to vector<8x16x32xf32>
    %18 = vector.extract_strided_slice %8 {offsets = [0, 8, 0], sizes = [8, 16, 32], strides = [1, 1, 1]} : vector<8x26x32xf32> to vector<8x16x32xf32>
    %19 = vector.extract_strided_slice %8 {offsets = [0, 9, 0], sizes = [8, 16, 32], strides = [1, 1, 1]} : vector<8x26x32xf32> to vector<8x16x32xf32>
    %20 = vector.extract_strided_slice %8 {offsets = [0, 10, 0], sizes = [8, 16, 32], strides = [1, 1, 1]} : vector<8x26x32xf32> to vector<8x16x32xf32>
    %21 = tpu.concatenate %10, %11, %12, %13, %14, %15, %16, %17, %18, %19, %20 in 2 : vector<8x16x32xf32>, vector<8x16x32xf32>, vector<8x16x32xf32>, vector<8x16x32xf32>, vector<8x16x32xf32>, vector<8x16x32xf32>, vector<8x16x32xf32>, vector<8x16x32xf32>, vector<8x16x32xf32>, vector<8x16x32xf32>, vector<8x16x32xf32> -> vector<8x16x352xf32>
    %22 = vector.shape_cast %21 : vector<8x16x352xf32> to vector<128x352xf32>
    %23 = arith.truncf %22 : vector<128x352xf32> to vector<128x352xbf16>
    %cst_11 = arith.constant dense<0.000000e+00> : vector<128x160xf32>
    %24 = tpu.matmul %23, %9, %cst_11 {dimension_numbers = #tpu.dot_dimension_numbers<[1], [0], [0], [1], [0, 0, 1, 1], [], []>} : vector<128x352xbf16>, vector<352x160xbf16>, vector<128x160xf32> -> vector<128x160xf32>
    %25 = vector.broadcast %1 : vector<1x160xf32> to vector<128x160xf32>
    %26 = arith.addf %24, %25 : vector<128x160xf32>
    %cst_12 = arith.constant 0.000000e+00 : f32
    %27 = vector.broadcast %cst_12 : f32 to vector<128x160xf32>
    %28 = arith.cmpf oge, %26, %27 : vector<128x160xf32>
    %cst_13 = arith.constant 0.00999999977 : f32
    %29 = vector.broadcast %cst_13 : f32 to vector<128x160xf32>
    %30 = arith.mulf %29, %26 : vector<128x160xf32>
    %31 = arith.select %28, %26, %30 : vector<128x160xi1>, vector<128x160xf32>
    %32 = vector.extract_strided_slice %31 {offsets = [0, 0], sizes = [128, 32], strides = [1, 1]} : vector<128x160xf32> to vector<128x32xf32>
    %33 = vector.extract_strided_slice %31 {offsets = [0, 32], sizes = [128, 32], strides = [1, 1]} : vector<128x160xf32> to vector<128x32xf32>
    %34 = arith.addf %32, %33 : vector<128x32xf32>
    %35 = vector.extract_strided_slice %31 {offsets = [0, 64], sizes = [128, 32], strides = [1, 1]} : vector<128x160xf32> to vector<128x32xf32>
    %36 = arith.addf %34, %35 : vector<128x32xf32>
    %37 = vector.extract_strided_slice %31 {offsets = [0, 96], sizes = [128, 32], strides = [1, 1]} : vector<128x160xf32> to vector<128x32xf32>
    %38 = arith.addf %36, %37 : vector<128x32xf32>
    %39 = vector.extract_strided_slice %31 {offsets = [0, 128], sizes = [128, 32], strides = [1, 1]} : vector<128x160xf32> to vector<128x32xf32>
    %40 = arith.addf %38, %39 : vector<128x32xf32>
    %41 = arith.truncf %40 : vector<128x32xf32> to vector<128x32xbf16>
    %c0_14 = arith.constant 0 : index
    %c0_15 = arith.constant 0 : index
    %42 = vector.load %arg3[%c0_14, %c0_15] : memref<32x64xbf16, #tpu.memory_space<vmem>>, vector<32x64xbf16>
    %cst_16 = arith.constant dense<0.000000e+00> : vector<128x64xf32>
    %43 = tpu.matmul %41, %42, %cst_16 {dimension_numbers = #tpu.dot_dimension_numbers<[1], [0], [0], [1], [0, 0, 1, 1], [], []>} : vector<128x32xbf16>, vector<32x64xbf16>, vector<128x64xf32> -> vector<128x64xf32>
    %44 = vector.broadcast %2 : vector<1x64xf32> to vector<128x64xf32>
    %45 = arith.addf %43, %44 : vector<128x64xf32>
    %cst_17 = arith.constant 0.000000e+00 : f32
    %46 = vector.broadcast %cst_17 : f32 to vector<128x64xf32>
    %47 = arith.cmpf oge, %45, %46 : vector<128x64xf32>
    %cst_18 = arith.constant 0.00999999977 : f32
    %48 = vector.broadcast %cst_18 : f32 to vector<128x64xf32>
    %49 = arith.mulf %48, %45 : vector<128x64xf32>
    %50 = arith.select %47, %45, %49 : vector<128x64xi1>, vector<128x64xf32>
    %51 = arith.truncf %50 : vector<128x64xf32> to vector<128x64xbf16>
    %c0_19 = arith.constant 0 : index
    %c0_20 = arith.constant 0 : index
    %52 = vector.load %arg4[%c0_19, %c0_20] : memref<64x32xbf16, #tpu.memory_space<vmem>>, vector<64x32xbf16>
    %cst_21 = arith.constant dense<0.000000e+00> : vector<128x32xf32>
    %53 = tpu.matmul %51, %52, %cst_21 {dimension_numbers = #tpu.dot_dimension_numbers<[1], [0], [0], [1], [0, 0, 1, 1], [], []>} : vector<128x64xbf16>, vector<64x32xbf16>, vector<128x32xf32> -> vector<128x32xf32>
    %54 = vector.broadcast %3 : vector<1x32xf32> to vector<128x32xf32>
    %55 = arith.addf %53, %54 : vector<128x32xf32>
    %cst_22 = arith.constant 0.000000e+00 : f32
    %56 = vector.broadcast %cst_22 : f32 to vector<128x32xf32>
    %57 = arith.cmpf oge, %55, %56 : vector<128x32xf32>
    %cst_23 = arith.constant 0.00999999977 : f32
    %58 = vector.broadcast %cst_23 : f32 to vector<128x32xf32>
    %59 = arith.mulf %58, %55 : vector<128x32xf32>
    %60 = arith.select %57, %55, %59 : vector<128x32xi1>, vector<128x32xf32>
    %61 = arith.truncf %60 : vector<128x32xf32> to vector<128x32xbf16>
    %c0_24 = arith.constant 0 : index
    %c0_25 = arith.constant 0 : index
    %62 = vector.load %arg5[%c0_24, %c0_25] : memref<32x40xbf16, #tpu.memory_space<vmem>>, vector<32x40xbf16>
    %cst_26 = arith.constant dense<0.000000e+00> : vector<128x40xf32>
    %63 = tpu.matmul %61, %62, %cst_26 {dimension_numbers = #tpu.dot_dimension_numbers<[1], [0], [0], [1], [0, 0, 1, 1], [], []>} : vector<128x32xbf16>, vector<32x40xbf16>, vector<128x40xf32> -> vector<128x40xf32>
    %64 = vector.broadcast %4 : vector<1x40xf32> to vector<128x40xf32>
    %65 = arith.addf %63, %64 : vector<128x40xf32>
    %66 = vector.extract_strided_slice %65 {offsets = [0, 0], sizes = [128, 32], strides = [1, 1]} : vector<128x40xf32> to vector<128x32xf32>
    %67 = vector.shape_cast %66 : vector<128x32xf32> to vector<8x16x32xf32>
    %68 = vector.extract_strided_slice %65 {offsets = [0, 32], sizes = [128, 4], strides = [1, 1]} : vector<128x40xf32> to vector<128x4xf32>
    %69 = vector.extract_strided_slice %65 {offsets = [0, 36], sizes = [128, 4], strides = [1, 1]} : vector<128x40xf32> to vector<128x4xf32>
    %70 = arith.mulf %68, %69 : vector<128x4xf32>
    %71 = vector.shape_cast %70 : vector<128x4xf32> to vector<8x16x4xf32>
    %cst_27 = arith.constant dense<0xFF800000> : vector<8x4xf32>
    %72 = vector.multi_reduction <maximumf>, %71, %cst_27 [1] : vector<8x16x4xf32> to vector<8x4xf32>
    %73 = vector.shape_cast %72 : vector<8x4xf32> to vector<8x1x4xf32>
    %74 = vector.broadcast %73 : vector<8x1x4xf32> to vector<8x16x4xf32>
    %75 = arith.subf %71, %74 : vector<8x16x4xf32>
    %76 = math.exp %75 : vector<8x16x4xf32>
    %cst_28 = arith.constant dense<0.000000e+00> : vector<8x4xf32>
    %77 = vector.multi_reduction <add>, %76, %cst_28 [1] : vector<8x16x4xf32> to vector<8x4xf32>
    %78 = vector.shape_cast %77 : vector<8x4xf32> to vector<8x1x4xf32>
    %79 = vector.broadcast %78 : vector<8x1x4xf32> to vector<8x16x4xf32>
    %80 = arith.divf %76, %79 : vector<8x16x4xf32>
    "tpu.trace_start"() <{level = 10 : i32, message = "blh,blc->bhc"}> : () -> ()
    %cst_29 = arith.constant dense<0.000000e+00> : vector<8x4x32xf32>
    %81 = tpu.matmul %80, %67, %cst_29 {dimension_numbers = #tpu.dot_dimension_numbers<[1], [1], [2], [2], [0, 0, 0, 2, 1, 2], [0], [0]>} : vector<8x16x4xf32>, vector<8x16x32xf32>, vector<8x4x32xf32> -> vector<8x4x32xf32>
    "tpu.trace_stop"() : () -> ()
    %82 = vector.shape_cast %81 : vector<8x4x32xf32> to vector<8x128xf32>
    %c4 = arith.constant 4 : index
    %c0_30 = arith.constant 0 : index
    %83 = vector.load %arg7[%c4, %c0_30] : memref<8x160xf32, #tpu.memory_space<vmem>>, vector<1x128xf32>
    %84 = arith.truncf %82 : vector<8x128xf32> to vector<8x128xbf16>
    %c0_31 = arith.constant 0 : index
    %c0_32 = arith.constant 0 : index
    %c0_33 = arith.constant 0 : index
    %85 = vector.load %arg6[%c0_31, %c0_32, %c0_33] : memref<2x128x128xbf16, #tpu.memory_space<vmem>>, vector<1x128x128xbf16>
    %86 = vector.shape_cast %85 : vector<1x128x128xbf16> to vector<128x128xbf16>
    %cst_34 = arith.constant dense<0.000000e+00> : vector<8x128xf32>
    %87 = tpu.matmul %84, %86, %cst_34 {dimension_numbers = #tpu.dot_dimension_numbers<[1], [0], [0], [1], [0, 0, 1, 1], [], []>} : vector<8x128xbf16>, vector<128x128xbf16>, vector<8x128xf32> -> vector<8x128xf32>
    %88 = vector.broadcast %83 : vector<1x128xf32> to vector<8x128xf32>
    %89 = arith.addf %87, %88 : vector<8x128xf32>
    %cst_35 = arith.constant 0.000000e+00 : f32
    %90 = vector.broadcast %cst_35 : f32 to vector<8x128xf32>
    %91 = arith.cmpf oge, %89, %90 : vector<8x128xf32>
    %cst_36 = arith.constant 0.00999999977 : f32
    %92 = vector.broadcast %cst_36 : f32 to vector<8x128xf32>
    %93 = arith.mulf %92, %89 : vector<8x128xf32>
    %94 = arith.select %91, %89, %93 : vector<8x128xi1>, vector<8x128xf32>
    %95 = arith.addf %82, %94 : vector<8x128xf32>
    %c5 = arith.constant 5 : index
    %c0_37 = arith.constant 0 : index
    %96 = vector.load %arg7[%c5, %c0_37] : memref<8x160xf32, #tpu.memory_space<vmem>>, vector<1x128xf32>
    %97 = arith.truncf %95 : vector<8x128xf32> to vector<8x128xbf16>
    %c1_38 = arith.constant 1 : index
    %c0_39 = arith.constant 0 : index
    %c0_40 = arith.constant 0 : index
    %98 = vector.load %arg6[%c1_38, %c0_39, %c0_40] : memref<2x128x128xbf16, #tpu.memory_space<vmem>>, vector<1x128x128xbf16>
    %99 = vector.shape_cast %98 : vector<1x128x128xbf16> to vector<128x128xbf16>
    %cst_41 = arith.constant dense<0.000000e+00> : vector<8x128xf32>
    %100 = tpu.matmul %97, %99, %cst_41 {dimension_numbers = #tpu.dot_dimension_numbers<[1], [0], [0], [1], [0, 0, 1, 1], [], []>} : vector<8x128xbf16>, vector<128x128xbf16>, vector<8x128xf32> -> vector<8x128xf32>
    %101 = vector.broadcast %96 : vector<1x128xf32> to vector<8x128xf32>
    %102 = arith.addf %100, %101 : vector<8x128xf32>
    %cst_42 = arith.constant 0.000000e+00 : f32
    %103 = vector.broadcast %cst_42 : f32 to vector<8x128xf32>
    %104 = arith.cmpf oge, %102, %103 : vector<8x128xf32>
    %cst_43 = arith.constant 0.00999999977 : f32
    %105 = vector.broadcast %cst_43 : f32 to vector<8x128xf32>
    %106 = arith.mulf %105, %102 : vector<8x128xf32>
    %107 = arith.select %104, %102, %106 : vector<8x128xi1>, vector<8x128xf32>
    %108 = arith.addf %95, %107 : vector<8x128xf32>
    %109 = vector.broadcast %5 : vector<1x128xf32> to vector<8x128xf32>
    %110 = arith.mulf %108, %109 : vector<8x128xf32>
    %cst_44 = arith.constant dense<0.000000e+00> : vector<8xf32>
    %111 = vector.multi_reduction <add>, %110, %cst_44 [1] : vector<8x128xf32> to vector<8xf32>
    %112 = vector.shape_cast %111 : vector<8xf32> to vector<8x1xf32>
    %113 = vector.broadcast %6 : vector<1x1xf32> to vector<8x1xf32>
    %114 = arith.addf %112, %113 : vector<8x1xf32>
    %115 = vector.shape_cast %114 : vector<8x1xf32> to vector<8x1x1xf32>
    %c0_45 = arith.constant 0 : index
    %c0_46 = arith.constant 0 : index
    %c0_47 = arith.constant 0 : index
    %116 = vector.load %arg8[%c0_45, %c0_46, %c0_47] : memref<8x1x1xf32, #tpu.memory_space<vmem>>, vector<8x1x1xf32>
    tpu.vector_store %arg8[%c0_45, %c0_46, %c0_47], %115 {strides = array<i32>} : memref<8x1x1xf32, #tpu.memory_space<vmem>>, vector<8x1x1xf32>,
    return
  }
  func.func @transform_0(%arg0: i32) -> (i32, i32, i32) {
    %c0_i32 = arith.constant 0 : i32
    %c0_i32_0 = arith.constant 0 : i32
    %c0_i32_1 = arith.constant 0 : i32
    return %arg0, %c0_i32, %c0_i32_0 : i32, i32, i32
  }
  func.func @transform_1(%arg0: i32) -> (i32, i32) {
    %c0_i32 = arith.constant 0 : i32
    %c0_i32_0 = arith.constant 0 : i32
    %c0_i32_1 = arith.constant 0 : i32
    return %c0_i32, %c0_i32_0 : i32, i32
  }
  func.func @transform_2(%arg0: i32) -> (i32, i32) {
    %c0_i32 = arith.constant 0 : i32
    %c0_i32_0 = arith.constant 0 : i32
    %c0_i32_1 = arith.constant 0 : i32
    return %c0_i32, %c0_i32_0 : i32, i32
  }
  func.func @transform_3(%arg0: i32) -> (i32, i32) {
    %c0_i32 = arith.constant 0 : i32
    %c0_i32_0 = arith.constant 0 : i32
    %c0_i32_1 = arith.constant 0 : i32
    return %c0_i32, %c0_i32_0 : i32, i32
  }
  func.func @transform_4(%arg0: i32) -> (i32, i32) {
    %c0_i32 = arith.constant 0 : i32
    %c0_i32_0 = arith.constant 0 : i32
    %c0_i32_1 = arith.constant 0 : i32
    return %c0_i32, %c0_i32_0 : i32, i32
  }
  func.func @transform_5(%arg0: i32) -> (i32, i32, i32) {
    %c0_i32 = arith.constant 0 : i32
    %c0_i32_0 = arith.constant 0 : i32
    %c0_i32_1 = arith.constant 0 : i32
    %c0_i32_2 = arith.constant 0 : i32
    return %c0_i32, %c0_i32_0, %c0_i32_1 : i32, i32, i32
  }
  func.func @transform_6(%arg0: i32) -> (i32, i32) {
    %c0_i32 = arith.constant 0 : i32
    %c0_i32_0 = arith.constant 0 : i32
    %c0_i32_1 = arith.constant 0 : i32
    return %c0_i32, %c0_i32_0 : i32, i32
  }
  func.func @transform_7(%arg0: i32) -> (i32, i32, i32) {
    %c0_i32 = arith.constant 0 : i32
    %c0_i32_0 = arith.constant 0 : i32
    %c0_i32_1 = arith.constant 0 : i32
    return %arg0, %c0_i32, %c0_i32_0 : i32, i32, i32
  }
}

</mosaic_0001>

<llo_original>
// kernel: tpu_custom_call.1
$region0: #{tpu_custom_call.1}
  #allocation0 [shape = 'u32[]', space=smem, size = 0x4, offset = 0x4, fixed_abs, tag = 'smem constant byte address 0x4 - core index']
  #allocation1 [shape = 'u32[144,128]{1,0:T(1,128)}', space=vmem, size = 0x12000, scoped, tag = 'internal scratch']
  %s0 = inlined_call_operand.vmem [shape: f32[16,16,32], index: 0, kind: input, shape index: {}]
  %s1 = inlined_call_operand.vmem [shape: bf16[352,160], index: 1, kind: input, shape index: {}]
  %s2 = inlined_call_operand.vmem [shape: bf16[32,64], index: 2, kind: input, shape index: {}]
  %s3 = inlined_call_operand.vmem [shape: bf16[64,32], index: 3, kind: input, shape index: {}]
  %s4 = inlined_call_operand.vmem [shape: bf16[32,40], index: 4, kind: input, shape index: {}]
  %s5 = inlined_call_operand.vmem [shape: bf16[2,128,128], index: 5, kind: input, shape index: {}]
  %s6 = inlined_call_operand.vmem [shape: f32[8,160], index: 6, kind: input, shape index: {}]
  %s7 = inlined_call_operand.vmem [shape: f32[16,1,1], index: 7, kind: output, shape index: {}]
  %s8 = sld [smem:[#allocation0]]
  $region61: #{tpu_custom_call.1} parent=0
    _
  %s10 = ssub.s32 1, %s8
  %s11 = scalar_select 0, %s10, %s8
  loop: start=0, step=1, limit=4
  $region2: #{tpu_custom_call.1} parent=0 // loop_pre_header
    _
  $region3: #{tpu_custom_call.1} parent=0 // loop_header
    %s13 = sphi 0, %s17
    %p14 = scmp.ge.s32.totalorder %s13, 4
    %s23 = sphi 0, %s25
    %s26 = sphi 0, %s23
    %s27 = sphi 0, %s26
    %s43 = sphi 0, %s27
    %s47 = sphi 0, %s47
    %s49 = sphi 0, %s47
    %s50 = sphi 0, %s49
    %s64 = sphi 0, %s50
    %s68 = sphi 0, %s68
    %s70 = sphi 0, %s68
    %s71 = sphi 0, %s70
    %s85 = sphi 0, %s71
    %s89 = sphi 0, %s89
    %s91 = sphi 0, %s89
    %s92 = sphi 0, %s91
    %s106 = sphi 0, %s92
    %s110 = sphi 0, %s110
    %s112 = sphi 0, %s110
    %s113 = sphi 0, %s112
    %s127 = sphi 0, %s113
    %s131 = sphi 0, %s131
    %s133 = sphi 0, %s131
    %s134 = sphi 0, %s133
    %s148 = sphi 0, %s134
    %s152 = sphi 0, %s152
    %s154 = sphi 0, %s152
    %s155 = sphi 0, %s154
    %s169 = sphi 0, %s155
    %s175 = sphi 0, %s177
    %s178 = sphi 0, %s175
    %s179 = sphi 0, %s178
    %s195 = sphi 0, %s179
  $region4: #{tpu_custom_call.1} parent=0 // loop_header_branch
    %16 = sbr.rel (%p14) target = $region8
  $region5: #{tpu_custom_call.1} parent=0 // loop_body
    %s18 = ssub.s32 %s13, 1
    %s19 = ssub.s32 %s13, 2
    %s20 = sadd.s32 %s13, 1
    %s21 = ssub.s32 %s13, %s20
    %p22 = scmp.eq.s32.totalorder %s21, 0
    %s24 = sadd.s32 %s23, 1
    %s25 = scalar_select %p22, %s23, %s24
    %p28 = pneg %p22
    %p29 = scmp.eq.s32.totalorder %s13, 1
    %p30 = por %p28, %p29
    %p31 = scmp.ne.s32.totalorder %s23, %s26
    %p32 = scmp.eq.s32.totalorder %s13, 0
    %p33 = por %p31, %p32
    %p34 = scmp.ne.s32.totalorder %s23, %s26
    %p35 = scmp.eq.s32.totalorder %s18, 1
    %p36 = por %p34, %p35
    %p37 = scmp.ne.s32.totalorder %s26, %s27
    %p38 = scmp.eq.s32.totalorder %s18, 0
    %p39 = por %p37, %p38
    %p40 = scmp.ne.s32.totalorder %s26, %s27
    %p41 = scmp.eq.s32.totalorder %s19, 1
    %p42 = por %p40, %p41
    %p44 = scmp.ne.s32.totalorder %s27, %s43
    %p45 = scmp.eq.s32.totalorder %s19, 0
    %p46 = por %p44, %p45
    %s48 = sadd.s32 %s47, 1
    %p51 = scmp.eq.s32.totalorder %s13, 1
    %p52 = scmp.ne.s32.totalorder %s47, %s49
    %p53 = scmp.eq.s32.totalorder %s13, 0
    %p54 = por %p52, %p53
    %p55 = scmp.ne.s32.totalorder %s47, %s49
    %p56 = scmp.eq.s32.totalorder %s18, 1
    %p57 = por %p55, %p56
    %p58 = scmp.ne.s32.totalorder %s49, %s50
    %p59 = scmp.eq.s32.totalorder %s18, 0
    %p60 = por %p58, %p59
    %p61 = scmp.ne.s32.totalorder %s49, %s50
    %p62 = scmp.eq.s32.totalorder %s19, 1
    %p63 = por %p61, %p62
    %p65 = scmp.ne.s32.totalorder %s50, %s64
    %p66 = scmp.eq.s32.totalorder %s19, 0
    %p67 = por %p65, %p66
    %s69 = sadd.s32 %s68, 1
    %p72 = scmp.eq.s32.totalorder %s13, 1
    %p73 = scmp.ne.s32.totalorder %s68, %s70
    %p74 = scmp.eq.s32.totalorder %s13, 0
    %p75 = por %p73, %p74
    %p76 = scmp.ne.s32.totalorder %s68, %s70
    %p77 = scmp.eq.s32.totalorder %s18, 1
    %p78 = por %p76, %p77
    %p79 = scmp.ne.s32.totalorder %s70, %s71
    %p80 = scmp.eq.s32.totalorder %s18, 0
    %p81 = por %p79, %p80
    %p82 = scmp.ne.s32.totalorder %s70, %s71
    %p83 = scmp.eq.s32.totalorder %s19, 1
    %p84 = por %p82, %p83
    %p86 = scmp.ne.s32.totalorder %s71, %s85
    %p87 = scmp.eq.s32.totalorder %s19, 0
    %p88 = por %p86, %p87
    %s90 = sadd.s32 %s89, 1
    %p93 = scmp.eq.s32.totalorder %s13, 1
    %p94 = scmp.ne.s32.totalorder %s89, %s91
    %p95 = scmp.eq.s32.totalorder %s13, 0
    %p96 = por %p94, %p95
    %p97 = scmp.ne.s32.totalorder %s89, %s91
    %p98 = scmp.eq.s32.totalorder %s18, 1
    %p99 = por %p97, %p98
    %p100 = scmp.ne.s32.totalorder %s91, %s92
    %p101 = scmp.eq.s32.totalorder %s18, 0
    %p102 = por %p100, %p101
    %p103 = scmp.ne.s32.totalorder %s91, %s92
    %p104 = scmp.eq.s32.totalorder %s19, 1
    %p105 = por %p103, %p104
    %p107 = scmp.ne.s32.totalorder %s92, %s106
    %p108 = scmp.eq.s32.totalorder %s19, 0
    %p109 = por %p107, %p108
    %s111 = sadd.s32 %s110, 1
    %p114 = scmp.eq.s32.totalorder %s13, 1
    %p115 = scmp.ne.s32.totalorder %s110, %s112
    %p116 = scmp.eq.s32.totalorder %s13, 0
    %p117 = por %p115, %p116
    %p118 = scmp.ne.s32.totalorder %s110, %s112
    %p119 = scmp.eq.s32.totalorder %s18, 1
    %p120 = por %p118, %p119
    %p121 = scmp.ne.s32.totalorder %s112, %s113
    %p122 = scmp.eq.s32.totalorder %s18, 0
    %p123 = por %p121, %p122
    %p124 = scmp.ne.s32.totalorder %s112, %s113
    %p125 = scmp.eq.s32.totalorder %s19, 1
    %p126 = por %p124, %p125
    %p128 = scmp.ne.s32.totalorder %s113, %s127
    %p129 = scmp.eq.s32.totalorder %s19, 0
    %p130 = por %p128, %p129
    %s132 = sadd.s32 %s131, 1
    %p135 = scmp.eq.s32.totalorder %s13, 1
    %p136 = scmp.ne.s32.totalorder %s131, %s133
    %p137 = scmp.eq.s32.totalorder %s13, 0
    %p138 = por %p136, %p137
    %p139 = scmp.ne.s32.totalorder %s131, %s133
    %p140 = scmp.eq.s32.totalorder %s18, 1
    %p141 = por %p139, %p140
    %p142 = scmp.ne.s32.totalorder %s133, %s134
    %p143 = scmp.eq.s32.totalorder %s18, 0
    %p144 = por %p142, %p143
    %p145 = scmp.ne.s32.totalorder %s133, %s134
    %p146 = scmp.eq.s32.totalorder %s19, 1
    %p147 = por %p145, %p146
    %p149 = scmp.ne.s32.totalorder %s134, %s148
    %p150 = scmp.eq.s32.totalorder %s19, 0
    %p151 = por %p149, %p150
    %s153 = sadd.s32 %s152, 1
    %p156 = scmp.eq.s32.totalorder %s13, 1
    %p157 = scmp.ne.s32.totalorder %s152, %s154
    %p158 = scmp.eq.s32.totalorder %s13, 0
    %p159 = por %p157, %p158
    %p160 = scmp.ne.s32.totalorder %s152, %s154
    %p161 = scmp.eq.s32.totalorder %s18, 1
    %p162 = por %p160, %p161
    %p163 = scmp.ne.s32.totalorder %s154, %s155
    %p164 = scmp.eq.s32.totalorder %s18, 0
    %p165 = por %p163, %p164
    %p166 = scmp.ne.s32.totalorder %s154, %s155
    %p167 = scmp.eq.s32.totalorder %s19, 1
    %p168 = por %p166, %p167
    %p170 = scmp.ne.s32.totalorder %s155, %s169
    %p171 = scmp.eq.s32.totalorder %s19, 0
    %p172 = por %p170, %p171
    %s173 = ssub.s32 %s13, %s20
    %p174 = scmp.eq.s32.totalorder %s173, 0
    %s176 = sadd.s32 %s175, 1
    %s177 = scalar_select %p174, %s175, %s176
    %p180 = pneg %p174
    %p181 = scmp.eq.s32.totalorder %s13, 1
    %p182 = por %p180, %p181
    %p183 = scmp.ne.s32.totalorder %s175, %s178
    %p184 = scmp.eq.s32.totalorder %s13, 0
    %p185 = por %p183, %p184
    %p186 = scmp.ne.s32.totalorder %s175, %s178
    %p187 = scmp.eq.s32.totalorder %s18, 1
    %p188 = por %p186, %p187
    %p189 = scmp.ne.s32.totalorder %s178, %s179
    %p190 = scmp.eq.s32.totalorder %s18, 0
    %p191 = por %p189, %p190
    %p192 = scmp.ne.s32.totalorder %s178, %s179
    %p193 = scmp.eq.s32.totalorder %s19, 1
    %p194 = por %p192, %p193
    %p196 = scmp.ne.s32.totalorder %s179, %s195
    %p197 = scmp.eq.s32.totalorder %s19, 0
    %p198 = por %p196, %p197
    %p199 = scmp.le.s32.totalorder 1, %s13
    %p200 = scmp.lt.s32.totalorder %s13, 3
    %p201 = pnand %p199, %p200
    %p202 = pneg %p201
    // Predicated region
    $region9: #{tpu_custom_call.1} parent=5 // pred_check
      _
    $region10: #{tpu_custom_call.1} parent=5 // pred_check_branch
      %204 = sbr.rel (%p201) target = $region12
    $region11: #{tpu_custom_call.1} parent=5 // pred_region
      %s205 = ssub.s32 %s13, 1
      // Predicated region
      $region13: #{tpu_custom_call.1} parent=11 // pred_check
        %p206 = pneg %p60
      $region14: #{tpu_custom_call.1} parent=11 // pred_check_branch
        %208 = sbr.rel (%p206) target = $region16
      $region15: #{tpu_custom_call.1} parent=11 // pred_region
        _
      $region16: #{tpu_custom_call.1} parent=11 // pred_fallthru
        _
      // Predicated region
      $region17: #{tpu_custom_call.1} parent=11 // pred_check
        %p209 = pneg %p81
      $region18: #{tpu_custom_call.1} parent=11 // pred_check_branch
        %211 = sbr.rel (%p209) target = $region20
      $region19: #{tpu_custom_call.1} parent=11 // pred_region
        _
      $region20: #{tpu_custom_call.1} parent=11 // pred_fallthru
        _
      // Predicated region
      $region21: #{tpu_custom_call.1} parent=11 // pred_check
        %p212 = pneg %p102
      $region22: #{tpu_custom_call.1} parent=11 // pred_check_branch
        %214 = sbr.rel (%p212) target = $region24
      $region23: #{tpu_custom_call.1} parent=11 // pred_region
        _
      $region24: #{tpu_custom_call.1} parent=11 // pred_fallthru
        _
      // Predicated region
      $region25: #{tpu_custom_call.1} parent=11 // pred_check
        %p215 = pneg %p123
      $region26: #{tpu_custom_call.1} parent=11 // pred_check_branch
        %217 = sbr.rel (%p215) target = $region28
      $region27: #{tpu_custom_call.1} parent=11 // pred_region
        _
      $region28: #{tpu_custom_call.1} parent=11 // pred_fallthru
        _
      // Predicated region
      $region29: #{tpu_custom_call.1} parent=11 // pred_check
        %p218 = pneg %p144
      $region30: #{tpu_custom_call.1} parent=11 // pred_check_branch
        %220 = sbr.rel (%p218) target = $region32
      $region31: #{tpu_custom_call.1} parent=11 // pred_region
        _
      $region32: #{tpu_custom_call.1} parent=11 // pred_fallthru
        _
      // Predicated region
      $region33: #{tpu_custom_call.1} parent=11 // pred_check
        %p221 = pneg %p165
      $region34: #{tpu_custom_call.1} parent=11 // pred_check_branch
        %223 = sbr.rel (%p221) target = $region36
      $region35: #{tpu_custom_call.1} parent=11 // pred_region
        _
      $region36: #{tpu_custom_call.1} parent=11 // pred_fallthru
        _
    $region12: #{tpu_custom_call.1} parent=5 // pred_fallthru
      _
    %p224 = scmp.lt.s32.totalorder %s13, 2
    // Predicated region
    $region37: #{tpu_custom_call.1} parent=5 // pred_check
      %p225 = pneg %p224
    $region38: #{tpu_custom_call.1} parent=5 // pred_check_branch
      %227 = sbr.rel (%p225) target = $region40
    $region39: #{tpu_custom_call.1} parent=5 // pred_region
      // Predicated region
      $region41: #{tpu_custom_call.1} parent=39 // pred_check
        %p228 = pneg %p33
      $region42: #{tpu_custom_call.1} parent=39 // pred_check_branch
        %230 = sbr.rel (%p228) target = $region44
      $region43: #{tpu_custom_call.1} parent=39 // pred_region
        %s231 = smul.u32 8, %s13
        %p232 = scmp.lt.s32.totalorder %s231, 15
        %s233 = scalar_select %p232, %s231, 15
        %s234 = smul.addr %s233, 2
        %s235 = smul.addr %s234, 8
        %s236 = scalar_lea.vmem %s0, %s235
        %s237 = smul.u32 8, %s13
      $region44: #{tpu_custom_call.1} parent=39 // pred_fallthru
        _
    $region40: #{tpu_custom_call.1} parent=5 // pred_fallthru
      _
    %p238 = scmp.le.s32.totalorder 1, %s13
    %p239 = scmp.lt.s32.totalorder %s13, 3
    %p240 = pnand %p238, %p239
    %p241 = pneg %p240
    // Predicated region
    $region45: #{tpu_custom_call.1} parent=5 // pred_check
      _
    $region46: #{tpu_custom_call.1} parent=5 // pred_check_branch
      %243 = sbr.rel (%p240) target = $region48
    $region47: #{tpu_custom_call.1} parent=5 // pred_region
      %s244 = ssub.s32 %s13, 1
      %s245 = smul.u32 8, %s18
      %p246 = scmp.lt.s32.totalorder %s245, 15
      %s247 = scalar_select %p246, %s245, 15
      %s248 = smul.addr %s247, 2
      %s249 = smul.addr %s248, 8
      %s250 = scalar_lea.vmem %s0, %s249
      %p251 = pneg %p39
      %p252 = pneg %p36
      %p253 = pneg %p60
      %p254 = pneg %p57
      %p255 = pneg %p81
      %p256 = pneg %p78
      %p257 = pneg %p102
      %p258 = pneg %p99
      %p259 = pneg %p123
      %p260 = pneg %p120
      %p261 = pneg %p144
      %p262 = pneg %p141
      %p263 = pneg %p165
      %p264 = pneg %p162
      %p265 = pneg %p191
      %p266 = pneg %p188
      %s267 = smul.u32 8, %s18
      %p268 = scmp.lt.s32.totalorder %s267, 15
      %s269 = scalar_select %p268, %s267, 15
      %s270 = scalar_lea.vmem %s7, %s269
      %s271 = smul.u32 8, %s18
      %p272 = scmp.lt.s32.totalorder %s271, 15
      %s273 = scalar_select %p272, %s271, 15
      %s274 = smul.addr %s273, 2
      %s275 = smul.addr %s274, 8
      %s276 = scalar_lea.vmem %s0, %s275
      %s277 = smul.u32 8, %s18
      %s278 = smul.u32 8, %s18
      %p279 = scmp.lt.s32.totalorder %s278, 15
      %s280 = scalar_select %p279, %s278, 15
      %s281 = scalar_lea.vmem %s7, %s280
      %s282 = smul.u32 8, %s18
      %v284 = vld [vmem:[%s276] sm:$0xff]
      %v285 = vld [vmem:[%s276 + $0x8] sm:$0xff]
      %v286 = vld [vmem:[%s276 + $0x10] sm:$0xff]
      %v287 = vld [vmem:[%s276 + $0x18] sm:$0xff]
      %v288 = vld [vmem:[%s276 + $0x20] sm:$0xff]
      %v289 = vld [vmem:[%s276 + $0x28] sm:$0xff]
      %v290 = vld [vmem:[%s276 + $0x30] sm:$0xff]
      %v291 = vld [vmem:[%s276 + $0x38] sm:$0xff]
      %v292 = vld [vmem:[%s276 + $0x40] sm:$0xff]
      %v293 = vld [vmem:[%s276 + $0x48] sm:$0xff]
      %v294 = vld [vmem:[%s276 + $0x50] sm:$0xff]
      %v295 = vld [vmem:[%s276 + $0x58] sm:$0xff]
      %v296 = vld [vmem:[%s276 + $0x60] sm:$0xff]
      %v297 = vld [vmem:[%s276 + $0x68] sm:$0xff]
      %v298 = vld [vmem:[%s276 + $0x70] sm:$0xff]
      %v299 = vld [vmem:[%s276 + $0x78] sm:$0xff]
      %v300 = vld [vmem:[%s6] ss:$8 sm:$0x3]
      %v301 = vld [vmem:[%s6 + $0x1] ss:$0 sm:$0xff]
      %v302 = vld [vmem:[%s6 + $0x2] ss:$0 sm:$0xff]
      %v303 = vld [vmem:[%s6 + $0x3] ss:$0 sm:$0xff]
      %v304 = vld [vmem:[%s6 + $0x6] ss:$0 sm:$0xff]
      %v305 = vld [vmem:[%s6 + $0x7] ss:$0 sm:$0xff]
      %vm322 = vcmask 1044480
      %v323 = vrot.slane %v284, 3
      %v324 = vrot.slane %v285, 3
      %v325 = vsel %vm322, %v323, %v324
      %v326 = vrot.slane %v286, 3
      %v327 = vrot.slane %v287, 3
      %v328 = vsel %vm322, %v326, %v327
      %v329 = vrot.slane %v288, 3
      %v330 = vrot.slane %v289, 3
      %v331 = vsel %vm322, %v329, %v330
      %v332 = vrot.slane %v290, 3
      %v333 = vrot.slane %v291, 3
      %v334 = vsel %vm322, %v332, %v333
      %v335 = vrot.slane %v292, 3
      %v336 = vrot.slane %v293, 3
      %v337 = vsel %vm322, %v335, %v336
      %v338 = vrot.slane %v294, 3
      %v339 = vrot.slane %v295, 3
      %v340 = vsel %vm322, %v338, %v339
      %v341 = vrot.slane %v296, 3
      %v342 = vrot.slane %v297, 3
      %v343 = vsel %vm322, %v341, %v342
      %v344 = vrot.slane %v298, 3
      %v345 = vrot.slane %v299, 3
      %v346 = vsel %vm322, %v344, %v345
      %v371 = vsel %vm322, 0.0, %v323
      %v372 = vsel %vm322, 0.0, %v326
      %v373 = vsel %vm322, 0.0, %v329
      %v374 = vsel %vm322, 0.0, %v332
      %v375 = vsel %vm322, 0.0, %v335
      %v376 = vsel %vm322, 0.0, %v338
      %v377 = vsel %vm322, 0.0, %v341
      %v378 = vsel %vm322, 0.0, %v344
      %v379 = vsel %vm322, %v324, 0.0
      %v380 = vsel %vm322, %v327, 0.0
      %v381 = vsel %vm322, %v330, 0.0
      %v382 = vsel %vm322, %v333, 0.0
      %v383 = vsel %vm322, %v336, 0.0
      %v384 = vsel %vm322, %v339, 0.0
      %v385 = vsel %vm322, %v342, 0.0
      %v386 = vsel %vm322, %v345, 0.0
      %v387 = vld [vmem:[%s1] sm:$0xff]
      %v388 = vld [vmem:[%s1 + $0x8] sm:$0xff]
      %v389 = vld [vmem:[%s1 + $0x10] sm:$0xff]
      %v390 = vld [vmem:[%s1 + $0x18] sm:$0xff]
      %v391 = vld [vmem:[%s1 + $0x20] sm:$0xff]
      %v392 = vld [vmem:[%s1 + $0x28] sm:$0xff]
      %v393 = vld [vmem:[%s1 + $0x30] sm:$0xff]
      %v394 = vld [vmem:[%s1 + $0x38] sm:$0xff]
      %v395 = vld [vmem:[%s1 + $0x40] sm:$0xff]
      %v396 = vld [vmem:[%s1 + $0x48] sm:$0xff]
      %v397 = vld [vmem:[%s1 + $0x50] sm:$0xff]
      %v398 = vld [vmem:[%s1 + $0x58] sm:$0xff]
      %v399 = vld [vmem:[%s1 + $0x60] sm:$0xff]
      %v400 = vld [vmem:[%s1 + $0x68] sm:$0xff]
      %v401 = vld [vmem:[%s1 + $0x70] sm:$0xff]
      %v402 = vld [vmem:[%s1 + $0x78] sm:$0xff]
      %v403 = vld [vmem:[%s1 + $0x80] sm:$0xff]
      %v404 = vld [vmem:[%s1 + $0x88] sm:$0xff]
      %v405 = vld [vmem:[%s1 + $0x90] sm:$0xff]
      %v406 = vld [vmem:[%s1 + $0x98] sm:$0xff]
      %v407 = vld [vmem:[%s1 + $0xa0] sm:$0xff]
      %v408 = vld [vmem:[%s1 + $0xa8] sm:$0xff]
      %v409 = vld [vmem:[%s1 + $0xb0] sm:$0xff]
      %v410 = vld [vmem:[%s1 + $0xb8] sm:$0xff]
      %v411 = vld [vmem:[%s1 + $0xc0] sm:$0xff]
      %v412 = vld [vmem:[%s1 + $0xc8] sm:$0xff]
      %v413 = vld [vmem:[%s1 + $0xd0] sm:$0xff]
      %v414 = vld [vmem:[%s1 + $0xd8] sm:$0xff]
      %v415 = vld [vmem:[%s1 + $0xe0] sm:$0xff]
      %v416 = vld [vmem:[%s1 + $0xe8] sm:$0xff]
      %v417 = vld [vmem:[%s1 + $0xf0] sm:$0xff]
      %v418 = vld [vmem:[%s1 + $0xf8] sm:$0xff]
      %v419 = vld [vmem:[%s1 + $0x100] sm:$0xff]
      %v420 = vld [vmem:[%s1 + $0x108] sm:$0xff]
      %v421 = vld [vmem:[%s1 + $0x110] sm:$0xff]
      %v422 = vld [vmem:[%s1 + $0x118] sm:$0xff]
      %v423 = vld [vmem:[%s1 + $0x120] sm:$0xff]
      %v424 = vld [vmem:[%s1 + $0x128] sm:$0xff]
      %v425 = vld [vmem:[%s1 + $0x130] sm:$0xff]
      %v426 = vld [vmem:[%s1 + $0x138] sm:$0xff]
      %v427 = vld [vmem:[%s1 + $0x140] sm:$0xff]
      %v428 = vld [vmem:[%s1 + $0x148] sm:$0xff]
      %v429 = vld [vmem:[%s1 + $0x150] sm:$0xff]
      %v430 = vld [vmem:[%s1 + $0x158] sm:$0xff]
      %vm447 = vcmask 1046528
      %v448 = vrot.slane %v371, 1
      %v449 = vrot.slane %v325, 1
      %v450 = vsel %vm447, %v448, %v449
      %v451 = vrot.slane %v379, 1
      %v452 = vsel %vm447, %v449, %v451
      %v453 = vrot.slane %v372, 1
      %v454 = vrot.slane %v328, 1
      %v455 = vsel %vm447, %v453, %v454
      %v456 = vrot.slane %v380, 1
      %v457 = vsel %vm447, %v454, %v456
      %v458 = vrot.slane %v373, 1
      %v459 = vrot.slane %v331, 1
      %v460 = vsel %vm447, %v458, %v459
      %v461 = vrot.slane %v381, 1
      %v462 = vsel %vm447, %v459, %v461
      %v463 = vrot.slane %v374, 1
      %v464 = vrot.slane %v334, 1
      %v465 = vsel %vm447, %v463, %v464
      %v466 = vrot.slane %v382, 1
      %v467 = vsel %vm447, %v464, %v466
      %v468 = vrot.slane %v375, 1
      %v469 = vrot.slane %v337, 1
      %v470 = vsel %vm447, %v468, %v469
      %v471 = vrot.slane %v383, 1
      %v472 = vsel %vm447, %v469, %v471
      %v473 = vrot.slane %v376, 1
      %v474 = vrot.slane %v340, 1
      %v475 = vsel %vm447, %v473, %v474
      %v476 = vrot.slane %v384, 1
      %v477 = vsel %vm447, %v474, %v476
      %v478 = vrot.slane %v377, 1
      %v479 = vrot.slane %v343, 1
      %v480 = vsel %vm447, %v478, %v479
      %v481 = vrot.slane %v385, 1
      %v482 = vsel %vm447, %v479, %v481
      %v483 = vrot.slane %v378, 1
      %v484 = vrot.slane %v346, 1
      %v485 = vsel %vm447, %v483, %v484
      %v486 = vrot.slane %v386, 1
      %v487 = vsel %vm447, %v484, %v486
      %488 = vrot.lane.b32.xlu0 %v450, 32
      %v489 = vpop.permute.xlu0 %488
      %490 = vrot.lane.b32.xlu0 %v452, 32
      %v491 = vpop.permute.xlu0 %490
      %492 = vrot.lane.b32.xlu0 %v455, 32
      %v493 = vpop.permute.xlu0 %492
      %494 = vrot.lane.b32.xlu0 %v457, 32
      %v495 = vpop.permute.xlu0 %494
      %496 = vrot.lane.b32.xlu0 %v460, 32
      %v497 = vpop.permute.xlu0 %496
      %498 = vrot.lane.b32.xlu0 %v462, 32
      %v499 = vpop.permute.xlu0 %498
      %500 = vrot.lane.b32.xlu0 %v465, 32
      %v501 = vpop.permute.xlu0 %500
      %502 = vrot.lane.b32.xlu0 %v467, 32
      %v503 = vpop.permute.xlu0 %502
      %504 = vrot.lane.b32.xlu0 %v470, 32
      %v505 = vpop.permute.xlu0 %504
      %506 = vrot.lane.b32.xlu0 %v472, 32
      %v507 = vpop.permute.xlu0 %506
      %508 = vrot.lane.b32.xlu0 %v475, 32
      %v509 = vpop.permute.xlu0 %508
      %510 = vrot.lane.b32.xlu0 %v477, 32
      %v511 = vpop.permute.xlu0 %510
      %512 = vrot.lane.b32.xlu0 %v480, 32
      %v513 = vpop.permute.xlu0 %512
      %514 = vrot.lane.b32.xlu0 %v482, 32
      %v515 = vpop.permute.xlu0 %514
      %516 = vrot.lane.b32.xlu0 %v485, 32
      %v517 = vpop.permute.xlu0 %516
      %518 = vrot.lane.b32.xlu0 %v487, 32
      %v519 = vpop.permute.xlu0 %518
      %vm536 = vcmask 1045504
      %v537 = vrot.slane %v371, 2
      %v538 = vrot.slane %v325, 2
      %v539 = vsel %vm536, %v537, %v538
      %v540 = vrot.slane %v379, 2
      %v541 = vsel %vm536, %v538, %v540
      %v542 = vrot.slane %v372, 2
      %v543 = vrot.slane %v328, 2
      %v544 = vsel %vm536, %v542, %v543
      %v545 = vrot.slane %v380, 2
      %v546 = vsel %vm536, %v543, %v545
      %v547 = vrot.slane %v373, 2
      %v548 = vrot.slane %v331, 2
      %v549 = vsel %vm536, %v547, %v548
      %v550 = vrot.slane %v381, 2
      %v551 = vsel %vm536, %v548, %v550
      %v552 = vrot.slane %v374, 2
      %v553 = vrot.slane %v334, 2
      %v554 = vsel %vm536, %v552, %v553
      %v555 = vrot.slane %v382, 2
      %v556 = vsel %vm536, %v553, %v555
      %v557 = vrot.slane %v375, 2
      %v558 = vrot.slane %v337, 2
      %v559 = vsel %vm536, %v557, %v558
      %v560 = vrot.slane %v383, 2
      %v561 = vsel %vm536, %v558, %v560
      %v562 = vrot.slane %v376, 2
      %v563 = vrot.slane %v340, 2
      %v564 = vsel %vm536, %v562, %v563
      %v565 = vrot.slane %v384, 2
      %v566 = vsel %vm536, %v563, %v565
      %v567 = vrot.slane %v377, 2
      %v568 = vrot.slane %v343, 2
      %v569 = vsel %vm536, %v567, %v568
      %v570 = vrot.slane %v385, 2
      %v571 = vsel %vm536, %v568, %v570
      %v572 = vrot.slane %v378, 2
      %v573 = vrot.slane %v346, 2
      %v574 = vsel %vm536, %v572, %v573
      %v575 = vrot.slane %v386, 2
      %v576 = vsel %vm536, %v573, %v575
      %577 = vrot.lane.b32.xlu0 %v539, 64
      %v578 = vpop.permute.xlu0 %577
      %579 = vrot.lane.b32.xlu0 %v541, 64
      %v580 = vpop.permute.xlu0 %579
      %581 = vrot.lane.b32.xlu0 %v544, 64
      %v582 = vpop.permute.xlu0 %581
      %583 = vrot.lane.b32.xlu0 %v546, 64
      %v584 = vpop.permute.xlu0 %583
      %585 = vrot.lane.b32.xlu0 %v549, 64
      %v586 = vpop.permute.xlu0 %585
      %587 = vrot.lane.b32.xlu0 %v551, 64
      %v588 = vpop.permute.xlu0 %587
      %589 = vrot.lane.b32.xlu0 %v554, 64
      %v590 = vpop.permute.xlu0 %589
      %591 = vrot.lane.b32.xlu0 %v556, 64
      %v592 = vpop.permute.xlu0 %591
      %593 = vrot.lane.b32.xlu0 %v559, 64
      %v594 = vpop.permute.xlu0 %593
      %595 = vrot.lane.b32.xlu0 %v561, 64
      %v596 = vpop.permute.xlu0 %595
      %597 = vrot.lane.b32.xlu0 %v564, 64
      %v598 = vpop.permute.xlu0 %597
      %599 = vrot.lane.b32.xlu0 %v566, 64
      %v600 = vpop.permute.xlu0 %599
      %601 = vrot.lane.b32.xlu0 %v569, 64
      %v602 = vpop.permute.xlu0 %601
      %603 = vrot.lane.b32.xlu0 %v571, 64
      %v604 = vpop.permute.xlu0 %603
      %605 = vrot.lane.b32.xlu0 %v574, 64
      %v606 = vpop.permute.xlu0 %605
      %607 = vrot.lane.b32.xlu0 %v576, 64
      %v608 = vpop.permute.xlu0 %607
      %v625 = vrot.slane %v371, 3
      %v626 = vrot.slane %v325, 3
      %v627 = vsel %vm322, %v625, %v626
      %v628 = vrot.slane %v379, 3
      %v629 = vsel %vm322, %v626, %v628
      %v630 = vrot.slane %v372, 3
      %v631 = vrot.slane %v328, 3
      %v632 = vsel %vm322, %v630, %v631
      %v633 = vrot.slane %v380, 3
      %v634 = vsel %vm322, %v631, %v633
      %v635 = vrot.slane %v373, 3
      %v636 = vrot.slane %v331, 3
      %v637 = vsel %vm322, %v635, %v636
      %v638 = vrot.slane %v381, 3
      %v639 = vsel %vm322, %v636, %v638
      %v640 = vrot.slane %v374, 3
      %v641 = vrot.slane %v334, 3
      %v642 = vsel %vm322, %v640, %v641
      %v643 = vrot.slane %v382, 3
      %v644 = vsel %vm322, %v641, %v643
      %v645 = vrot.slane %v375, 3
      %v646 = vrot.slane %v337, 3
      %v647 = vsel %vm322, %v645, %v646
      %v648 = vrot.slane %v383, 3
      %v649 = vsel %vm322, %v646, %v648
      %v650 = vrot.slane %v376, 3
      %v651 = vrot.slane %v340, 3
      %v652 = vsel %vm322, %v650, %v651
      %v653 = vrot.slane %v384, 3
      %v654 = vsel %vm322, %v651, %v653
      %v655 = vrot.slane %v377, 3
      %v656 = vrot.slane %v343, 3
      %v657 = vsel %vm322, %v655, %v656
      %v658 = vrot.slane %v385, 3
      %v659 = vsel %vm322, %v656, %v658
      %v660 = vrot.slane %v378, 3
      %v661 = vrot.slane %v346, 3
      %v662 = vsel %vm322, %v660, %v661
      %v663 = vrot.slane %v386, 3
      %v664 = vsel %vm322, %v661, %v663
      %665 = vrot.lane.b32.xlu0 %v627, 96
      %v666 = vpop.permute.xlu0 %665
      %667 = vrot.lane.b32.xlu0 %v629, 96
      %v668 = vpop.permute.xlu0 %667
      %669 = vrot.lane.b32.xlu0 %v632, 96
      %v670 = vpop.permute.xlu0 %669
      %671 = vrot.lane.b32.xlu0 %v634, 96
      %v672 = vpop.permute.xlu0 %671
      %673 = vrot.lane.b32.xlu0 %v637, 96
      %v674 = vpop.permute.xlu0 %673
      %675 = vrot.lane.b32.xlu0 %v639, 96
      %v676 = vpop.permute.xlu0 %675
      %677 = vrot.lane.b32.xlu0 %v642, 96
      %v678 = vpop.permute.xlu0 %677
      %679 = vrot.lane.b32.xlu0 %v644, 96
      %v680 = vpop.permute.xlu0 %679
      %681 = vrot.lane.b32.xlu0 %v647, 96
      %v682 = vpop.permute.xlu0 %681
      %683 = vrot.lane.b32.xlu0 %v649, 96
      %v684 = vpop.permute.xlu0 %683
      %685 = vrot.lane.b32.xlu0 %v652, 96
      %v686 = vpop.permute.xlu0 %685
      %687 = vrot.lane.b32.xlu0 %v654, 96
      %v688 = vpop.permute.xlu0 %687
      %689 = vrot.lane.b32.xlu0 %v657, 96
      %v690 = vpop.permute.xlu0 %689
      %691 = vrot.lane.b32.xlu0 %v659, 96
      %v692 = vpop.permute.xlu0 %691
      %693 = vrot.lane.b32.xlu0 %v662, 96
      %v694 = vpop.permute.xlu0 %693
      %695 = vrot.lane.b32.xlu0 %v664, 96
      %v696 = vpop.permute.xlu0 %695
      %vm713 = vcmask 1043456
      %v714 = vrot.slane %v371, 4
      %v715 = vrot.slane %v325, 4
      %v716 = vsel %vm713, %v714, %v715
      %v717 = vrot.slane %v379, 4
      %v718 = vsel %vm713, %v715, %v717
      %v719 = vrot.slane %v372, 4
      %v720 = vrot.slane %v328, 4
      %v721 = vsel %vm713, %v719, %v720
      %v722 = vrot.slane %v380, 4
      %v723 = vsel %vm713, %v720, %v722
      %v724 = vrot.slane %v373, 4
      %v725 = vrot.slane %v331, 4
      %v726 = vsel %vm713, %v724, %v725
      %v727 = vrot.slane %v381, 4
      %v728 = vsel %vm713, %v725, %v727
      %v729 = vrot.slane %v374, 4
      %v730 = vrot.slane %v334, 4
      %v731 = vsel %vm713, %v729, %v730
      %v732 = vrot.slane %v382, 4
      %v733 = vsel %vm713, %v730, %v732
      %v734 = vrot.slane %v375, 4
      %v735 = vrot.slane %v337, 4
      %v736 = vsel %vm713, %v734, %v735
      %v737 = vrot.slane %v383, 4
      %v738 = vsel %vm713, %v735, %v737
      %v739 = vrot.slane %v376, 4
      %v740 = vrot.slane %v340, 4
      %v741 = vsel %vm713, %v739, %v740
      %v742 = vrot.slane %v384, 4
      %v743 = vsel %vm713, %v740, %v742
      %v744 = vrot.slane %v377, 4
      %v745 = vrot.slane %v343, 4
      %v746 = vsel %vm713, %v744, %v745
      %v747 = vrot.slane %v385, 4
      %v748 = vsel %vm713, %v745, %v747
      %v749 = vrot.slane %v378, 4
      %v750 = vrot.slane %v346, 4
      %v751 = vsel %vm713, %v749, %v750
      %v752 = vrot.slane %v386, 4
      %v753 = vsel %vm713, %v750, %v752
      %vm770 = vcmask 1042432
      %v771 = vrot.slane %v371, 5
      %v772 = vrot.slane %v325, 5
      %v773 = vsel %vm770, %v771, %v772
      %v774 = vrot.slane %v379, 5
      %v775 = vsel %vm770, %v772, %v774
      %v776 = vrot.slane %v372, 5
      %v777 = vrot.slane %v328, 5
      %v778 = vsel %vm770, %v776, %v777
      %v779 = vrot.slane %v380, 5
      %v780 = vsel %vm770, %v777, %v779
      %v781 = vrot.slane %v373, 5
      %v782 = vrot.slane %v331, 5
      %v783 = vsel %vm770, %v781, %v782
      %v784 = vrot.slane %v381, 5
      %v785 = vsel %vm770, %v782, %v784
      %v786 = vrot.slane %v374, 5
      %v787 = vrot.slane %v334, 5
      %v788 = vsel %vm770, %v786, %v787
      %v789 = vrot.slane %v382, 5
      %v790 = vsel %vm770, %v787, %v789
      %v791 = vrot.slane %v375, 5
      %v792 = vrot.slane %v337, 5
      %v793 = vsel %vm770, %v791, %v792
      %v794 = vrot.slane %v383, 5
      %v795 = vsel %vm770, %v792, %v794
      %v796 = vrot.slane %v376, 5
      %v797 = vrot.slane %v340, 5
      %v798 = vsel %vm770, %v796, %v797
      %v799 = vrot.slane %v384, 5
      %v800 = vsel %vm770, %v797, %v799
      %v801 = vrot.slane %v377, 5
      %v802 = vrot.slane %v343, 5
      %v803 = vsel %vm770, %v801, %v802
      %v804 = vrot.slane %v385, 5
      %v805 = vsel %vm770, %v802, %v804
      %v806 = vrot.slane %v378, 5
      %v807 = vrot.slane %v346, 5
      %v808 = vsel %vm770, %v806, %v807
      %v809 = vrot.slane %v386, 5
      %v810 = vsel %vm770, %v807, %v809
      %811 = vrot.lane.b32.xlu0 %v773, 32
      %v812 = vpop.permute.xlu0 %811
      %813 = vrot.lane.b32.xlu0 %v775, 32
      %v814 = vpop.permute.xlu0 %813
      %815 = vrot.lane.b32.xlu0 %v778, 32
      %v816 = vpop.permute.xlu0 %815
      %817 = vrot.lane.b32.xlu0 %v780, 32
      %v818 = vpop.permute.xlu0 %817
      %819 = vrot.lane.b32.xlu0 %v783, 32
      %v820 = vpop.permute.xlu0 %819
      %821 = vrot.lane.b32.xlu0 %v785, 32
      %v822 = vpop.permute.xlu0 %821
      %823 = vrot.lane.b32.xlu0 %v788, 32
      %v824 = vpop.permute.xlu0 %823
      %825 = vrot.lane.b32.xlu0 %v790, 32
      %v826 = vpop.permute.xlu0 %825
      %827 = vrot.lane.b32.xlu0 %v793, 32
      %v828 = vpop.permute.xlu0 %827
      %829 = vrot.lane.b32.xlu0 %v795, 32
      %v830 = vpop.permute.xlu0 %829
      %831 = vrot.lane.b32.xlu0 %v798, 32
      %v832 = vpop.permute.xlu0 %831
      %833 = vrot.lane.b32.xlu0 %v800, 32
      %v834 = vpop.permute.xlu0 %833
      %835 = vrot.lane.b32.xlu0 %v803, 32
      %v836 = vpop.permute.xlu0 %835
      %837 = vrot.lane.b32.xlu0 %v805, 32
      %v838 = vpop.permute.xlu0 %837
      %839 = vrot.lane.b32.xlu0 %v808, 32
      %v840 = vpop.permute.xlu0 %839
      %841 = vrot.lane.b32.xlu0 %v810, 32
      %v842 = vpop.permute.xlu0 %841
      %vm859 = vcmask 1041408
      %v860 = vrot.slane %v371, 6
      %v861 = vrot.slane %v325, 6
      %v862 = vsel %vm859, %v860, %v861
      %v863 = vrot.slane %v379, 6
      %v864 = vsel %vm859, %v861, %v863
      %v865 = vrot.slane %v372, 6
      %v866 = vrot.slane %v328, 6
      %v867 = vsel %vm859, %v865, %v866
      %v868 = vrot.slane %v380, 6
      %v869 = vsel %vm859, %v866, %v868
      %v870 = vrot.slane %v373, 6
      %v871 = vrot.slane %v331, 6
      %v872 = vsel %vm859, %v870, %v871
      %v873 = vrot.slane %v381, 6
      %v874 = vsel %vm859, %v871, %v873
      %v875 = vrot.slane %v374, 6
      %v876 = vrot.slane %v334, 6
      %v877 = vsel %vm859, %v875, %v876
      %v878 = vrot.slane %v382, 6
      %v879 = vsel %vm859, %v876, %v878
      %v880 = vrot.slane %v375, 6
      %v881 = vrot.slane %v337, 6
      %v882 = vsel %vm859, %v880, %v881
      %v883 = vrot.slane %v383, 6
      %v884 = vsel %vm859, %v881, %v883
      %v885 = vrot.slane %v376, 6
      %v886 = vrot.slane %v340, 6
      %v887 = vsel %vm859, %v885, %v886
      %v888 = vrot.slane %v384, 6
      %v889 = vsel %vm859, %v886, %v888
      %v890 = vrot.slane %v377, 6
      %v891 = vrot.slane %v343, 6
      %v892 = vsel %vm859, %v890, %v891
      %v893 = vrot.slane %v385, 6
      %v894 = vsel %vm859, %v891, %v893
      %v895 = vrot.slane %v378, 6
      %v896 = vrot.slane %v346, 6
      %v897 = vsel %vm859, %v895, %v896
      %v898 = vrot.slane %v386, 6
      %v899 = vsel %vm859, %v896, %v898
      %900 = vrot.lane.b32.xlu0 %v862, 64
      %v901 = vpop.permute.xlu0 %900
      %902 = vrot.lane.b32.xlu0 %v864, 64
      %v903 = vpop.permute.xlu0 %902
      %904 = vrot.lane.b32.xlu0 %v867, 64
      %v905 = vpop.permute.xlu0 %904
      %906 = vrot.lane.b32.xlu0 %v869, 64
      %v907 = vpop.permute.xlu0 %906
      %908 = vrot.lane.b32.xlu0 %v872, 64
      %v909 = vpop.permute.xlu0 %908
      %910 = vrot.lane.b32.xlu0 %v874, 64
      %v911 = vpop.permute.xlu0 %910
      %912 = vrot.lane.b32.xlu0 %v877, 64
      %v913 = vpop.permute.xlu0 %912
      %914 = vrot.lane.b32.xlu0 %v879, 64
      %v915 = vpop.permute.xlu0 %914
      %916 = vrot.lane.b32.xlu0 %v882, 64
      %v917 = vpop.permute.xlu0 %916
      %918 = vrot.lane.b32.xlu0 %v884, 64
      %v919 = vpop.permute.xlu0 %918
      %920 = vrot.lane.b32.xlu0 %v887, 64
      %v921 = vpop.permute.xlu0 %920
      %922 = vrot.lane.b32.xlu0 %v889, 64
      %v923 = vpop.permute.xlu0 %922
      %924 = vrot.lane.b32.xlu0 %v892, 64
      %v925 = vpop.permute.xlu0 %924
      %926 = vrot.lane.b32.xlu0 %v894, 64
      %v927 = vpop.permute.xlu0 %926
      %928 = vrot.lane.b32.xlu0 %v897, 64
      %v929 = vpop.permute.xlu0 %928
      %930 = vrot.lane.b32.xlu0 %v899, 64
      %v931 = vpop.permute.xlu0 %930
      %vm948 = vcmask 1040384
      %v949 = vrot.slane %v371, 7
      %v950 = vrot.slane %v325, 7
      %v951 = vsel %vm948, %v949, %v950
      %v952 = vrot.slane %v379, 7
      %v953 = vsel %vm948, %v950, %v952
      %v954 = vrot.slane %v372, 7
      %v955 = vrot.slane %v328, 7
      %v956 = vsel %vm948, %v954, %v955
      %v957 = vrot.slane %v380, 7
      %v958 = vsel %vm948, %v955, %v957
      %v959 = vrot.slane %v373, 7
      %v960 = vrot.slane %v331, 7
      %v961 = vsel %vm948, %v959, %v960
      %v962 = vrot.slane %v381, 7
      %v963 = vsel %vm948, %v960, %v962
      %v964 = vrot.slane %v374, 7
      %v965 = vrot.slane %v334, 7
      %v966 = vsel %vm948, %v964, %v965
      %v967 = vrot.slane %v382, 7
      %v968 = vsel %vm948, %v965, %v967
      %v969 = vrot.slane %v375, 7
      %v970 = vrot.slane %v337, 7
      %v971 = vsel %vm948, %v969, %v970
      %v972 = vrot.slane %v383, 7
      %v973 = vsel %vm948, %v970, %v972
      %v974 = vrot.slane %v376, 7
      %v975 = vrot.slane %v340, 7
      %v976 = vsel %vm948, %v974, %v975
      %v977 = vrot.slane %v384, 7
      %v978 = vsel %vm948, %v975, %v977
      %v979 = vrot.slane %v377, 7
      %v980 = vrot.slane %v343, 7
      %v981 = vsel %vm948, %v979, %v980
      %v982 = vrot.slane %v385, 7
      %v983 = vsel %vm948, %v980, %v982
      %v984 = vrot.slane %v378, 7
      %v985 = vrot.slane %v346, 7
      %v986 = vsel %vm948, %v984, %v985
      %v987 = vrot.slane %v386, 7
      %v988 = vsel %vm948, %v985, %v987
      %989 = vrot.lane.b32.xlu0 %v951, 96
      %v990 = vpop.permute.xlu0 %989
      %991 = vrot.lane.b32.xlu0 %v953, 96
      %v992 = vpop.permute.xlu0 %991
      %993 = vrot.lane.b32.xlu0 %v956, 96
      %v994 = vpop.permute.xlu0 %993
      %995 = vrot.lane.b32.xlu0 %v958, 96
      %v996 = vpop.permute.xlu0 %995
      %997 = vrot.lane.b32.xlu0 %v961, 96
      %v998 = vpop.permute.xlu0 %997
      %999 = vrot.lane.b32.xlu0 %v963, 96
      %v1000 = vpop.permute.xlu0 %999
      %1001 = vrot.lane.b32.xlu0 %v966, 96
      %v1002 = vpop.permute.xlu0 %1001
      %1003 = vrot.lane.b32.xlu0 %v968, 96
      %v1004 = vpop.permute.xlu0 %1003
      %1005 = vrot.lane.b32.xlu0 %v971, 96
      %v1006 = vpop.permute.xlu0 %1005
      %1007 = vrot.lane.b32.xlu0 %v973, 96
      %v1008 = vpop.permute.xlu0 %1007
      %1009 = vrot.lane.b32.xlu0 %v976, 96
      %v1010 = vpop.permute.xlu0 %1009
      %1011 = vrot.lane.b32.xlu0 %v978, 96
      %v1012 = vpop.permute.xlu0 %1011
      %1013 = vrot.lane.b32.xlu0 %v981, 96
      %v1014 = vpop.permute.xlu0 %1013
      %1015 = vrot.lane.b32.xlu0 %v983, 96
      %v1016 = vpop.permute.xlu0 %1015
      %1017 = vrot.lane.b32.xlu0 %v986, 96
      %v1018 = vpop.permute.xlu0 %1017
      %1019 = vrot.lane.b32.xlu0 %v988, 96
      %v1020 = vpop.permute.xlu0 %1019
      %v1038 = vrot.slane 0.0, 1
      %v1039 = vsel %vm447, %v451, %v1038
      %v1040 = vsel %vm447, %v456, %v1038
      %v1041 = vsel %vm447, %v461, %v1038
      %v1042 = vsel %vm447, %v466, %v1038
      %v1043 = vsel %vm447, %v471, %v1038
      %v1044 = vsel %vm447, %v476, %v1038
      %v1045 = vsel %vm447, %v481, %v1038
      %v1046 = vsel %vm447, %v486, %v1038
      %1047 = vrot.lane.b32.xlu0 %v1039, 32
      %v1048 = vpop.permute.xlu0 %1047
      %1049 = vrot.lane.b32.xlu0 %v1040, 32
      %v1050 = vpop.permute.xlu0 %1049
      %1051 = vrot.lane.b32.xlu0 %v1041, 32
      %v1052 = vpop.permute.xlu0 %1051
      %1053 = vrot.lane.b32.xlu0 %v1042, 32
      %v1054 = vpop.permute.xlu0 %1053
      %1055 = vrot.lane.b32.xlu0 %v1043, 32
      %v1056 = vpop.permute.xlu0 %1055
      %1057 = vrot.lane.b32.xlu0 %v1044, 32
      %v1058 = vpop.permute.xlu0 %1057
      %1059 = vrot.lane.b32.xlu0 %v1045, 32
      %v1060 = vpop.permute.xlu0 %1059
      %1061 = vrot.lane.b32.xlu0 %v1046, 32
      %v1062 = vpop.permute.xlu0 %1061
      %v1071 = vrot.slane 0.0, 2
      %v1072 = vsel %vm536, %v540, %v1071
      %v1073 = vsel %vm536, %v545, %v1071
      %v1074 = vsel %vm536, %v550, %v1071
      %v1075 = vsel %vm536, %v555, %v1071
      %v1076 = vsel %vm536, %v560, %v1071
      %v1077 = vsel %vm536, %v565, %v1071
      %v1078 = vsel %vm536, %v570, %v1071
      %v1079 = vsel %vm536, %v575, %v1071
      %1080 = vrot.lane.b32.xlu0 %v1072, 64
      %v1081 = vpop.permute.xlu0 %1080
      %1082 = vrot.lane.b32.xlu0 %v1073, 64
      %v1083 = vpop.permute.xlu0 %1082
      %1084 = vrot.lane.b32.xlu0 %v1074, 64
      %v1085 = vpop.permute.xlu0 %1084
      %1086 = vrot.lane.b32.xlu0 %v1075, 64
      %v1087 = vpop.permute.xlu0 %1086
      %1088 = vrot.lane.b32.xlu0 %v1076, 64
      %v1089 = vpop.permute.xlu0 %1088
      %1090 = vrot.lane.b32.xlu0 %v1077, 64
      %v1091 = vpop.permute.xlu0 %1090
      %1092 = vrot.lane.b32.xlu0 %v1078, 64
      %v1093 = vpop.permute.xlu0 %1092
      %1094 = vrot.lane.b32.xlu0 %v1079, 64
      %v1095 = vpop.permute.xlu0 %1094
      %vm1104 = vcmask 261120
      %v1105 = vsel %vm1104, %v371, %v489
      %v1106 = vsel %vm1104, %v325, %v491
      %v1107 = vsel %vm1104, %v372, %v493
      %v1108 = vsel %vm1104, %v328, %v495
      %v1109 = vsel %vm1104, %v373, %v497
      %v1110 = vsel %vm1104, %v331, %v499
      %v1111 = vsel %vm1104, %v374, %v501
      %v1112 = vsel %vm1104, %v334, %v503
      %v1113 = vsel %vm1104, %v375, %v505
      %v1114 = vsel %vm1104, %v337, %v507
      %v1115 = vsel %vm1104, %v376, %v509
      %v1116 = vsel %vm1104, %v340, %v511
      %v1117 = vsel %vm1104, %v377, %v513
      %v1118 = vsel %vm1104, %v343, %v515
      %v1119 = vsel %vm1104, %v378, %v517
      %v1120 = vsel %vm1104, %v346, %v519
      %vm1121 = vcmask 523264
      %v1122 = vsel %vm1121, %v1105, %v578
      %v1123 = vsel %vm1121, %v1106, %v580
      %v1124 = vsel %vm1121, %v1107, %v582
      %v1125 = vsel %vm1121, %v1108, %v584
      %v1126 = vsel %vm1121, %v1109, %v586
      %v1127 = vsel %vm1121, %v1110, %v588
      %v1128 = vsel %vm1121, %v1111, %v590
      %v1129 = vsel %vm1121, %v1112, %v592
      %v1130 = vsel %vm1121, %v1113, %v594
      %v1131 = vsel %vm1121, %v1114, %v596
      %v1132 = vsel %vm1121, %v1115, %v598
      %v1133 = vsel %vm1121, %v1116, %v600
      %v1134 = vsel %vm1121, %v1117, %v602
      %v1135 = vsel %vm1121, %v1118, %v604
      %v1136 = vsel %vm1121, %v1119, %v606
      %v1137 = vsel %vm1121, %v1120, %v608
      %vm1138 = vcmask 785408
      %v1139 = vsel %vm1138, %v1122, %v666
      %v1140 = vsel %vm1138, %v1123, %v668
      %v1141 = vsel %vm1138, %v1124, %v670
      %v1142 = vsel %vm1138, %v1125, %v672
      %v1143 = vsel %vm1138, %v1126, %v674
      %v1144 = vsel %vm1138, %v1127, %v676
      %v1145 = vsel %vm1138, %v1128, %v678
      %v1146 = vsel %vm1138, %v1129, %v680
      %v1147 = vsel %vm1138, %v1130, %v682
      %v1148 = vsel %vm1138, %v1131, %v684
      %v1149 = vsel %vm1138, %v1132, %v686
      %v1150 = vsel %vm1138, %v1133, %v688
      %v1151 = vsel %vm1138, %v1134, %v690
      %v1152 = vsel %vm1138, %v1135, %v692
      %v1153 = vsel %vm1138, %v1136, %v694
      %v1154 = vsel %vm1138, %v1137, %v696
      %v1155 = vsel %vm1104, %v716, %v812
      %v1156 = vsel %vm1104, %v718, %v814
      %v1157 = vsel %vm1104, %v721, %v816
      %v1158 = vsel %vm1104, %v723, %v818
      %v1159 = vsel %vm1104, %v726, %v820
      %v1160 = vsel %vm1104, %v728, %v822
      %v1161 = vsel %vm1104, %v731, %v824
      %v1162 = vsel %vm1104, %v733, %v826
      %v1163 = vsel %vm1104, %v736, %v828
      %v1164 = vsel %vm1104, %v738, %v830
      %v1165 = vsel %vm1104, %v741, %v832
      %v1166 = vsel %vm1104, %v743, %v834
      %v1167 = vsel %vm1104, %v746, %v836
      %v1168 = vsel %vm1104, %v748, %v838
      %v1169 = vsel %vm1104, %v751, %v840
      %v1170 = vsel %vm1104, %v753, %v842
      %v1171 = vsel %vm1121, %v1155, %v901
      %v1172 = vsel %vm1121, %v1156, %v903
      %v1173 = vsel %vm1121, %v1157, %v905
      %v1174 = vsel %vm1121, %v1158, %v907
      %v1175 = vsel %vm1121, %v1159, %v909
      %v1176 = vsel %vm1121, %v1160, %v911
      %v1177 = vsel %vm1121, %v1161, %v913
      %v1178 = vsel %vm1121, %v1162, %v915
      %v1179 = vsel %vm1121, %v1163, %v917
      %v1180 = vsel %vm1121, %v1164, %v919
      %v1181 = vsel %vm1121, %v1165, %v921
      %v1182 = vsel %vm1121, %v1166, %v923
      %v1183 = vsel %vm1121, %v1167, %v925
      %v1184 = vsel %vm1121, %v1168, %v927
      %v1185 = vsel %vm1121, %v1169, %v929
      %v1186 = vsel %vm1121, %v1170, %v931
      %v1187 = vsel %vm1138, %v1171, %v990
      %v1188 = vsel %vm1138, %v1172, %v992
      %v1189 = vsel %vm1138, %v1173, %v994
      %v1190 = vsel %vm1138, %v1174, %v996
      %v1191 = vsel %vm1138, %v1175, %v998
      %v1192 = vsel %vm1138, %v1176, %v1000
      %v1193 = vsel %vm1138, %v1177, %v1002
      %v1194 = vsel %vm1138, %v1178, %v1004
      %v1195 = vsel %vm1138, %v1179, %v1006
      %v1196 = vsel %vm1138, %v1180, %v1008
      %v1197 = vsel %vm1138, %v1181, %v1010
      %v1198 = vsel %vm1138, %v1182, %v1012
      %v1199 = vsel %vm1138, %v1183, %v1014
      %v1200 = vsel %vm1138, %v1184, %v1016
      %v1201 = vsel %vm1138, %v1185, %v1018
      %v1202 = vsel %vm1138, %v1186, %v1020
      %v1203 = vsel %vm1104, %v379, %v1048
      %v1204 = vsel %vm1104, %v380, %v1050
      %v1205 = vsel %vm1104, %v381, %v1052
      %v1206 = vsel %vm1104, %v382, %v1054
      %v1207 = vsel %vm1104, %v383, %v1056
      %v1208 = vsel %vm1104, %v384, %v1058
      %v1209 = vsel %vm1104, %v385, %v1060
      %v1210 = vsel %vm1104, %v386, %v1062
      %v1211 = vsel %vm1121, %v1203, %v1081
      %v1212 = vsel %vm1121, %v1204, %v1083
      %v1213 = vsel %vm1121, %v1205, %v1085
      %v1214 = vsel %vm1121, %v1206, %v1087
      %v1215 = vsel %vm1121, %v1207, %v1089
      %v1216 = vsel %vm1121, %v1208, %v1091
      %v1217 = vsel %vm1121, %v1209, %v1093
      %v1218 = vsel %vm1121, %v1210, %v1095
      %v1219 = vpack.c.bf16 %v1140, %v1139
      %v1220 = vpack.c.bf16 %v1188, %v1187
      %v1221 = vpack.c.bf16 %v1211, %v1123
      %v1222 = vpack.c.bf16 %v1142, %v1141
      %v1223 = vpack.c.bf16 %v1190, %v1189
      %v1224 = vpack.c.bf16 %v1212, %v1125
      %v1225 = vpack.c.bf16 %v1144, %v1143
      %v1226 = vpack.c.bf16 %v1192, %v1191
      %v1227 = vpack.c.bf16 %v1213, %v1127
      %v1228 = vpack.c.bf16 %v1146, %v1145
      %v1229 = vpack.c.bf16 %v1194, %v1193
      %v1230 = vpack.c.bf16 %v1214, %v1129
      %v1231 = vpack.c.bf16 %v1148, %v1147
      %v1232 = vpack.c.bf16 %v1196, %v1195
      %v1233 = vpack.c.bf16 %v1215, %v1131
      %v1234 = vpack.c.bf16 %v1150, %v1149
      %v1235 = vpack.c.bf16 %v1198, %v1197
      %v1236 = vpack.c.bf16 %v1216, %v1133
      %v1237 = vpack.c.bf16 %v1152, %v1151
      %v1238 = vpack.c.bf16 %v1200, %v1199
      %v1239 = vpack.c.bf16 %v1217, %v1135
      %v1240 = vpack.c.bf16 %v1154, %v1153
      %v1241 = vpack.c.bf16 %v1202, %v1201
      %v1242 = vpack.c.bf16 %v1218, %v1137
      %v1244 = vlaneseq
      %v1245 = vshrl.u32 %v1244, 7
      %v1246 = vsub.s32 0, %v1245
      %v1247 = vrot.slane %v300, %v1246
      %v1248 = vlaneseq
      %v1249 = vshrl.u32 %v1248, 7
      %v1250 = vsub.s32 1, %v1249
      %v1251 = vrot.slane %v300, %v1250
      %v1298 = vunpack.c.l.b16 %v387
      %v1299 = vunpack.c.h.b16 %v387
      %v1300 = vunpack.c.l.b16 %v388
      %v1301 = vunpack.c.h.b16 %v388
      %v1302 = vunpack.c.l.b16 %v389
      %v1303 = vunpack.c.h.b16 %v389
      %v1304 = vunpack.c.l.b16 %v390
      %v1305 = vunpack.c.h.b16 %v390
      %v1306 = vunpack.c.l.b16 %v391
      %v1307 = vunpack.c.h.b16 %v391
      %v1308 = vunpack.c.l.b16 %v392
      %v1309 = vunpack.c.h.b16 %v392
      %v1310 = vunpack.c.l.b16 %v393
      %v1311 = vunpack.c.h.b16 %v393
      %v1312 = vunpack.c.l.b16 %v394
      %v1313 = vunpack.c.h.b16 %v394
      %v1314 = vunpack.c.l.b16 %v395
      %v1315 = vunpack.c.h.b16 %v395
      %v1316 = vunpack.c.l.b16 %v396
      %v1317 = vunpack.c.h.b16 %v396
      %v1318 = vunpack.c.l.b16 %v397
      %v1319 = vunpack.c.h.b16 %v397
      %v1320 = vunpack.c.l.b16 %v398
      %v1321 = vunpack.c.h.b16 %v398
      %v1322 = vunpack.c.l.b16 %v399
      %v1323 = vunpack.c.h.b16 %v399
      %v1324 = vunpack.c.l.b16 %v400
      %v1325 = vunpack.c.h.b16 %v400
      %v1326 = vunpack.c.l.b16 %v401
      %v1327 = vunpack.c.h.b16 %v401
      %v1328 = vunpack.c.l.b16 %v402
      %v1329 = vunpack.c.h.b16 %v402
      %v1330 = vunpack.c.l.b16 %v403
      %v1331 = vunpack.c.h.b16 %v403
      %v1332 = vunpack.c.l.b16 %v404
      %v1333 = vunpack.c.h.b16 %v404
      %v1334 = vunpack.c.l.b16 %v405
      %v1335 = vunpack.c.h.b16 %v405
      %v1336 = vunpack.c.l.b16 %v406
      %v1337 = vunpack.c.h.b16 %v406
      %v1338 = vunpack.c.l.b16 %v407
      %v1339 = vunpack.c.h.b16 %v407
      %v1340 = vunpack.c.l.b16 %v408
      %v1341 = vunpack.c.h.b16 %v408
      %v1342 = vunpack.c.l.b16 %v409
      %v1343 = vunpack.c.h.b16 %v409
      %v1344 = vunpack.c.l.b16 %v410
      %v1345 = vunpack.c.h.b16 %v410
      %v1346 = vunpack.c.l.b16 %v411
      %v1347 = vunpack.c.h.b16 %v411
      %v1348 = vunpack.c.l.b16 %v412
      %v1349 = vunpack.c.h.b16 %v412
      %v1350 = vunpack.c.l.b16 %v413
      %v1351 = vunpack.c.h.b16 %v413
      %v1352 = vunpack.c.l.b16 %v414
      %v1353 = vunpack.c.h.b16 %v414
      %v1354 = vunpack.c.l.b16 %v415
      %v1355 = vunpack.c.h.b16 %v415
      %v1356 = vunpack.c.l.b16 %v416
      %v1357 = vunpack.c.h.b16 %v416
      %v1358 = vunpack.c.l.b16 %v417
      %v1359 = vunpack.c.h.b16 %v417
      %v1360 = vunpack.c.l.b16 %v418
      %v1361 = vunpack.c.h.b16 %v418
      %v1362 = vunpack.c.l.b16 %v419
      %v1363 = vunpack.c.h.b16 %v419
      %v1364 = vunpack.c.l.b16 %v420
      %v1365 = vunpack.c.h.b16 %v420
      %v1366 = vunpack.c.l.b16 %v421
      %v1367 = vunpack.c.h.b16 %v421
      %v1368 = vunpack.c.l.b16 %v422
      %v1369 = vunpack.c.h.b16 %v422
      %v1370 = vunpack.c.l.b16 %v423
      %v1371 = vunpack.c.h.b16 %v423
      %v1372 = vunpack.c.l.b16 %v424
      %v1373 = vunpack.c.h.b16 %v424
      %v1374 = vunpack.c.l.b16 %v425
      %v1375 = vunpack.c.h.b16 %v425
      %v1376 = vunpack.c.l.b16 %v426
      %v1377 = vunpack.c.h.b16 %v426
      %v1378 = vunpack.c.l.b16 %v427
      %v1379 = vunpack.c.h.b16 %v427
      %v1380 = vunpack.c.l.b16 %v428
      %v1381 = vunpack.c.h.b16 %v428
      %v1382 = vunpack.c.l.b16 %v429
      %v1383 = vunpack.c.h.b16 %v429
      %v1384 = vunpack.c.l.b16 %v430
      %v1385 = vunpack.c.h.b16 %v430
      %v1386 = vpack.c.b16 %v1300, %v1298
      %v1387 = vpack.c.b16 %v1301, %v1299
      %v1388 = vpack.c.b16 %v1304, %v1302
      %v1389 = vpack.c.b16 %v1305, %v1303
      %v1390 = vpack.c.b16 %v1308, %v1306
      %v1391 = vpack.c.b16 %v1309, %v1307
      %v1392 = vpack.c.b16 %v1312, %v1310
      %v1393 = vpack.c.b16 %v1313, %v1311
      %v1394 = vpack.c.b16 %v1316, %v1314
      %v1395 = vpack.c.b16 %v1317, %v1315
      %v1396 = vpack.c.b16 %v1320, %v1318
      %v1397 = vpack.c.b16 %v1321, %v1319
      %v1398 = vpack.c.b16 %v1324, %v1322
      %v1399 = vpack.c.b16 %v1325, %v1323
      %v1400 = vpack.c.b16 %v1328, %v1326
      %v1401 = vpack.c.b16 %v1329, %v1327
      %v1402 = vpack.c.b16 %v1332, %v1330
      %v1403 = vpack.c.b16 %v1333, %v1331
      %v1404 = vpack.c.b16 %v1336, %v1334
      %v1405 = vpack.c.b16 %v1337, %v1335
      %v1406 = vpack.c.b16 %v1340, %v1338
      %v1407 = vpack.c.b16 %v1341, %v1339
      %v1408 = vpack.c.b16 %v1344, %v1342
      %v1409 = vpack.c.b16 %v1345, %v1343
      %v1410 = vpack.c.b16 %v1348, %v1346
      %v1411 = vpack.c.b16 %v1349, %v1347
      %v1412 = vpack.c.b16 %v1352, %v1350
      %v1413 = vpack.c.b16 %v1353, %v1351
      %v1414 = vpack.c.b16 %v1356, %v1354
      %v1415 = vpack.c.b16 %v1357, %v1355
      %v1416 = vpack.c.b16 %v1360, %v1358
      %v1417 = vpack.c.b16 %v1361, %v1359
      %v1418 = vpack.c.b16 %v1364, %v1362
      %v1419 = vpack.c.b16 %v1365, %v1363
      %v1420 = vpack.c.b16 %v1368, %v1366
      %v1421 = vpack.c.b16 %v1369, %v1367
      %v1422 = vpack.c.b16 %v1372, %v1370
      %v1423 = vpack.c.b16 %v1373, %v1371
      %v1424 = vpack.c.b16 %v1376, %v1374
      %v1425 = vpack.c.b16 %v1377, %v1375
      %v1426 = vpack.c.b16 %v1380, %v1378
      %v1427 = vpack.c.b16 %v1381, %v1379
      %v1428 = vpack.c.b16 %v1384, %v1382
      %v1429 = vpack.c.b16 %v1385, %v1383
      %v1475 = vsel %vm1138, %v1221, 0
      %v1478 = vsel %vm1138, %v1224, 0
      %v1481 = vsel %vm1138, %v1227, 0
      %v1484 = vsel %vm1138, %v1230, 0
      %v1487 = vsel %vm1138, %v1233, 0
      %v1490 = vsel %vm1138, %v1236, 0
      %v1493 = vsel %vm1138, %v1239, 0
      %v1496 = vsel %vm1138, %v1242, 0
      %1498 = vmatprep.subr.bf16.mxu0 %v1387
      %1499 = vmatpush1.bf16.msra.mxu0 %v1386
      %1500 = vmatprep.subr.bf16.mxu0 %v1389
      %1501 = vmatpush1.bf16.msra.mxu0 %v1388
      %1502 = vmatprep.subr.bf16.mxu0 %v1391
      %1503 = vmatpush1.bf16.msra.mxu0 %v1390
      %1504 = vmatprep.subr.bf16.mxu0 %v1393
      %1505 = vmatpush1.bf16.msra.mxu0 %v1392
      %1506 = vmatprep.subr.bf16.mxu0 %v1395
      %1507 = vmatpush1.bf16.msra.mxu0 %v1394
      %1508 = vmatprep.subr.bf16.mxu0 %v1397
      %1509 = vmatpush1.bf16.msra.mxu0 %v1396
      %1510 = vmatprep.subr.bf16.mxu0 %v1399
      %1511 = vmatpush1.bf16.msra.mxu0 %v1398
      %1512 = vmatprep.subr.bf16.mxu0 %v1401
      %1513 = vmatpush1.bf16.msra.mxu0 %v1400
      %1514 = vmatprep.subr.bf16.mxu0 %v1403
      %1515 = vmatpush1.bf16.msra.mxu0 %v1402
      %1516 = vmatprep.subr.bf16.mxu0 %v1405
      %1517 = vmatpush1.bf16.msra.mxu0 %v1404
      %1518 = vmatprep.subr.bf16.mxu0 %v1407
      %1519 = vmatpush1.bf16.msra.mxu0 %v1406
      %1520 = vmatprep.subr.bf16.mxu0 %v1409
      %1521 = vmatpush1.bf16.msra.mxu0 %v1408
      %1522 = vmatprep.subr.bf16.mxu0 %v1411
      %1523 = vmatpush1.bf16.msra.mxu0 %v1410
      %1524 = vmatprep.subr.bf16.mxu0 %v1413
      %1525 = vmatpush1.bf16.msra.mxu0 %v1412
      %1526 = vmatprep.subr.bf16.mxu0 %v1415
      %1527 = vmatpush1.bf16.msra.mxu0 %v1414
      %1528 = vmatprep.subr.bf16.mxu0 %v1417
      %1529 = vmatpush1.bf16.msra.mxu0 %v1416
      %1530 = vmatprep.mubr.bf16.mxu0 %v1220
      %1531 = vmatmul.mubr.bf16.gmra.mrb[0].mxu0 %v1219
      %v1532 = vpop.f32.mrb[0].mxu0
      %v1533 = vadd.f32 %v1247, %v1532
      %v1534 = vpop.f32.mrb[0].mxu0
      %v1535 = vadd.f32 %v1251, %v1534
      %v1536 = vpop.f32.mrb[0].mxu0
      %v1537 = vadd.f32 %v1247, %v1536
      %v1538 = vpop.f32.mrb[0].mxu0
      %v1539 = vadd.f32 %v1251, %v1538
      %1540 = vmatprep.mubr.bf16.mxu0 %v1223
      %1541 = vmatmul.mubr.bf16.gmra.mrb[0].mxu0 %v1222
      %v1542 = vpop.f32.mrb[0].mxu0
      %v1543 = vadd.f32 %v1247, %v1542
      %v1544 = vpop.f32.mrb[0].mxu0
      %v1545 = vadd.f32 %v1251, %v1544
      %v1546 = vpop.f32.mrb[0].mxu0
      %v1547 = vadd.f32 %v1247, %v1546
      %v1548 = vpop.f32.mrb[0].mxu0
      %v1549 = vadd.f32 %v1251, %v1548
      %1550 = vmatprep.mubr.bf16.mxu0 %v1226
      %1551 = vmatmul.mubr.bf16.gmra.mrb[0].mxu0 %v1225
      %v1552 = vpop.f32.mrb[0].mxu0
      %v1553 = vadd.f32 %v1247, %v1552
      %v1554 = vpop.f32.mrb[0].mxu0
      %v1555 = vadd.f32 %v1251, %v1554
      %v1556 = vpop.f32.mrb[0].mxu0
      %v1557 = vadd.f32 %v1247, %v1556
      %v1558 = vpop.f32.mrb[0].mxu0
      %v1559 = vadd.f32 %v1251, %v1558
      %1560 = vmatprep.mubr.bf16.mxu0 %v1229
      %1561 = vmatmul.mubr.bf16.gmra.mrb[0].mxu0 %v1228
      %v1562 = vpop.f32.mrb[0].mxu0
      %v1563 = vadd.f32 %v1247, %v1562
      %v1564 = vpop.f32.mrb[0].mxu0
      %v1565 = vadd.f32 %v1251, %v1564
      %v1566 = vpop.f32.mrb[0].mxu0
      %v1567 = vadd.f32 %v1247, %v1566
      %v1568 = vpop.f32.mrb[0].mxu0
      %v1569 = vadd.f32 %v1251, %v1568
      %1570 = vmatprep.mubr.bf16.mxu0 %v1232
      %1571 = vmatmul.mubr.bf16.gmra.mrb[0].mxu0 %v1231
      %v1572 = vpop.f32.mrb[0].mxu0
      %v1573 = vadd.f32 %v1247, %v1572
      %v1574 = vpop.f32.mrb[0].mxu0
      %v1575 = vadd.f32 %v1251, %v1574
      %v1576 = vpop.f32.mrb[0].mxu0
      %v1577 = vadd.f32 %v1247, %v1576
      %v1578 = vpop.f32.mrb[0].mxu0
      %v1579 = vadd.f32 %v1251, %v1578
      %1580 = vmatprep.mubr.bf16.mxu0 %v1235
      %1581 = vmatmul.mubr.bf16.gmra.mrb[0].mxu0 %v1234
      %v1582 = vpop.f32.mrb[0].mxu0
      %v1583 = vadd.f32 %v1247, %v1582
      %v1584 = vpop.f32.mrb[0].mxu0
      %v1585 = vadd.f32 %v1251, %v1584
      %v1586 = vpop.f32.mrb[0].mxu0
      %v1587 = vadd.f32 %v1247, %v1586
      %v1588 = vpop.f32.mrb[0].mxu0
      %v1589 = vadd.f32 %v1251, %v1588
      %1590 = vmatprep.mubr.bf16.mxu0 %v1238
      %1591 = vmatmul.mubr.bf16.gmra.mrb[0].mxu0 %v1237
      %v1592 = vpop.f32.mrb[0].mxu0
      %v1593 = vadd.f32 %v1247, %v1592
      %v1594 = vpop.f32.mrb[0].mxu0
      %v1595 = vadd.f32 %v1251, %v1594
      %v1596 = vpop.f32.mrb[0].mxu0
      %v1597 = vadd.f32 %v1247, %v1596
      %v1598 = vpop.f32.mrb[0].mxu0
      %v1599 = vadd.f32 %v1251, %v1598
      %1600 = vmatprep.mubr.bf16.mxu0 %v1241
      %1601 = vmatmul.mubr.bf16.gmra.mrb[0].mxu0 %v1240
      %v1602 = vpop.f32.mrb[0].mxu0
      %v1603 = vadd.f32 %v1247, %v1602
      %v1604 = vpop.f32.mrb[0].mxu0
      %v1605 = vadd.f32 %v1251, %v1604
      %v1606 = vpop.f32.mrb[0].mxu0
      %v1607 = vadd.f32 %v1247, %v1606
      %v1608 = vpop.f32.mrb[0].mxu0
      %v1609 = vadd.f32 %v1251, %v1608
      %1610 = vdwg.mxu0
      %1611 = vmatprep.subr.bf16.mxu0 %v1419
      %1612 = vmatpush1.bf16.msra.mxu0 %v1418
      %1613 = vmatprep.subr.bf16.mxu0 %v1421
      %1614 = vmatpush1.bf16.msra.mxu0 %v1420
      %1615 = vmatprep.subr.bf16.mxu0 %v1423
      %1616 = vmatpush1.bf16.msra.mxu0 %v1422
      %1617 = vmatprep.subr.bf16.mxu0 %v1425
      %1618 = vmatpush1.bf16.msra.mxu0 %v1424
      %1619 = vmatprep.subr.bf16.mxu0 %v1427
      %1620 = vmatpush1.bf16.msra.mxu0 %v1426
      %1621 = vmatprep.subr.bf16.mxu0 %v1429
      %1622 = vmatpush1.bf16.msra.mxu0 %v1428
      %1623 = vmatprep.subr.bf16.mxu0 0
      %1624 = vmatpush1.bf16.msra.mxu0 0
      %1625 = vmatprep.subr.bf16.mxu0 0
      %1626 = vmatpush1.bf16.msra.mxu0 0
      %1627 = vmatprep.subr.bf16.mxu0 0
      %1628 = vmatpush1.bf16.msra.mxu0 0
      %1629 = vmatprep.subr.bf16.mxu0 0
      %1630 = vmatpush1.bf16.msra.mxu0 0
      %1631 = vmatprep.subr.bf16.mxu0 0
      %1632 = vmatpush1.bf16.msra.mxu0 0
      %1633 = vmatprep.subr.bf16.mxu0 0
      %1634 = vmatpush1.bf16.msra.mxu0 0
      %1635 = vmatprep.subr.bf16.mxu0 0
      %1636 = vmatpush1.bf16.msra.mxu0 0
      %1637 = vmatprep.subr.bf16.mxu0 0
      %1638 = vmatpush1.bf16.msra.mxu0 0
      %1639 = vmatprep.subr.bf16.mxu0 0
      %1640 = vmatpush1.bf16.msra.mxu0 0
      %1641 = vmatprep.subr.bf16.mxu0 0
      %1642 = vmatpush1.bf16.msra.mxu0 0
      %1643 = vmatprep.mubr.bf16.mxu0 0
      %1644 = vmatmul.mubr.bf16.gmra.mrb[0].mxu0 %v1475
      %v1645 = vpop.f32.mrb[0].mxu0
      %v1646 = vadd.f32 %v1533, %v1645
      %v1647 = vpop.f32.mrb[0].mxu0
      %v1648 = vadd.f32 %v1535, %v1647
      %v1649 = vpop.f32.mrb[0].mxu0
      %v1650 = vadd.f32 %v1537, %v1649
      %v1651 = vpop.f32.mrb[0].mxu0
      %v1652 = vadd.f32 %v1539, %v1651
      %1653 = vmatprep.mubr.bf16.mxu0 0
      %1654 = vmatmul.mubr.bf16.gmra.mrb[0].mxu0 %v1478
      %v1655 = vpop.f32.mrb[0].mxu0
      %v1656 = vadd.f32 %v1543, %v1655
      %v1657 = vpop.f32.mrb[0].mxu0
      %v1658 = vadd.f32 %v1545, %v1657
      %v1659 = vpop.f32.mrb[0].mxu0
      %v1660 = vadd.f32 %v1547, %v1659
      %v1661 = vpop.f32.mrb[0].mxu0
      %v1662 = vadd.f32 %v1549, %v1661
      %1663 = vmatprep.mubr.bf16.mxu0 0
      %1664 = vmatmul.mubr.bf16.gmra.mrb[0].mxu0 %v1481
      %v1665 = vpop.f32.mrb[0].mxu0
      %v1666 = vadd.f32 %v1553, %v1665
      %v1667 = vpop.f32.mrb[0].mxu0
      %v1668 = vadd.f32 %v1555, %v1667
      %v1669 = vpop.f32.mrb[0].mxu0
      %v1670 = vadd.f32 %v1557, %v1669
      %v1671 = vpop.f32.mrb[0].mxu0
      %v1672 = vadd.f32 %v1559, %v1671
      %1673 = vmatprep.mubr.bf16.mxu0 0
      %1674 = vmatmul.mubr.bf16.gmra.mrb[0].mxu0 %v1484
      %v1675 = vpop.f32.mrb[0].mxu0
      %v1676 = vadd.f32 %v1563, %v1675
      %v1677 = vpop.f32.mrb[0].mxu0
      %v1678 = vadd.f32 %v1565, %v1677
      %v1679 = vpop.f32.mrb[0].mxu0
      %v1680 = vadd.f32 %v1567, %v1679
      %v1681 = vpop.f32.mrb[0].mxu0
      %v1682 = vadd.f32 %v1569, %v1681
      %1683 = vmatprep.mubr.bf16.mxu0 0
      %1684 = vmatmul.mubr.bf16.gmra.mrb[0].mxu0 %v1487
      %v1685 = vpop.f32.mrb[0].mxu0
      %v1686 = vadd.f32 %v1573, %v1685
      %v1687 = vpop.f32.mrb[0].mxu0
      %v1688 = vadd.f32 %v1575, %v1687
      %v1689 = vpop.f32.mrb[0].mxu0
      %v1690 = vadd.f32 %v1577, %v1689
      %v1691 = vpop.f32.mrb[0].mxu0
      %v1692 = vadd.f32 %v1579, %v1691
      %1693 = vmatprep.mubr.bf16.mxu0 0
      %1694 = vmatmul.mubr.bf16.gmra.mrb[0].mxu0 %v1490
      %v1695 = vpop.f32.mrb[0].mxu0
      %v1696 = vadd.f32 %v1583, %v1695
      %v1697 = vpop.f32.mrb[0].mxu0
      %v1698 = vadd.f32 %v1585, %v1697
      %v1699 = vpop.f32.mrb[0].mxu0
      %v1700 = vadd.f32 %v1587, %v1699
      %v1701 = vpop.f32.mrb[0].mxu0
      %v1702 = vadd.f32 %v1589, %v1701
      %1703 = vmatprep.mubr.bf16.mxu0 0
      %1704 = vmatmul.mubr.bf16.gmra.mrb[0].mxu0 %v1493
      %v1705 = vpop.f32.mrb[0].mxu0
      %v1706 = vadd.f32 %v1593, %v1705
      %v1707 = vpop.f32.mrb[0].mxu0
      %v1708 = vadd.f32 %v1595, %v1707
      %v1709 = vpop.f32.mrb[0].mxu0
      %v1710 = vadd.f32 %v1597, %v1709
      %v1711 = vpop.f32.mrb[0].mxu0
      %v1712 = vadd.f32 %v1599, %v1711
      %1713 = vmatprep.mubr.bf16.mxu0 0
      %1714 = vmatmul.mubr.bf16.gmra.mrb[0].mxu0 %v1496
      %v1715 = vpop.f32.mrb[0].mxu0
      %v1716 = vadd.f32 %v1603, %v1715
      %v1717 = vpop.f32.mrb[0].mxu0
      %v1718 = vadd.f32 %v1605, %v1717
      %v1719 = vpop.f32.mrb[0].mxu0
      %v1720 = vadd.f32 %v1607, %v1719
      %v1721 = vpop.f32.mrb[0].mxu0
      %v1722 = vadd.f32 %v1609, %v1721
      %1723 = vdwg.mxu0
      %vm1724 = vcmp.ge.f32.partialorder %v1646, 0.0
      %vm1725 = vcmp.ge.f32.partialorder %v1648, 0.0
      %vm1726 = vcmp.ge.f32.partialorder %v1650, 0.0
      %vm1727 = vcmp.ge.f32.partialorder %v1652, 0.0
      %vm1728 = vcmp.ge.f32.partialorder %v1656, 0.0
      %vm1729 = vcmp.ge.f32.partialorder %v1658, 0.0
      %vm1730 = vcmp.ge.f32.partialorder %v1660, 0.0
      %vm1731 = vcmp.ge.f32.partialorder %v1662, 0.0
      %vm1732 = vcmp.ge.f32.partialorder %v1666, 0.0
      %vm1733 = vcmp.ge.f32.partialorder %v1668, 0.0
      %vm1734 = vcmp.ge.f32.partialorder %v1670, 0.0
      %vm1735 = vcmp.ge.f32.partialorder %v1672, 0.0
      %vm1736 = vcmp.ge.f32.partialorder %v1676, 0.0
      %vm1737 = vcmp.ge.f32.partialorder %v1678, 0.0
      %vm1738 = vcmp.ge.f32.partialorder %v1680, 0.0
      %vm1739 = vcmp.ge.f32.partialorder %v1682, 0.0
      %vm1740 = vcmp.ge.f32.partialorder %v1686, 0.0
      %vm1741 = vcmp.ge.f32.partialorder %v1688, 0.0
      %vm1742 = vcmp.ge.f32.partialorder %v1690, 0.0
      %vm1743 = vcmp.ge.f32.partialorder %v1692, 0.0
      %vm1744 = vcmp.ge.f32.partialorder %v1696, 0.0
      %vm1745 = vcmp.ge.f32.partialorder %v1698, 0.0
      %vm1746 = vcmp.ge.f32.partialorder %v1700, 0.0
      %vm1747 = vcmp.ge.f32.partialorder %v1702, 0.0
      %vm1748 = vcmp.ge.f32.partialorder %v1706, 0.0
      %vm1749 = vcmp.ge.f32.partialorder %v1708, 0.0
      %vm1750 = vcmp.ge.f32.partialorder %v1710, 0.0
      %vm1751 = vcmp.ge.f32.partialorder %v1712, 0.0
      %vm1752 = vcmp.ge.f32.partialorder %v1716, 0.0
      %vm1753 = vcmp.ge.f32.partialorder %v1718, 0.0
      %vm1754 = vcmp.ge.f32.partialorder %v1720, 0.0
      %vm1755 = vcmp.ge.f32.partialorder %v1722, 0.0
      %v1756 = vmul.f32 %v1646, 0.01
      %v1757 = vmul.f32 %v1648, 0.01
      %v1758 = vmul.f32 %v1650, 0.01
      %v1759 = vmul.f32 %v1652, 0.01
      %v1760 = vmul.f32 %v1656, 0.01
      %v1761 = vmul.f32 %v1658, 0.01
      %v1762 = vmul.f32 %v1660, 0.01
      %v1763 = vmul.f32 %v1662, 0.01
      %v1764 = vmul.f32 %v1666, 0.01
      %v1765 = vmul.f32 %v1668, 0.01
      %v1766 = vmul.f32 %v1670, 0.01
      %v1767 = vmul.f32 %v1672, 0.01
      %v1768 = vmul.f32 %v1676, 0.01
      %v1769 = vmul.f32 %v1678, 0.01
      %v1770 = vmul.f32 %v1680, 0.01
      %v1771 = vmul.f32 %v1682, 0.01
      %v1772 = vmul.f32 %v1686, 0.01
      %v1773 = vmul.f32 %v1688, 0.01
      %v1774 = vmul.f32 %v1690, 0.01
      %v1775 = vmul.f32 %v1692, 0.01
      %v1776 = vmul.f32 %v1696, 0.01
      %v1777 = vmul.f32 %v1698, 0.01
      %v1778 = vmul.f32 %v1700, 0.01
      %v1779 = vmul.f32 %v1702, 0.01
      %v1780 = vmul.f32 %v1706, 0.01
      %v1781 = vmul.f32 %v1708, 0.01
      %v1782 = vmul.f32 %v1710, 0.01
      %v1783 = vmul.f32 %v1712, 0.01
      %v1784 = vmul.f32 %v1716, 0.01
      %v1785 = vmul.f32 %v1718, 0.01
      %v1786 = vmul.f32 %v1720, 0.01
      %v1787 = vmul.f32 %v1722, 0.01
      %v1788 = vsel %vm1724, %v1646, %v1756
      %v1789 = vsel %vm1725, %v1648, %v1757
      %v1790 = vsel %vm1726, %v1650, %v1758
      %v1791 = vsel %vm1727, %v1652, %v1759
      %v1792 = vsel %vm1728, %v1656, %v1760
      %v1793 = vsel %vm1729, %v1658, %v1761
      %v1794 = vsel %vm1730, %v1660, %v1762
      %v1795 = vsel %vm1731, %v1662, %v1763
      %v1796 = vsel %vm1732, %v1666, %v1764
      %v1797 = vsel %vm1733, %v1668, %v1765
      %v1798 = vsel %vm1734, %v1670, %v1766
      %v1799 = vsel %vm1735, %v1672, %v1767
      %v1800 = vsel %vm1736, %v1676, %v1768
      %v1801 = vsel %vm1737, %v1678, %v1769
      %v1802 = vsel %vm1738, %v1680, %v1770
      %v1803 = vsel %vm1739, %v1682, %v1771
      %v1804 = vsel %vm1740, %v1686, %v1772
      %v1805 = vsel %vm1741, %v1688, %v1773
      %v1806 = vsel %vm1742, %v1690, %v1774
      %v1807 = vsel %vm1743, %v1692, %v1775
      %v1808 = vsel %vm1744, %v1696, %v1776
      %v1809 = vsel %vm1745, %v1698, %v1777
      %v1810 = vsel %vm1746, %v1700, %v1778
      %v1811 = vsel %vm1747, %v1702, %v1779
      %v1812 = vsel %vm1748, %v1706, %v1780
      %v1813 = vsel %vm1749, %v1708, %v1781
      %v1814 = vsel %vm1750, %v1710, %v1782
      %v1815 = vsel %vm1751, %v1712, %v1783
      %v1816 = vsel %vm1752, %v1716, %v1784
      %v1817 = vsel %vm1753, %v1718, %v1785
      %v1818 = vsel %vm1754, %v1720, %v1786
      %v1819 = vsel %vm1755, %v1722, %v1787
      %1836 = vrot.lane.b32.xlu0 %v1788, 96
      %v1837 = vpop.permute.xlu0 %1836
      %1838 = vrot.lane.b32.xlu0 %v1790, 96
      %v1839 = vpop.permute.xlu0 %1838
      %1840 = vrot.lane.b32.xlu0 %v1792, 96
      %v1841 = vpop.permute.xlu0 %1840
      %1842 = vrot.lane.b32.xlu0 %v1794, 96
      %v1843 = vpop.permute.xlu0 %1842
      %1844 = vrot.lane.b32.xlu0 %v1796, 96
      %v1845 = vpop.permute.xlu0 %1844
      %1846 = vrot.lane.b32.xlu0 %v1798, 96
      %v1847 = vpop.permute.xlu0 %1846
      %1848 = vrot.lane.b32.xlu0 %v1800, 96
      %v1849 = vpop.permute.xlu0 %1848
      %1850 = vrot.lane.b32.xlu0 %v1802, 96
      %v1851 = vpop.permute.xlu0 %1850
      %1852 = vrot.lane.b32.xlu0 %v1804, 96
      %v1853 = vpop.permute.xlu0 %1852
      %1854 = vrot.lane.b32.xlu0 %v1806, 96
      %v1855 = vpop.permute.xlu0 %1854
      %1856 = vrot.lane.b32.xlu0 %v1808, 96
      %v1857 = vpop.permute.xlu0 %1856
      %1858 = vrot.lane.b32.xlu0 %v1810, 96
      %v1859 = vpop.permute.xlu0 %1858
      %1860 = vrot.lane.b32.xlu0 %v1812, 96
      %v1861 = vpop.permute.xlu0 %1860
      %1862 = vrot.lane.b32.xlu0 %v1814, 96
      %v1863 = vpop.permute.xlu0 %1862
      %1864 = vrot.lane.b32.xlu0 %v1816, 96
      %v1865 = vpop.permute.xlu0 %1864
      %1866 = vrot.lane.b32.xlu0 %v1818, 96
      %v1867 = vpop.permute.xlu0 %1866
      %v1884 = vadd.f32 %v1788, %v1837
      %v1885 = vadd.f32 %v1790, %v1839
      %v1886 = vadd.f32 %v1792, %v1841
      %v1887 = vadd.f32 %v1794, %v1843
      %v1888 = vadd.f32 %v1796, %v1845
      %v1889 = vadd.f32 %v1798, %v1847
      %v1890 = vadd.f32 %v1800, %v1849
      %v1891 = vadd.f32 %v1802, %v1851
      %v1892 = vadd.f32 %v1804, %v1853
      %v1893 = vadd.f32 %v1806, %v1855
      %v1894 = vadd.f32 %v1808, %v1857
      %v1895 = vadd.f32 %v1810, %v1859
      %v1896 = vadd.f32 %v1812, %v1861
      %v1897 = vadd.f32 %v1814, %v1863
      %v1898 = vadd.f32 %v1816, %v1865
      %v1899 = vadd.f32 %v1818, %v1867
      %1900 = vrot.lane.b32.xlu0 %v1788, 64
      %v1901 = vpop.permute.xlu0 %1900
      %1902 = vrot.lane.b32.xlu0 %v1790, 64
      %v1903 = vpop.permute.xlu0 %1902
      %1904 = vrot.lane.b32.xlu0 %v1792, 64
      %v1905 = vpop.permute.xlu0 %1904
      %1906 = vrot.lane.b32.xlu0 %v1794, 64
      %v1907 = vpop.permute.xlu0 %1906
      %1908 = vrot.lane.b32.xlu0 %v1796, 64
      %v1909 = vpop.permute.xlu0 %1908
      %1910 = vrot.lane.b32.xlu0 %v1798, 64
      %v1911 = vpop.permute.xlu0 %1910
      %1912 = vrot.lane.b32.xlu0 %v1800, 64
      %v1913 = vpop.permute.xlu0 %1912
      %1914 = vrot.lane.b32.xlu0 %v1802, 64
      %v1915 = vpop.permute.xlu0 %1914
      %1916 = vrot.lane.b32.xlu0 %v1804, 64
      %v1917 = vpop.permute.xlu0 %1916
      %1918 = vrot.lane.b32.xlu0 %v1806, 64
      %v1919 = vpop.permute.xlu0 %1918
      %1920 = vrot.lane.b32.xlu0 %v1808, 64
      %v1921 = vpop.permute.xlu0 %1920
      %1922 = vrot.lane.b32.xlu0 %v1810, 64
      %v1923 = vpop.permute.xlu0 %1922
      %1924 = vrot.lane.b32.xlu0 %v1812, 64
      %v1925 = vpop.permute.xlu0 %1924
      %1926 = vrot.lane.b32.xlu0 %v1814, 64
      %v1927 = vpop.permute.xlu0 %1926
      %1928 = vrot.lane.b32.xlu0 %v1816, 64
      %v1929 = vpop.permute.xlu0 %1928
      %1930 = vrot.lane.b32.xlu0 %v1818, 64
      %v1931 = vpop.permute.xlu0 %1930
      %v1948 = vadd.f32 %v1884, %v1901
      %v1949 = vadd.f32 %v1885, %v1903
      %v1950 = vadd.f32 %v1886, %v1905
      %v1951 = vadd.f32 %v1887, %v1907
      %v1952 = vadd.f32 %v1888, %v1909
      %v1953 = vadd.f32 %v1889, %v1911
      %v1954 = vadd.f32 %v1890, %v1913
      %v1955 = vadd.f32 %v1891, %v1915
      %v1956 = vadd.f32 %v1892, %v1917
      %v1957 = vadd.f32 %v1893, %v1919
      %v1958 = vadd.f32 %v1894, %v1921
      %v1959 = vadd.f32 %v1895, %v1923
      %v1960 = vadd.f32 %v1896, %v1925
      %v1961 = vadd.f32 %v1897, %v1927
      %v1962 = vadd.f32 %v1898, %v1929
      %v1963 = vadd.f32 %v1899, %v1931
      %1964 = vrot.lane.b32.xlu0 %v1788, 32
      %v1965 = vpop.permute.xlu0 %1964
      %1966 = vrot.lane.b32.xlu0 %v1790, 32
      %v1967 = vpop.permute.xlu0 %1966
      %1968 = vrot.lane.b32.xlu0 %v1792, 32
      %v1969 = vpop.permute.xlu0 %1968
      %1970 = vrot.lane.b32.xlu0 %v1794, 32
      %v1971 = vpop.permute.xlu0 %1970
      %1972 = vrot.lane.b32.xlu0 %v1796, 32
      %v1973 = vpop.permute.xlu0 %1972
      %1974 = vrot.lane.b32.xlu0 %v1798, 32
      %v1975 = vpop.permute.xlu0 %1974
      %1976 = vrot.lane.b32.xlu0 %v1800, 32
      %v1977 = vpop.permute.xlu0 %1976
      %1978 = vrot.lane.b32.xlu0 %v1802, 32
      %v1979 = vpop.permute.xlu0 %1978
      %1980 = vrot.lane.b32.xlu0 %v1804, 32
      %v1981 = vpop.permute.xlu0 %1980
      %1982 = vrot.lane.b32.xlu0 %v1806, 32
      %v1983 = vpop.permute.xlu0 %1982
      %1984 = vrot.lane.b32.xlu0 %v1808, 32
      %v1985 = vpop.permute.xlu0 %1984
      %1986 = vrot.lane.b32.xlu0 %v1810, 32
      %v1987 = vpop.permute.xlu0 %1986
      %1988 = vrot.lane.b32.xlu0 %v1812, 32
      %v1989 = vpop.permute.xlu0 %1988
      %1990 = vrot.lane.b32.xlu0 %v1814, 32
      %v1991 = vpop.permute.xlu0 %1990
      %1992 = vrot.lane.b32.xlu0 %v1816, 32
      %v1993 = vpop.permute.xlu0 %1992
      %1994 = vrot.lane.b32.xlu0 %v1818, 32
      %v1995 = vpop.permute.xlu0 %1994
      %v2012 = vadd.f32 %v1948, %v1965
      %v2013 = vadd.f32 %v1949, %v1967
      %v2014 = vadd.f32 %v1950, %v1969
      %v2015 = vadd.f32 %v1951, %v1971
      %v2016 = vadd.f32 %v1952, %v1973
      %v2017 = vadd.f32 %v1953, %v1975
      %v2018 = vadd.f32 %v1954, %v1977
      %v2019 = vadd.f32 %v1955, %v1979
      %v2020 = vadd.f32 %v1956, %v1981
      %v2021 = vadd.f32 %v1957, %v1983
      %v2022 = vadd.f32 %v1958, %v1985
      %v2023 = vadd.f32 %v1959, %v1987
      %v2024 = vadd.f32 %v1960, %v1989
      %v2025 = vadd.f32 %v1961, %v1991
      %v2026 = vadd.f32 %v1962, %v1993
      %v2027 = vadd.f32 %v1963, %v1995
      %v2028 = vadd.f32 %v2012, %v1789
      %v2029 = vadd.f32 %v2013, %v1791
      %v2030 = vadd.f32 %v2014, %v1793
      %v2031 = vadd.f32 %v2015, %v1795
      %v2032 = vadd.f32 %v2016, %v1797
      %v2033 = vadd.f32 %v2017, %v1799
      %v2034 = vadd.f32 %v2018, %v1801
      %v2035 = vadd.f32 %v2019, %v1803
      %v2036 = vadd.f32 %v2020, %v1805
      %v2037 = vadd.f32 %v2021, %v1807
      %v2038 = vadd.f32 %v2022, %v1809
      %v2039 = vadd.f32 %v2023, %v1811
      %v2040 = vadd.f32 %v2024, %v1813
      %v2041 = vadd.f32 %v2025, %v1815
      %v2042 = vadd.f32 %v2026, %v1817
      %v2043 = vadd.f32 %v2027, %v1819
      %v2044 = vpack.c.bf16 %v2029, %v2028
      %v2045 = vpack.c.bf16 %v2031, %v2030
      %v2046 = vpack.c.bf16 %v2033, %v2032
      %v2047 = vpack.c.bf16 %v2035, %v2034
      %v2048 = vpack.c.bf16 %v2037, %v2036
      %v2049 = vpack.c.bf16 %v2039, %v2038
      %v2050 = vpack.c.bf16 %v2041, %v2040
      %v2051 = vpack.c.bf16 %v2043, %v2042
      %v2052 = vld [vmem:[%s2] sm:$0xf]
      %v2053 = vld [vmem:[%s2 + $0x4] sm:$0xf]
      %v2054 = vld [vmem:[%s2 + $0x8] sm:$0xf]
      %v2055 = vld [vmem:[%s2 + $0xc] sm:$0xf]
      %v2060 = vunpack.c.l.b16 %v2052
      %v2061 = vunpack.c.l.b16 %v2053
      %v2062 = vunpack.c.l.b16 %v2054
      %v2063 = vunpack.c.l.b16 %v2055
      %v2064 = vpack.c.b16 %v2061, %v2060
      %v2065 = vpack.c.b16 %v2063, %v2062
      %v2069 = vsel %vm1104, %v2044, 0
      %v2072 = vsel %vm1104, %v2045, 0
      %v2075 = vsel %vm1104, %v2046, 0
      %v2078 = vsel %vm1104, %v2047, 0
      %v2081 = vsel %vm1104, %v2048, 0
      %v2084 = vsel %vm1104, %v2049, 0
      %v2087 = vsel %vm1104, %v2050, 0
      %v2090 = vsel %vm1104, %v2051, 0
      %2092 = vmatprep.subr.bf16.mxu0 0
      %2093 = vmatpush1.bf16.msra.mxu0 %v2064
      %2094 = vmatprep.subr.bf16.mxu0 0
      %2095 = vmatpush1.bf16.msra.mxu0 %v2065
      %2096 = vmatprep.subr.bf16.mxu0 0
      %2097 = vmatpush1.bf16.msra.mxu0 0
      %2098 = vmatprep.subr.bf16.mxu0 0
      %2099 = vmatpush1.bf16.msra.mxu0 0
      %2100 = vmatprep.subr.bf16.mxu0 0
      %2101 = vmatpush1.bf16.msra.mxu0 0
      %2102 = vmatprep.subr.bf16.mxu0 0
      %2103 = vmatpush1.bf16.msra.mxu0 0
      %2104 = vmatprep.subr.bf16.mxu0 0
      %2105 = vmatpush1.bf16.msra.mxu0 0
      %2106 = vmatprep.subr.bf16.mxu0 0
      %2107 = vmatpush1.bf16.msra.mxu0 0
      %2108 = vmatprep.subr.bf16.mxu0 0
      %2109 = vmatpush1.bf16.msra.mxu0 0
      %2110 = vmatprep.subr.bf16.mxu0 0
      %2111 = vmatpush1.bf16.msra.mxu0 0
      %2112 = vmatprep.subr.bf16.mxu0 0
      %2113 = vmatpush1.bf16.msra.mxu0 0
      %2114 = vmatprep.subr.bf16.mxu0 0
      %2115 = vmatpush1.bf16.msra.mxu0 0
      %2116 = vmatprep.subr.bf16.mxu0 0
      %2117 = vmatpush1.bf16.msra.mxu0 0
      %2118 = vmatprep.subr.bf16.mxu0 0
      %2119 = vmatpush1.bf16.msra.mxu0 0
      %2120 = vmatprep.subr.bf16.mxu0 0
      %2121 = vmatpush1.bf16.msra.mxu0 0
      %2122 = vmatprep.subr.bf16.mxu0 0
      %2123 = vmatpush1.bf16.msra.mxu0 0
      %2124 = vmatprep.mubr.bf16.mxu0 0
      %2125 = vmatmul.mubr.bf16.gmra.mrb[0].mxu0 %v2069
      %v2126 = vpop.f32.mrb[0].mxu0
      %v2127 = vadd.f32 %v301, %v2126
      %v2128 = vpop.f32.mrb[0].mxu0
      %v2129 = vpop.f32.mrb[0].mxu0
      %v2130 = vadd.f32 %v301, %v2129
      %v2131 = vpop.f32.mrb[0].mxu0
      %2132 = vmatprep.mubr.bf16.mxu0 0
      %2133 = vmatmul.mubr.bf16.gmra.mrb[0].mxu0 %v2072
      %v2134 = vpop.f32.mrb[0].mxu0
      %v2135 = vadd.f32 %v301, %v2134
      %v2136 = vpop.f32.mrb[0].mxu0
      %v2137 = vpop.f32.mrb[0].mxu0
      %v2138 = vadd.f32 %v301, %v2137
      %v2139 = vpop.f32.mrb[0].mxu0
      %2140 = vmatprep.mubr.bf16.mxu0 0
      %2141 = vmatmul.mubr.bf16.gmra.mrb[0].mxu0 %v2075
      %v2142 = vpop.f32.mrb[0].mxu0
      %v2143 = vadd.f32 %v301, %v2142
      %v2144 = vpop.f32.mrb[0].mxu0
      %v2145 = vpop.f32.mrb[0].mxu0
      %v2146 = vadd.f32 %v301, %v2145
      %v2147 = vpop.f32.mrb[0].mxu0
      %2148 = vmatprep.mubr.bf16.mxu0 0
      %2149 = vmatmul.mubr.bf16.gmra.mrb[0].mxu0 %v2078
      %v2150 = vpop.f32.mrb[0].mxu0
      %v2151 = vadd.f32 %v301, %v2150
      %v2152 = vpop.f32.mrb[0].mxu0
      %v2153 = vpop.f32.mrb[0].mxu0
      %v2154 = vadd.f32 %v301, %v2153
      %v2155 = vpop.f32.mrb[0].mxu0
      %2156 = vmatprep.mubr.bf16.mxu0 0
      %2157 = vmatmul.mubr.bf16.gmra.mrb[0].mxu0 %v2081
      %v2158 = vpop.f32.mrb[0].mxu0
      %v2159 = vadd.f32 %v301, %v2158
      %v2160 = vpop.f32.mrb[0].mxu0
      %v2161 = vpop.f32.mrb[0].mxu0
      %v2162 = vadd.f32 %v301, %v2161
      %v2163 = vpop.f32.mrb[0].mxu0
      %2164 = vmatprep.mubr.bf16.mxu0 0
      %2165 = vmatmul.mubr.bf16.gmra.mrb[0].mxu0 %v2084
      %v2166 = vpop.f32.mrb[0].mxu0
      %v2167 = vadd.f32 %v301, %v2166
      %v2168 = vpop.f32.mrb[0].mxu0
      %v2169 = vpop.f32.mrb[0].mxu0
      %v2170 = vadd.f32 %v301, %v2169
      %v2171 = vpop.f32.mrb[0].mxu0
      %2172 = vmatprep.mubr.bf16.mxu0 0
      %2173 = vmatmul.mubr.bf16.gmra.mrb[0].mxu0 %v2087
      %v2174 = vpop.f32.mrb[0].mxu0
      %v2175 = vadd.f32 %v301, %v2174
      %v2176 = vpop.f32.mrb[0].mxu0
      %v2177 = vpop.f32.mrb[0].mxu0
      %v2178 = vadd.f32 %v301, %v2177
      %v2179 = vpop.f32.mrb[0].mxu0
      %2180 = vmatprep.mubr.bf16.mxu0 0
      %2181 = vmatmul.mubr.bf16.gmra.mrb[0].mxu0 %v2090
      %v2182 = vpop.f32.mrb[0].mxu0
      %v2183 = vadd.f32 %v301, %v2182
      %v2184 = vpop.f32.mrb[0].mxu0
      %v2185 = vpop.f32.mrb[0].mxu0
      %v2186 = vadd.f32 %v301, %v2185
      %v2187 = vpop.f32.mrb[0].mxu0
      %2188 = vdwg.mxu0
      %vm2189 = vcmp.ge.f32.partialorder %v2127, 0.0
      %vm2190 = vcmp.ge.f32.partialorder %v2130, 0.0
      %vm2191 = vcmp.ge.f32.partialorder %v2135, 0.0
      %vm2192 = vcmp.ge.f32.partialorder %v2138, 0.0
      %vm2193 = vcmp.ge.f32.partialorder %v2143, 0.0
      %vm2194 = vcmp.ge.f32.partialorder %v2146, 0.0
      %vm2195 = vcmp.ge.f32.partialorder %v2151, 0.0
      %vm2196 = vcmp.ge.f32.partialorder %v2154, 0.0
      %vm2197 = vcmp.ge.f32.partialorder %v2159, 0.0
      %vm2198 = vcmp.ge.f32.partialorder %v2162, 0.0
      %vm2199 = vcmp.ge.f32.partialorder %v2167, 0.0
      %vm2200 = vcmp.ge.f32.partialorder %v2170, 0.0
      %vm2201 = vcmp.ge.f32.partialorder %v2175, 0.0
      %vm2202 = vcmp.ge.f32.partialorder %v2178, 0.0
      %vm2203 = vcmp.ge.f32.partialorder %v2183, 0.0
      %vm2204 = vcmp.ge.f32.partialorder %v2186, 0.0
      %v2205 = vmul.f32 %v2127, 0.01
      %v2206 = vmul.f32 %v2130, 0.01
      %v2207 = vmul.f32 %v2135, 0.01
      %v2208 = vmul.f32 %v2138, 0.01
      %v2209 = vmul.f32 %v2143, 0.01
      %v2210 = vmul.f32 %v2146, 0.01
      %v2211 = vmul.f32 %v2151, 0.01
      %v2212 = vmul.f32 %v2154, 0.01
      %v2213 = vmul.f32 %v2159, 0.01
      %v2214 = vmul.f32 %v2162, 0.01
      %v2215 = vmul.f32 %v2167, 0.01
      %v2216 = vmul.f32 %v2170, 0.01
      %v2217 = vmul.f32 %v2175, 0.01
      %v2218 = vmul.f32 %v2178, 0.01
      %v2219 = vmul.f32 %v2183, 0.01
      %v2220 = vmul.f32 %v2186, 0.01
      %v2221 = vsel %vm2189, %v2127, %v2205
      %v2222 = vsel %vm2190, %v2130, %v2206
      %v2223 = vsel %vm2191, %v2135, %v2207
      %v2224 = vsel %vm2192, %v2138, %v2208
      %v2225 = vsel %vm2193, %v2143, %v2209
      %v2226 = vsel %vm2194, %v2146, %v2210
      %v2227 = vsel %vm2195, %v2151, %v2211
      %v2228 = vsel %vm2196, %v2154, %v2212
      %v2229 = vsel %vm2197, %v2159, %v2213
      %v2230 = vsel %vm2198, %v2162, %v2214
      %v2231 = vsel %vm2199, %v2167, %v2215
      %v2232 = vsel %vm2200, %v2170, %v2216
      %v2233 = vsel %vm2201, %v2175, %v2217
      %v2234 = vsel %vm2202, %v2178, %v2218
      %v2235 = vsel %vm2203, %v2183, %v2219
      %v2236 = vsel %vm2204, %v2186, %v2220
      %v2237 = vpack.c.bf16 %v2222, %v2221
      %v2238 = vpack.c.bf16 %v2224, %v2223
      %v2239 = vpack.c.bf16 %v2226, %v2225
      %v2240 = vpack.c.bf16 %v2228, %v2227
      %v2241 = vpack.c.bf16 %v2230, %v2229
      %v2242 = vpack.c.bf16 %v2232, %v2231
      %v2243 = vpack.c.bf16 %v2234, %v2233
      %v2244 = vpack.c.bf16 %v2236, %v2235
      %v2245 = vld [vmem:[%s3] sm:$0xf]
      %v2246 = vld [vmem:[%s3 + $0x4] sm:$0xf]
      %v2247 = vld [vmem:[%s3 + $0x8] sm:$0xf]
      %v2248 = vld [vmem:[%s3 + $0xc] sm:$0xf]
      %v2249 = vld [vmem:[%s3 + $0x10] sm:$0xf]
      %v2250 = vld [vmem:[%s3 + $0x14] sm:$0xf]
      %v2251 = vld [vmem:[%s3 + $0x18] sm:$0xf]
      %v2252 = vld [vmem:[%s3 + $0x1c] sm:$0xf]
      %v2261 = vunpack.c.l.b16 %v2245
      %v2262 = vunpack.c.l.b16 %v2246
      %v2263 = vunpack.c.l.b16 %v2247
      %v2264 = vunpack.c.l.b16 %v2248
      %v2265 = vunpack.c.l.b16 %v2249
      %v2266 = vunpack.c.l.b16 %v2250
      %v2267 = vunpack.c.l.b16 %v2251
      %v2268 = vunpack.c.l.b16 %v2252
      %v2269 = vpack.c.b16 %v2262, %v2261
      %v2270 = vpack.c.b16 %v2264, %v2263
      %v2271 = vpack.c.b16 %v2266, %v2265
      %v2272 = vpack.c.b16 %v2268, %v2267
      %v2278 = vsel %vm1121, %v2237, 0
      %v2281 = vsel %vm1121, %v2238, 0
      %v2284 = vsel %vm1121, %v2239, 0
      %v2287 = vsel %vm1121, %v2240, 0
      %v2290 = vsel %vm1121, %v2241, 0
      %v2293 = vsel %vm1121, %v2242, 0
      %v2296 = vsel %vm1121, %v2243, 0
      %v2299 = vsel %vm1121, %v2244, 0
      %2301 = vmatprep.subr.bf16.mxu0 0
      %2302 = vmatpush1.bf16.msra.mxu0 %v2269
      %2303 = vmatprep.subr.bf16.mxu0 0
      %2304 = vmatpush1.bf16.msra.mxu0 %v2270
      %2305 = vmatprep.subr.bf16.mxu0 0
      %2306 = vmatpush1.bf16.msra.mxu0 %v2271
      %2307 = vmatprep.subr.bf16.mxu0 0
      %2308 = vmatpush1.bf16.msra.mxu0 %v2272
      %2309 = vmatprep.subr.bf16.mxu0 0
      %2310 = vmatpush1.bf16.msra.mxu0 0
      %2311 = vmatprep.subr.bf16.mxu0 0
      %2312 = vmatpush1.bf16.msra.mxu0 0
      %2313 = vmatprep.subr.bf16.mxu0 0
      %2314 = vmatpush1.bf16.msra.mxu0 0
      %2315 = vmatprep.subr.bf16.mxu0 0
      %2316 = vmatpush1.bf16.msra.mxu0 0
      %2317 = vmatprep.subr.bf16.mxu0 0
      %2318 = vmatpush1.bf16.msra.mxu0 0
      %2319 = vmatprep.subr.bf16.mxu0 0
      %2320 = vmatpush1.bf16.msra.mxu0 0
      %2321 = vmatprep.subr.bf16.mxu0 0
      %2322 = vmatpush1.bf16.msra.mxu0 0
      %2323 = vmatprep.subr.bf16.mxu0 0
      %2324 = vmatpush1.bf16.msra.mxu0 0
      %2325 = vmatprep.subr.bf16.mxu0 0
      %2326 = vmatpush1.bf16.msra.mxu0 0
      %2327 = vmatprep.subr.bf16.mxu0 0
      %2328 = vmatpush1.bf16.msra.mxu0 0
      %2329 = vmatprep.subr.bf16.mxu0 0
      %2330 = vmatpush1.bf16.msra.mxu0 0
      %2331 = vmatprep.subr.bf16.mxu0 0
      %2332 = vmatpush1.bf16.msra.mxu0 0
      %2333 = vmatprep.mubr.bf16.mxu0 0
      %2334 = vmatmul.mubr.bf16.gmra.mrb[0].mxu0 %v2278
      %v2335 = vpop.f32.mrb[0].mxu0
      %v2336 = vadd.f32 %v302, %v2335
      %v2337 = vpop.f32.mrb[0].mxu0
      %v2338 = vpop.f32.mrb[0].mxu0
      %v2339 = vadd.f32 %v302, %v2338
      %v2340 = vpop.f32.mrb[0].mxu0
      %2341 = vmatprep.mubr.bf16.mxu0 0
      %2342 = vmatmul.mubr.bf16.gmra.mrb[0].mxu0 %v2281
      %v2343 = vpop.f32.mrb[0].mxu0
      %v2344 = vadd.f32 %v302, %v2343
      %v2345 = vpop.f32.mrb[0].mxu0
      %v2346 = vpop.f32.mrb[0].mxu0
      %v2347 = vadd.f32 %v302, %v2346
      %v2348 = vpop.f32.mrb[0].mxu0
      %2349 = vmatprep.mubr.bf16.mxu0 0
      %2350 = vmatmul.mubr.bf16.gmra.mrb[0].mxu0 %v2284
      %v2351 = vpop.f32.mrb[0].mxu0
      %v2352 = vadd.f32 %v302, %v2351
      %v2353 = vpop.f32.mrb[0].mxu0
      %v2354 = vpop.f32.mrb[0].mxu0
      %v2355 = vadd.f32 %v302, %v2354
      %v2356 = vpop.f32.mrb[0].mxu0
      %2357 = vmatprep.mubr.bf16.mxu0 0
      %2358 = vmatmul.mubr.bf16.gmra.mrb[0].mxu0 %v2287
      %v2359 = vpop.f32.mrb[0].mxu0
      %v2360 = vadd.f32 %v302, %v2359
      %v2361 = vpop.f32.mrb[0].mxu0
      %v2362 = vpop.f32.mrb[0].mxu0
      %v2363 = vadd.f32 %v302, %v2362
      %v2364 = vpop.f32.mrb[0].mxu0
      %2365 = vmatprep.mubr.bf16.mxu0 0
      %2366 = vmatmul.mubr.bf16.gmra.mrb[0].mxu0 %v2290
      %v2367 = vpop.f32.mrb[0].mxu0
      %v2368 = vadd.f32 %v302, %v2367
      %v2369 = vpop.f32.mrb[0].mxu0
      %v2370 = vpop.f32.mrb[0].mxu0
      %v2371 = vadd.f32 %v302, %v2370
      %v2372 = vpop.f32.mrb[0].mxu0
      %2373 = vmatprep.mubr.bf16.mxu0 0
      %2374 = vmatmul.mubr.bf16.gmra.mrb[0].mxu0 %v2293
      %v2375 = vpop.f32.mrb[0].mxu0
      %v2376 = vadd.f32 %v302, %v2375
      %v2377 = vpop.f32.mrb[0].mxu0
      %v2378 = vpop.f32.mrb[0].mxu0
      %v2379 = vadd.f32 %v302, %v2378
      %v2380 = vpop.f32.mrb[0].mxu0
      %2381 = vmatprep.mubr.bf16.mxu0 0
      %2382 = vmatmul.mubr.bf16.gmra.mrb[0].mxu0 %v2296
      %v2383 = vpop.f32.mrb[0].mxu0
      %v2384 = vadd.f32 %v302, %v2383
      %v2385 = vpop.f32.mrb[0].mxu0
      %v2386 = vpop.f32.mrb[0].mxu0
      %v2387 = vadd.f32 %v302, %v2386
      %v2388 = vpop.f32.mrb[0].mxu0
      %2389 = vmatprep.mubr.bf16.mxu0 0
      %2390 = vmatmul.mubr.bf16.gmra.mrb[0].mxu0 %v2299
      %v2391 = vpop.f32.mrb[0].mxu0
      %v2392 = vadd.f32 %v302, %v2391
      %v2393 = vpop.f32.mrb[0].mxu0
      %v2394 = vpop.f32.mrb[0].mxu0
      %v2395 = vadd.f32 %v302, %v2394
      %v2396 = vpop.f32.mrb[0].mxu0
      %2397 = vdwg.mxu0
      %vm2398 = vcmp.ge.f32.partialorder %v2336, 0.0
      %vm2399 = vcmp.ge.f32.partialorder %v2339, 0.0
      %vm2400 = vcmp.ge.f32.partialorder %v2344, 0.0
      %vm2401 = vcmp.ge.f32.partialorder %v2347, 0.0
      %vm2402 = vcmp.ge.f32.partialorder %v2352, 0.0
      %vm2403 = vcmp.ge.f32.partialorder %v2355, 0.0
      %vm2404 = vcmp.ge.f32.partialorder %v2360, 0.0
      %vm2405 = vcmp.ge.f32.partialorder %v2363, 0.0
      %vm2406 = vcmp.ge.f32.partialorder %v2368, 0.0
      %vm2407 = vcmp.ge.f32.partialorder %v2371, 0.0
      %vm2408 = vcmp.ge.f32.partialorder %v2376, 0.0
      %vm2409 = vcmp.ge.f32.partialorder %v2379, 0.0
      %vm2410 = vcmp.ge.f32.partialorder %v2384, 0.0
      %vm2411 = vcmp.ge.f32.partialorder %v2387, 0.0
      %vm2412 = vcmp.ge.f32.partialorder %v2392, 0.0
      %vm2413 = vcmp.ge.f32.partialorder %v2395, 0.0
      %v2414 = vmul.f32 %v2336, 0.01
      %v2415 = vmul.f32 %v2339, 0.01
      %v2416 = vmul.f32 %v2344, 0.01
      %v2417 = vmul.f32 %v2347, 0.01
      %v2418 = vmul.f32 %v2352, 0.01
      %v2419 = vmul.f32 %v2355, 0.01
      %v2420 = vmul.f32 %v2360, 0.01
      %v2421 = vmul.f32 %v2363, 0.01
      %v2422 = vmul.f32 %v2368, 0.01
      %v2423 = vmul.f32 %v2371, 0.01
      %v2424 = vmul.f32 %v2376, 0.01
      %v2425 = vmul.f32 %v2379, 0.01
      %v2426 = vmul.f32 %v2384, 0.01
      %v2427 = vmul.f32 %v2387, 0.01
      %v2428 = vmul.f32 %v2392, 0.01
      %v2429 = vmul.f32 %v2395, 0.01
      %v2430 = vsel %vm2398, %v2336, %v2414
      %v2431 = vsel %vm2399, %v2339, %v2415
      %v2432 = vsel %vm2400, %v2344, %v2416
      %v2433 = vsel %vm2401, %v2347, %v2417
      %v2434 = vsel %vm2402, %v2352, %v2418
      %v2435 = vsel %vm2403, %v2355, %v2419
      %v2436 = vsel %vm2404, %v2360, %v2420
      %v2437 = vsel %vm2405, %v2363, %v2421
      %v2438 = vsel %vm2406, %v2368, %v2422
      %v2439 = vsel %vm2407, %v2371, %v2423
      %v2440 = vsel %vm2408, %v2376, %v2424
      %v2441 = vsel %vm2409, %v2379, %v2425
      %v2442 = vsel %vm2410, %v2384, %v2426
      %v2443 = vsel %vm2411, %v2387, %v2427
      %v2444 = vsel %vm2412, %v2392, %v2428
      %v2445 = vsel %vm2413, %v2395, %v2429
      %v2446 = vpack.c.bf16 %v2431, %v2430
      %v2447 = vpack.c.bf16 %v2433, %v2432
      %v2448 = vpack.c.bf16 %v2435, %v2434
      %v2449 = vpack.c.bf16 %v2437, %v2436
      %v2450 = vpack.c.bf16 %v2439, %v2438
      %v2451 = vpack.c.bf16 %v2441, %v2440
      %v2452 = vpack.c.bf16 %v2443, %v2442
      %v2453 = vpack.c.bf16 %v2445, %v2444
      %v2454 = vld [vmem:[%s4] sm:$0xf]
      %v2455 = vld [vmem:[%s4 + $0x4] sm:$0xf]
      %v2456 = vld [vmem:[%s4 + $0x8] sm:$0xf]
      %v2457 = vld [vmem:[%s4 + $0xc] sm:$0xf]
      %v2462 = vunpack.c.l.b16 %v2454
      %v2463 = vunpack.c.l.b16 %v2455
      %v2464 = vunpack.c.l.b16 %v2456
      %v2465 = vunpack.c.l.b16 %v2457
      %v2466 = vpack.c.b16 %v2463, %v2462
      %v2467 = vpack.c.b16 %v2465, %v2464
      %v2471 = vsel %vm1104, %v2446, 0
      %v2474 = vsel %vm1104, %v2447, 0
      %v2477 = vsel %vm1104, %v2448, 0
      %v2480 = vsel %vm1104, %v2449, 0
      %v2483 = vsel %vm1104, %v2450, 0
      %v2486 = vsel %vm1104, %v2451, 0
      %v2489 = vsel %vm1104, %v2452, 0
      %v2492 = vsel %vm1104, %v2453, 0
      %2494 = vmatprep.subr.bf16.mxu0 0
      %2495 = vmatpush1.bf16.msra.mxu0 %v2466
      %2496 = vmatprep.subr.bf16.mxu0 0
      %2497 = vmatpush1.bf16.msra.mxu0 %v2467
      %2498 = vmatprep.subr.bf16.mxu0 0
      %2499 = vmatpush1.bf16.msra.mxu0 0
      %2500 = vmatprep.subr.bf16.mxu0 0
      %2501 = vmatpush1.bf16.msra.mxu0 0
      %2502 = vmatprep.subr.bf16.mxu0 0
      %2503 = vmatpush1.bf16.msra.mxu0 0
      %2504 = vmatprep.subr.bf16.mxu0 0
      %2505 = vmatpush1.bf16.msra.mxu0 0
      %2506 = vmatprep.subr.bf16.mxu0 0
      %2507 = vmatpush1.bf16.msra.mxu0 0
      %2508 = vmatprep.subr.bf16.mxu0 0
      %2509 = vmatpush1.bf16.msra.mxu0 0
      %2510 = vmatprep.subr.bf16.mxu0 0
      %2511 = vmatpush1.bf16.msra.mxu0 0
      %2512 = vmatprep.subr.bf16.mxu0 0
      %2513 = vmatpush1.bf16.msra.mxu0 0
      %2514 = vmatprep.subr.bf16.mxu0 0
      %2515 = vmatpush1.bf16.msra.mxu0 0
      %2516 = vmatprep.subr.bf16.mxu0 0
      %2517 = vmatpush1.bf16.msra.mxu0 0
      %2518 = vmatprep.subr.bf16.mxu0 0
      %2519 = vmatpush1.bf16.msra.mxu0 0
      %2520 = vmatprep.subr.bf16.mxu0 0
      %2521 = vmatpush1.bf16.msra.mxu0 0
      %2522 = vmatprep.subr.bf16.mxu0 0
      %2523 = vmatpush1.bf16.msra.mxu0 0
      %2524 = vmatprep.subr.bf16.mxu0 0
      %2525 = vmatpush1.bf16.msra.mxu0 0
      %2526 = vmatprep.mubr.bf16.mxu0 0
      %2527 = vmatmul.mubr.bf16.gmra.mrb[0].mxu0 %v2471
      %v2528 = vpop.f32.mrb[0].mxu0
      %v2529 = vadd.f32 %v303, %v2528
      %v2530 = vpop.f32.mrb[0].mxu0
      %v2531 = vpop.f32.mrb[0].mxu0
      %v2532 = vadd.f32 %v303, %v2531
      %v2533 = vpop.f32.mrb[0].mxu0
      %2534 = vmatprep.mubr.bf16.mxu0 0
      %2535 = vmatmul.mubr.bf16.gmra.mrb[0].mxu0 %v2474
      %v2536 = vpop.f32.mrb[0].mxu0
      %v2537 = vadd.f32 %v303, %v2536
      %v2538 = vpop.f32.mrb[0].mxu0
      %v2539 = vpop.f32.mrb[0].mxu0
      %v2540 = vadd.f32 %v303, %v2539
      %v2541 = vpop.f32.mrb[0].mxu0
      %2542 = vmatprep.mubr.bf16.mxu0 0
      %2543 = vmatmul.mubr.bf16.gmra.mrb[0].mxu0 %v2477
      %v2544 = vpop.f32.mrb[0].mxu0
      %v2545 = vadd.f32 %v303, %v2544
      %v2546 = vpop.f32.mrb[0].mxu0
      %v2547 = vpop.f32.mrb[0].mxu0
      %v2548 = vadd.f32 %v303, %v2547
      %v2549 = vpop.f32.mrb[0].mxu0
      %2550 = vmatprep.mubr.bf16.mxu0 0
      %2551 = vmatmul.mubr.bf16.gmra.mrb[0].mxu0 %v2480
      %v2552 = vpop.f32.mrb[0].mxu0
      %v2553 = vadd.f32 %v303, %v2552
      %v2554 = vpop.f32.mrb[0].mxu0
      %v2555 = vpop.f32.mrb[0].mxu0
      %v2556 = vadd.f32 %v303, %v2555
      %v2557 = vpop.f32.mrb[0].mxu0
      %2558 = vmatprep.mubr.bf16.mxu0 0
      %2559 = vmatmul.mubr.bf16.gmra.mrb[0].mxu0 %v2483
      %v2560 = vpop.f32.mrb[0].mxu0
      %v2561 = vadd.f32 %v303, %v2560
      %v2562 = vpop.f32.mrb[0].mxu0
      %v2563 = vpop.f32.mrb[0].mxu0
      %v2564 = vadd.f32 %v303, %v2563
      %v2565 = vpop.f32.mrb[0].mxu0
      %2566 = vmatprep.mubr.bf16.mxu0 0
      %2567 = vmatmul.mubr.bf16.gmra.mrb[0].mxu0 %v2486
      %v2568 = vpop.f32.mrb[0].mxu0
      %v2569 = vadd.f32 %v303, %v2568
      %v2570 = vpop.f32.mrb[0].mxu0
      %v2571 = vpop.f32.mrb[0].mxu0
      %v2572 = vadd.f32 %v303, %v2571
      %v2573 = vpop.f32.mrb[0].mxu0
      %2574 = vmatprep.mubr.bf16.mxu0 0
      %2575 = vmatmul.mubr.bf16.gmra.mrb[0].mxu0 %v2489
      %v2576 = vpop.f32.mrb[0].mxu0
      %v2577 = vadd.f32 %v303, %v2576
      %v2578 = vpop.f32.mrb[0].mxu0
      %v2579 = vpop.f32.mrb[0].mxu0
      %v2580 = vadd.f32 %v303, %v2579
      %v2581 = vpop.f32.mrb[0].mxu0
      %2582 = vmatprep.mubr.bf16.mxu0 0
      %2583 = vmatmul.mubr.bf16.gmra.mrb[0].mxu0 %v2492
      %v2584 = vpop.f32.mrb[0].mxu0
      %v2585 = vadd.f32 %v303, %v2584
      %v2586 = vpop.f32.mrb[0].mxu0
      %v2587 = vpop.f32.mrb[0].mxu0
      %v2588 = vadd.f32 %v303, %v2587
      %v2589 = vpop.f32.mrb[0].mxu0
      %2590 = vdwg.mxu0
      %2607 = vrot.lane.b32.xlu0 %v2529, 124
      %v2608 = vpop.permute.xlu0 %2607
      %2609 = vrot.lane.b32.xlu0 %v2532, 124
      %v2610 = vpop.permute.xlu0 %2609
      %2611 = vrot.lane.b32.xlu0 %v2537, 124
      %v2612 = vpop.permute.xlu0 %2611
      %2613 = vrot.lane.b32.xlu0 %v2540, 124
      %v2614 = vpop.permute.xlu0 %2613
      %2615 = vrot.lane.b32.xlu0 %v2545, 124
      %v2616 = vpop.permute.xlu0 %2615
      %2617 = vrot.lane.b32.xlu0 %v2548, 124
      %v2618 = vpop.permute.xlu0 %2617
      %2619 = vrot.lane.b32.xlu0 %v2553, 124
      %v2620 = vpop.permute.xlu0 %2619
      %2621 = vrot.lane.b32.xlu0 %v2556, 124
      %v2622 = vpop.permute.xlu0 %2621
      %2623 = vrot.lane.b32.xlu0 %v2561, 124
      %v2624 = vpop.permute.xlu0 %2623
      %2625 = vrot.lane.b32.xlu0 %v2564, 124
      %v2626 = vpop.permute.xlu0 %2625
      %2627 = vrot.lane.b32.xlu0 %v2569, 124
      %v2628 = vpop.permute.xlu0 %2627
      %2629 = vrot.lane.b32.xlu0 %v2572, 124
      %v2630 = vpop.permute.xlu0 %2629
      %2631 = vrot.lane.b32.xlu0 %v2577, 124
      %v2632 = vpop.permute.xlu0 %2631
      %2633 = vrot.lane.b32.xlu0 %v2580, 124
      %v2634 = vpop.permute.xlu0 %2633
      %2635 = vrot.lane.b32.xlu0 %v2585, 124
      %v2636 = vpop.permute.xlu0 %2635
      %2637 = vrot.lane.b32.xlu0 %v2588, 124
      %v2638 = vpop.permute.xlu0 %2637
      %v2655 = vmul.f32 %v2529, %v2608
      %v2656 = vmul.f32 %v2532, %v2610
      %v2657 = vmul.f32 %v2537, %v2612
      %v2658 = vmul.f32 %v2540, %v2614
      %v2659 = vmul.f32 %v2545, %v2616
      %v2660 = vmul.f32 %v2548, %v2618
      %v2661 = vmul.f32 %v2553, %v2620
      %v2662 = vmul.f32 %v2556, %v2622
      %v2663 = vmul.f32 %v2561, %v2624
      %v2664 = vmul.f32 %v2564, %v2626
      %v2665 = vmul.f32 %v2569, %v2628
      %v2666 = vmul.f32 %v2572, %v2630
      %v2667 = vmul.f32 %v2577, %v2632
      %v2668 = vmul.f32 %v2580, %v2634
      %v2669 = vmul.f32 %v2585, %v2636
      %v2670 = vmul.f32 %v2588, %v2638
      %vm2671 = vcmask 294144
      %v2672 = vsel %vm2671, %v2655, -inf
      %v2673 = vsel %vm2671, %v2656, -inf
      %v2674 = vmax.f32 %v2672, %v2673
      %v2675 = vrot.slane %v2674, 4
      %v2676 = vmax.f32 %v2674, %v2675
      %v2677 = vrot.slane %v2676, 2
      %v2678 = vmax.f32 %v2676, %v2677
      %v2679 = vrot.slane %v2678, 1
      %v2680 = vmax.f32 %v2678, %v2679
      %v2681 = vsel %vm2671, %v2657, -inf
      %v2682 = vsel %vm2671, %v2658, -inf
      %v2683 = vmax.f32 %v2681, %v2682
      %v2684 = vrot.slane %v2683, 4
      %v2685 = vmax.f32 %v2683, %v2684
      %v2686 = vrot.slane %v2685, 2
      %v2687 = vmax.f32 %v2685, %v2686
      %v2688 = vrot.slane %v2687, 1
      %v2689 = vmax.f32 %v2687, %v2688
      %v2690 = vsel %vm2671, %v2659, -inf
      %v2691 = vsel %vm2671, %v2660, -inf
      %v2692 = vmax.f32 %v2690, %v2691
      %v2693 = vrot.slane %v2692, 4
      %v2694 = vmax.f32 %v2692, %v2693
      %v2695 = vrot.slane %v2694, 2
      %v2696 = vmax.f32 %v2694, %v2695
      %v2697 = vrot.slane %v2696, 1
      %v2698 = vmax.f32 %v2696, %v2697
      %v2699 = vsel %vm2671, %v2661, -inf
      %v2700 = vsel %vm2671, %v2662, -inf
      %v2701 = vmax.f32 %v2699, %v2700
      %v2702 = vrot.slane %v2701, 4
      %v2703 = vmax.f32 %v2701, %v2702
      %v2704 = vrot.slane %v2703, 2
      %v2705 = vmax.f32 %v2703, %v2704
      %v2706 = vrot.slane %v2705, 1
      %v2707 = vmax.f32 %v2705, %v2706
      %v2708 = vsel %vm2671, %v2663, -inf
      %v2709 = vsel %vm2671, %v2664, -inf
      %v2710 = vmax.f32 %v2708, %v2709
      %v2711 = vrot.slane %v2710, 4
      %v2712 = vmax.f32 %v2710, %v2711
      %v2713 = vrot.slane %v2712, 2
      %v2714 = vmax.f32 %v2712, %v2713
      %v2715 = vrot.slane %v2714, 1
      %v2716 = vmax.f32 %v2714, %v2715
      %v2717 = vsel %vm2671, %v2665, -inf
      %v2718 = vsel %vm2671, %v2666, -inf
      %v2719 = vmax.f32 %v2717, %v2718
      %v2720 = vrot.slane %v2719, 4
      %v2721 = vmax.f32 %v2719, %v2720
      %v2722 = vrot.slane %v2721, 2
      %v2723 = vmax.f32 %v2721, %v2722
      %v2724 = vrot.slane %v2723, 1
      %v2725 = vmax.f32 %v2723, %v2724
      %v2726 = vsel %vm2671, %v2667, -inf
      %v2727 = vsel %vm2671, %v2668, -inf
      %v2728 = vmax.f32 %v2726, %v2727
      %v2729 = vrot.slane %v2728, 4
      %v2730 = vmax.f32 %v2728, %v2729
      %v2731 = vrot.slane %v2730, 2
      %v2732 = vmax.f32 %v2730, %v2731
      %v2733 = vrot.slane %v2732, 1
      %v2734 = vmax.f32 %v2732, %v2733
      %v2735 = vsel %vm2671, %v2669, -inf
      %v2736 = vsel %vm2671, %v2670, -inf
      %v2737 = vmax.f32 %v2735, %v2736
      %v2738 = vrot.slane %v2737, 4
      %v2739 = vmax.f32 %v2737, %v2738
      %v2740 = vrot.slane %v2739, 2
      %v2741 = vmax.f32 %v2739, %v2740
      %v2742 = vrot.slane %v2741, 1
      %v2743 = vmax.f32 %v2741, %v2742
      %v2744 = vsub.f32 %v2655, %v2680
      %v2745 = vsub.f32 %v2656, %v2680
      %v2746 = vsub.f32 %v2657, %v2689
      %v2747 = vsub.f32 %v2658, %v2689
      %v2748 = vsub.f32 %v2659, %v2698
      %v2749 = vsub.f32 %v2660, %v2698
      %v2750 = vsub.f32 %v2661, %v2707
      %v2751 = vsub.f32 %v2662, %v2707
      %v2752 = vsub.f32 %v2663, %v2716
      %v2753 = vsub.f32 %v2664, %v2716
      %v2754 = vsub.f32 %v2665, %v2725
      %v2755 = vsub.f32 %v2666, %v2725
      %v2756 = vsub.f32 %v2667, %v2734
      %v2757 = vsub.f32 %v2668, %v2734
      %v2758 = vsub.f32 %v2669, %v2743
      %v2759 = vsub.f32 %v2670, %v2743
      %v2760 = vmul.f32 %v2744, 1.442695
      %v2761 = vpow.pop %v2760
      %v2762 = vmul.f32 %v2745, 1.442695
      %v2763 = vpow.pop %v2762
      %v2764 = vmul.f32 %v2746, 1.442695
      %v2765 = vpow.pop %v2764
      %v2766 = vmul.f32 %v2747, 1.442695
      %v2767 = vpow.pop %v2766
      %v2768 = vmul.f32 %v2748, 1.442695
      %v2769 = vpow.pop %v2768
      %v2770 = vmul.f32 %v2749, 1.442695
      %v2771 = vpow.pop %v2770
      %v2772 = vmul.f32 %v2750, 1.442695
      %v2773 = vpow.pop %v2772
      %v2774 = vmul.f32 %v2751, 1.442695
      %v2775 = vpow.pop %v2774
      %v2776 = vmul.f32 %v2752, 1.442695
      %v2777 = vpow.pop %v2776
      %v2778 = vmul.f32 %v2753, 1.442695
      %v2779 = vpow.pop %v2778
      %v2780 = vmul.f32 %v2754, 1.442695
      %v2781 = vpow.pop %v2780
      %v2782 = vmul.f32 %v2755, 1.442695
      %v2783 = vpow.pop %v2782
      %v2784 = vmul.f32 %v2756, 1.442695
      %v2785 = vpow.pop %v2784
      %v2786 = vmul.f32 %v2757, 1.442695
      %v2787 = vpow.pop %v2786
      %v2788 = vmul.f32 %v2758, 1.442695
      %v2789 = vpow.pop %v2788
      %v2790 = vmul.f32 %v2759, 1.442695
      %v2791 = vpow.pop %v2790
      %v2792 = vsel %vm2671, %v2761, 0.0
      %v2793 = vsel %vm2671, %v2763, 0.0
      %v2794 = vadd.f32 %v2792, %v2793
      %v2795 = vrot.slane %v2794, 4
      %v2796 = vadd.f32 %v2794, %v2795
      %v2797 = vrot.slane %v2796, 2
      %v2798 = vadd.f32 %v2796, %v2797
      %v2799 = vrot.slane %v2798, 1
      %v2800 = vadd.f32 %v2798, %v2799
      %v2801 = vsel %vm2671, %v2765, 0.0
      %v2802 = vsel %vm2671, %v2767, 0.0
      %v2803 = vadd.f32 %v2801, %v2802
      %v2804 = vrot.slane %v2803, 4
      %v2805 = vadd.f32 %v2803, %v2804
      %v2806 = vrot.slane %v2805, 2
      %v2807 = vadd.f32 %v2805, %v2806
      %v2808 = vrot.slane %v2807, 1
      %v2809 = vadd.f32 %v2807, %v2808
      %v2810 = vsel %vm2671, %v2769, 0.0
      %v2811 = vsel %vm2671, %v2771, 0.0
      %v2812 = vadd.f32 %v2810, %v2811
      %v2813 = vrot.slane %v2812, 4
      %v2814 = vadd.f32 %v2812, %v2813
      %v2815 = vrot.slane %v2814, 2
      %v2816 = vadd.f32 %v2814, %v2815
      %v2817 = vrot.slane %v2816, 1
      %v2818 = vadd.f32 %v2816, %v2817
      %v2819 = vsel %vm2671, %v2773, 0.0
      %v2820 = vsel %vm2671, %v2775, 0.0
      %v2821 = vadd.f32 %v2819, %v2820
      %v2822 = vrot.slane %v2821, 4
      %v2823 = vadd.f32 %v2821, %v2822
      %v2824 = vrot.slane %v2823, 2
      %v2825 = vadd.f32 %v2823, %v2824
      %v2826 = vrot.slane %v2825, 1
      %v2827 = vadd.f32 %v2825, %v2826
      %v2828 = vsel %vm2671, %v2777, 0.0
      %v2829 = vsel %vm2671, %v2779, 0.0
      %v2830 = vadd.f32 %v2828, %v2829
      %v2831 = vrot.slane %v2830, 4
      %v2832 = vadd.f32 %v2830, %v2831
      %v2833 = vrot.slane %v2832, 2
      %v2834 = vadd.f32 %v2832, %v2833
      %v2835 = vrot.slane %v2834, 1
      %v2836 = vadd.f32 %v2834, %v2835
      %v2837 = vsel %vm2671, %v2781, 0.0
      %v2838 = vsel %vm2671, %v2783, 0.0
      %v2839 = vadd.f32 %v2837, %v2838
      %v2840 = vrot.slane %v2839, 4
      %v2841 = vadd.f32 %v2839, %v2840
      %v2842 = vrot.slane %v2841, 2
      %v2843 = vadd.f32 %v2841, %v2842
      %v2844 = vrot.slane %v2843, 1
      %v2845 = vadd.f32 %v2843, %v2844
      %v2846 = vsel %vm2671, %v2785, 0.0
      %v2847 = vsel %vm2671, %v2787, 0.0
      %v2848 = vadd.f32 %v2846, %v2847
      %v2849 = vrot.slane %v2848, 4
      %v2850 = vadd.f32 %v2848, %v2849
      %v2851 = vrot.slane %v2850, 2
      %v2852 = vadd.f32 %v2850, %v2851
      %v2853 = vrot.slane %v2852, 1
      %v2854 = vadd.f32 %v2852, %v2853
      %v2855 = vsel %vm2671, %v2789, 0.0
      %v2856 = vsel %vm2671, %v2791, 0.0
      %v2857 = vadd.f32 %v2855, %v2856
      %v2858 = vrot.slane %v2857, 4
      %v2859 = vadd.f32 %v2857, %v2858
      %v2860 = vrot.slane %v2859, 2
      %v2861 = vadd.f32 %v2859, %v2860
      %v2862 = vrot.slane %v2861, 1
      %v2863 = vadd.f32 %v2861, %v2862
      %v2864 = vrcp.pop %v2800
      %v2865 = vmul.f32 %v2761, %v2864
      %v2866 = vmul.f32 %v2763, %v2864
      %v2867 = vrcp.pop %v2809
      %v2868 = vmul.f32 %v2765, %v2867
      %v2869 = vmul.f32 %v2767, %v2867
      %v2870 = vrcp.pop %v2818
      %v2871 = vmul.f32 %v2769, %v2870
      %v2872 = vmul.f32 %v2771, %v2870
      %v2873 = vrcp.pop %v2827
      %v2874 = vmul.f32 %v2773, %v2873
      %v2875 = vmul.f32 %v2775, %v2873
      %v2876 = vrcp.pop %v2836
      %v2877 = vmul.f32 %v2777, %v2876
      %v2878 = vmul.f32 %v2779, %v2876
      %v2879 = vrcp.pop %v2845
      %v2880 = vmul.f32 %v2781, %v2879
      %v2881 = vmul.f32 %v2783, %v2879
      %v2882 = vrcp.pop %v2854
      %v2883 = vmul.f32 %v2785, %v2882
      %v2884 = vmul.f32 %v2787, %v2882
      %v2885 = vrcp.pop %v2863
      %v2886 = vmul.f32 %v2789, %v2885
      %v2887 = vmul.f32 %v2791, %v2885
      %2890 = vrot.lane.b32.xlu0 %v2865, 96
      %v2891 = vpop.permute.xlu0 %2890
      %2892 = vrot.lane.b32.xlu0 %v2866, 96
      %v2893 = vpop.permute.xlu0 %2892
      %2896 = vxpose.xlu0.b32.start [1/16] %v2891, 128
      %2897 = vxpose.xlu0.b32.cont [2/16] %v2893, 128
      %2898 = vxpose.xlu0.b32.cont [3/16] 0.0, 128
      %2899 = vxpose.xlu0.b32.cont [4/16] 0.0, 128
      %2900 = vxpose.xlu0.b32.cont [5/16] 0.0, 128
      %2901 = vxpose.xlu0.b32.cont [6/16] 0.0, 128
      %2902 = vxpose.xlu0.b32.cont [7/16] 0.0, 128
      %2903 = vxpose.xlu0.b32.cont [8/16] 0.0, 128
      %2904 = vxpose.xlu0.b32.cont [9/16] 0.0, 128
      %2905 = vxpose.xlu0.b32.cont [10/16] 0.0, 128
      %2906 = vxpose.xlu0.b32.cont [11/16] 0.0, 128
      %2907 = vxpose.xlu0.b32.cont [12/16] 0.0, 128
      %2908 = vxpose.xlu0.b32.cont [13/16] 0.0, 128
      %2909 = vxpose.xlu0.b32.cont [14/16] 0.0, 128
      %2910 = vxpose.xlu0.b32.cont [15/16] 0.0, 128
      %2911 = vxpose.xlu0.b32.end [16/16] 0.0, 128
      %v2912 = vpop.trf.xlu0
      %v2913 = vpop.trf.xlu0
      %v2914 = vpop.trf.xlu0
      %v2915 = vpop.trf.xlu0
      %v2916 = vpop.trf.xlu0
      %v2917 = vpop.trf.xlu0
      %v2918 = vpop.trf.xlu0
      %v2919 = vpop.trf.xlu0
      %v2920 = vpop.trf.xlu0
      %v2921 = vpop.trf.xlu0
      %v2922 = vpop.trf.xlu0
      %v2923 = vpop.trf.xlu0
      %v2924 = vpop.trf.xlu0
      %v2925 = vpop.trf.xlu0
      %v2926 = vpop.trf.xlu0
      %v2927 = vpop.trf.xlu0
      %vm2928 = vcmask 130048
      %v2930 = vsel %vm2928, %v2912, 0
      %2932 = vmatprep.subr.mxu0 0.0
      %2933 = vmatpush1.msra.mxu0 %v2529
      %2934 = vmatprep.subr.mxu0 0.0
      %2935 = vmatpush1.msra.mxu0 %v2532
      %2936 = vmatprep.subr.mxu0 0.0
      %2937 = vmatpush1.msra.mxu0 0.0
      %2938 = vmatprep.subr.mxu0 0.0
      %2939 = vmatpush1.msra.mxu0 0.0
      %2940 = vmatprep.subr.mxu0 0.0
      %2941 = vmatpush1.msra.mxu0 0.0
      %2942 = vmatprep.subr.mxu0 0.0
      %2943 = vmatpush1.msra.mxu0 0.0
      %2944 = vmatprep.subr.mxu0 0.0
      %2945 = vmatpush1.msra.mxu0 0.0
      %2946 = vmatprep.subr.mxu0 0.0
      %2947 = vmatpush1.msra.mxu0 0.0
      %2948 = vmatprep.subr.mxu0 0.0
      %2949 = vmatpush1.msra.mxu0 0.0
      %2950 = vmatprep.subr.mxu0 0.0
      %2951 = vmatpush1.msra.mxu0 0.0
      %2952 = vmatprep.subr.mxu0 0.0
      %2953 = vmatpush1.msra.mxu0 0.0
      %2954 = vmatprep.subr.mxu0 0.0
      %2955 = vmatpush1.msra.mxu0 0.0
      %2956 = vmatprep.subr.mxu0 0.0
      %2957 = vmatpush1.msra.mxu0 0.0
      %2958 = vmatprep.subr.mxu0 0.0
      %2959 = vmatpush1.msra.mxu0 0.0
      %2960 = vmatprep.subr.mxu0 0.0
      %2961 = vmatpush1.msra.mxu0 0.0
      %2962 = vmatprep.subr.mxu0 0.0
      %2963 = vmatpush1.msra.mxu0 0.0
      %2964 = vmatprep.subr.mxu0 0.0
      %2965 = vmatpush1.msra.mxu0 0.0
      %2966 = vmatprep.subr.mxu0 0.0
      %2967 = vmatpush1.msra.mxu0 0.0
      %2968 = vmatprep.subr.mxu0 0.0
      %2969 = vmatpush1.msra.mxu0 0.0
      %2970 = vmatprep.subr.mxu0 0.0
      %2971 = vmatpush1.msra.mxu0 0.0
      %2972 = vmatprep.subr.mxu0 0.0
      %2973 = vmatpush1.msra.mxu0 0.0
      %2974 = vmatprep.subr.mxu0 0.0
      %2975 = vmatpush1.msra.mxu0 0.0
      %2976 = vmatprep.subr.mxu0 0.0
      %2977 = vmatpush1.msra.mxu0 0.0
      %2978 = vmatprep.subr.mxu0 0.0
      %2979 = vmatpush1.msra.mxu0 0.0
      %2980 = vmatprep.subr.mxu0 0.0
      %2981 = vmatpush1.msra.mxu0 0.0
      %2982 = vmatprep.subr.mxu0 0.0
      %2983 = vmatpush1.msra.mxu0 0.0
      %2984 = vmatprep.subr.mxu0 0.0
      %2985 = vmatpush1.msra.mxu0 0.0
      %2986 = vmatprep.subr.mxu0 0.0
      %2987 = vmatpush1.msra.mxu0 0.0
      %2988 = vmatprep.subr.mxu0 0.0
      %2989 = vmatpush1.msra.mxu0 0.0
      %2990 = vmatprep.subr.mxu0 0.0
      %2991 = vmatpush1.msra.mxu0 0.0
      %2992 = vmatprep.subr.mxu0 0.0
      %2993 = vmatpush1.msra.mxu0 0.0
      %2994 = vmatprep.subr.mxu0 0.0
      %2995 = vmatpush1.msra.mxu0 0.0
      %2996 = vmatprep.mubr.f32.mxu0 0.0
      %2997 = vmatmul.mubr.f32.gmra.mrb[0].mxu0 %v2930
      %v2998 = vpop.f32.mrb[0].mxu0
      %v2999 = vadd.f32 0.0, %v2998
      %v3000 = vpop.f32.mrb[0].mxu0
      %3001 = vdwg.mxu0
      %3004 = vrot.lane.b32.xlu0 %v2868, 96
      %v3005 = vpop.permute.xlu0 %3004
      %3006 = vrot.lane.b32.xlu0 %v2869, 96
      %v3007 = vpop.permute.xlu0 %3006
      %3010 = vxpose.xlu0.b32.start [1/16] %v3005, 128
      %3011 = vxpose.xlu0.b32.cont [2/16] %v3007, 128
      %3012 = vxpose.xlu0.b32.cont [3/16] 0.0, 128
      %3013 = vxpose.xlu0.b32.cont [4/16] 0.0, 128
      %3014 = vxpose.xlu0.b32.cont [5/16] 0.0, 128
      %3015 = vxpose.xlu0.b32.cont [6/16] 0.0, 128
      %3016 = vxpose.xlu0.b32.cont [7/16] 0.0, 128
      %3017 = vxpose.xlu0.b32.cont [8/16] 0.0, 128
      %3018 = vxpose.xlu0.b32.cont [9/16] 0.0, 128
      %3019 = vxpose.xlu0.b32.cont [10/16] 0.0, 128
      %3020 = vxpose.xlu0.b32.cont [11/16] 0.0, 128
      %3021 = vxpose.xlu0.b32.cont [12/16] 0.0, 128
      %3022 = vxpose.xlu0.b32.cont [13/16] 0.0, 128
      %3023 = vxpose.xlu0.b32.cont [14/16] 0.0, 128
      %3024 = vxpose.xlu0.b32.cont [15/16] 0.0, 128
      %3025 = vxpose.xlu0.b32.end [16/16] 0.0, 128
      %v3026 = vpop.trf.xlu0
      %v3027 = vpop.trf.xlu0
      %v3028 = vpop.trf.xlu0
      %v3029 = vpop.trf.xlu0
      %v3030 = vpop.trf.xlu0
      %v3031 = vpop.trf.xlu0
      %v3032 = vpop.trf.xlu0
      %v3033 = vpop.trf.xlu0
      %v3034 = vpop.trf.xlu0
      %v3035 = vpop.trf.xlu0
      %v3036 = vpop.trf.xlu0
      %v3037 = vpop.trf.xlu0
      %v3038 = vpop.trf.xlu0
      %v3039 = vpop.trf.xlu0
      %v3040 = vpop.trf.xlu0
      %v3041 = vpop.trf.xlu0
      %v3043 = vsel %vm2928, %v3026, 0
      %3045 = vmatprep.subr.mxu0 0.0
      %3046 = vmatpush1.msra.mxu0 %v2537
      %3047 = vmatprep.subr.mxu0 0.0
      %3048 = vmatpush1.msra.mxu0 %v2540
      %3049 = vmatprep.subr.mxu0 0.0
      %3050 = vmatpush1.msra.mxu0 0.0
      %3051 = vmatprep.subr.mxu0 0.0
      %3052 = vmatpush1.msra.mxu0 0.0
      %3053 = vmatprep.subr.mxu0 0.0
      %3054 = vmatpush1.msra.mxu0 0.0
      %3055 = vmatprep.subr.mxu0 0.0
      %3056 = vmatpush1.msra.mxu0 0.0
      %3057 = vmatprep.subr.mxu0 0.0
      %3058 = vmatpush1.msra.mxu0 0.0
      %3059 = vmatprep.subr.mxu0 0.0
      %3060 = vmatpush1.msra.mxu0 0.0
      %3061 = vmatprep.subr.mxu0 0.0
      %3062 = vmatpush1.msra.mxu0 0.0
      %3063 = vmatprep.subr.mxu0 0.0
      %3064 = vmatpush1.msra.mxu0 0.0
      %3065 = vmatprep.subr.mxu0 0.0
      %3066 = vmatpush1.msra.mxu0 0.0
      %3067 = vmatprep.subr.mxu0 0.0
      %3068 = vmatpush1.msra.mxu0 0.0
      %3069 = vmatprep.subr.mxu0 0.0
      %3070 = vmatpush1.msra.mxu0 0.0
      %3071 = vmatprep.subr.mxu0 0.0
      %3072 = vmatpush1.msra.mxu0 0.0
      %3073 = vmatprep.subr.mxu0 0.0
      %3074 = vmatpush1.msra.mxu0 0.0
      %3075 = vmatprep.subr.mxu0 0.0
      %3076 = vmatpush1.msra.mxu0 0.0
      %3077 = vmatprep.subr.mxu0 0.0
      %3078 = vmatpush1.msra.mxu0 0.0
      %3079 = vmatprep.subr.mxu0 0.0
      %3080 = vmatpush1.msra.mxu0 0.0
      %3081 = vmatprep.subr.mxu0 0.0
      %3082 = vmatpush1.msra.mxu0 0.0
      %3083 = vmatprep.subr.mxu0 0.0
      %3084 = vmatpush1.msra.mxu0 0.0
      %3085 = vmatprep.subr.mxu0 0.0
      %3086 = vmatpush1.msra.mxu0 0.0
      %3087 = vmatprep.subr.mxu0 0.0
      %3088 = vmatpush1.msra.mxu0 0.0
      %3089 = vmatprep.subr.mxu0 0.0
      %3090 = vmatpush1.msra.mxu0 0.0
      %3091 = vmatprep.subr.mxu0 0.0
      %3092 = vmatpush1.msra.mxu0 0.0
      %3093 = vmatprep.subr.mxu0 0.0
      %3094 = vmatpush1.msra.mxu0 0.0
      %3095 = vmatprep.subr.mxu0 0.0
      %3096 = vmatpush1.msra.mxu0 0.0
      %3097 = vmatprep.subr.mxu0 0.0
      %3098 = vmatpush1.msra.mxu0 0.0
      %3099 = vmatprep.subr.mxu0 0.0
      %3100 = vmatpush1.msra.mxu0 0.0
      %3101 = vmatprep.subr.mxu0 0.0
      %3102 = vmatpush1.msra.mxu0 0.0
      %3103 = vmatprep.subr.mxu0 0.0
      %3104 = vmatpush1.msra.mxu0 0.0
      %3105 = vmatprep.subr.mxu0 0.0
      %3106 = vmatpush1.msra.mxu0 0.0
      %3107 = vmatprep.subr.mxu0 0.0
      %3108 = vmatpush1.msra.mxu0 0.0
      %3109 = vmatprep.mubr.f32.mxu0 0.0
      %3110 = vmatmul.mubr.f32.gmra.mrb[0].mxu0 %v3043
      %v3111 = vpop.f32.mrb[0].mxu0
      %v3112 = vadd.f32 0.0, %v3111
      %v3113 = vpop.f32.mrb[0].mxu0
      %3114 = vdwg.mxu0
      %3117 = vrot.lane.b32.xlu0 %v2871, 96
      %v3118 = vpop.permute.xlu0 %3117
      %3119 = vrot.lane.b32.xlu0 %v2872, 96
      %v3120 = vpop.permute.xlu0 %3119
      %3123 = vxpose.xlu0.b32.start [1/16] %v3118, 128
      %3124 = vxpose.xlu0.b32.cont [2/16] %v3120, 128
      %3125 = vxpose.xlu0.b32.cont [3/16] 0.0, 128
      %3126 = vxpose.xlu0.b32.cont [4/16] 0.0, 128
      %3127 = vxpose.xlu0.b32.cont [5/16] 0.0, 128
      %3128 = vxpose.xlu0.b32.cont [6/16] 0.0, 128
      %3129 = vxpose.xlu0.b32.cont [7/16] 0.0, 128
      %3130 = vxpose.xlu0.b32.cont [8/16] 0.0, 128
      %3131 = vxpose.xlu0.b32.cont [9/16] 0.0, 128
      %3132 = vxpose.xlu0.b32.cont [10/16] 0.0, 128
      %3133 = vxpose.xlu0.b32.cont [11/16] 0.0, 128
      %3134 = vxpose.xlu0.b32.cont [12/16] 0.0, 128
      %3135 = vxpose.xlu0.b32.cont [13/16] 0.0, 128
      %3136 = vxpose.xlu0.b32.cont [14/16] 0.0, 128
      %3137 = vxpose.xlu0.b32.cont [15/16] 0.0, 128
      %3138 = vxpose.xlu0.b32.end [16/16] 0.0, 128
      %v3139 = vpop.trf.xlu0
      %v3140 = vpop.trf.xlu0
      %v3141 = vpop.trf.xlu0
      %v3142 = vpop.trf.xlu0
      %v3143 = vpop.trf.xlu0
      %v3144 = vpop.trf.xlu0
      %v3145 = vpop.trf.xlu0
      %v3146 = vpop.trf.xlu0
      %v3147 = vpop.trf.xlu0
      %v3148 = vpop.trf.xlu0
      %v3149 = vpop.trf.xlu0
      %v3150 = vpop.trf.xlu0
      %v3151 = vpop.trf.xlu0
      %v3152 = vpop.trf.xlu0
      %v3153 = vpop.trf.xlu0
      %v3154 = vpop.trf.xlu0
      %v3156 = vsel %vm2928, %v3139, 0
      %3158 = vmatprep.subr.mxu0 0.0
      %3159 = vmatpush1.msra.mxu0 %v2545
      %3160 = vmatprep.subr.mxu0 0.0
      %3161 = vmatpush1.msra.mxu0 %v2548
      %3162 = vmatprep.subr.mxu0 0.0
      %3163 = vmatpush1.msra.mxu0 0.0
      %3164 = vmatprep.subr.mxu0 0.0
      %3165 = vmatpush1.msra.mxu0 0.0
      %3166 = vmatprep.subr.mxu0 0.0
      %3167 = vmatpush1.msra.mxu0 0.0
      %3168 = vmatprep.subr.mxu0 0.0
      %3169 = vmatpush1.msra.mxu0 0.0
      %3170 = vmatprep.subr.mxu0 0.0
      %3171 = vmatpush1.msra.mxu0 0.0
      %3172 = vmatprep.subr.mxu0 0.0
      %3173 = vmatpush1.msra.mxu0 0.0
      %3174 = vmatprep.subr.mxu0 0.0
      %3175 = vmatpush1.msra.mxu0 0.0
      %3176 = vmatprep.subr.mxu0 0.0
      %3177 = vmatpush1.msra.mxu0 0.0
      %3178 = vmatprep.subr.mxu0 0.0
      %3179 = vmatpush1.msra.mxu0 0.0
      %3180 = vmatprep.subr.mxu0 0.0
      %3181 = vmatpush1.msra.mxu0 0.0
      %3182 = vmatprep.subr.mxu0 0.0
      %3183 = vmatpush1.msra.mxu0 0.0
      %3184 = vmatprep.subr.mxu0 0.0
      %3185 = vmatpush1.msra.mxu0 0.0
      %3186 = vmatprep.subr.mxu0 0.0
      %3187 = vmatpush1.msra.mxu0 0.0
      %3188 = vmatprep.subr.mxu0 0.0
      %3189 = vmatpush1.msra.mxu0 0.0
      %3190 = vmatprep.subr.mxu0 0.0
      %3191 = vmatpush1.msra.mxu0 0.0
      %3192 = vmatprep.subr.mxu0 0.0
      %3193 = vmatpush1.msra.mxu0 0.0
      %3194 = vmatprep.subr.mxu0 0.0
      %3195 = vmatpush1.msra.mxu0 0.0
      %3196 = vmatprep.subr.mxu0 0.0
      %3197 = vmatpush1.msra.mxu0 0.0
      %3198 = vmatprep.subr.mxu0 0.0
      %3199 = vmatpush1.msra.mxu0 0.0
      %3200 = vmatprep.subr.mxu0 0.0
      %3201 = vmatpush1.msra.mxu0 0.0
      %3202 = vmatprep.subr.mxu0 0.0
      %3203 = vmatpush1.msra.mxu0 0.0
      %3204 = vmatprep.subr.mxu0 0.0
      %3205 = vmatpush1.msra.mxu0 0.0
      %3206 = vmatprep.subr.mxu0 0.0
      %3207 = vmatpush1.msra.mxu0 0.0
      %3208 = vmatprep.subr.mxu0 0.0
      %3209 = vmatpush1.msra.mxu0 0.0
      %3210 = vmatprep.subr.mxu0 0.0
      %3211 = vmatpush1.msra.mxu0 0.0
      %3212 = vmatprep.subr.mxu0 0.0
      %3213 = vmatpush1.msra.mxu0 0.0
      %3214 = vmatprep.subr.mxu0 0.0
      %3215 = vmatpush1.msra.mxu0 0.0
      %3216 = vmatprep.subr.mxu0 0.0
      %3217 = vmatpush1.msra.mxu0 0.0
      %3218 = vmatprep.subr.mxu0 0.0
      %3219 = vmatpush1.msra.mxu0 0.0
      %3220 = vmatprep.subr.mxu0 0.0
      %3221 = vmatpush1.msra.mxu0 0.0
      %3222 = vmatprep.mubr.f32.mxu0 0.0
      %3223 = vmatmul.mubr.f32.gmra.mrb[0].mxu0 %v3156
      %v3224 = vpop.f32.mrb[0].mxu0
      %v3225 = vadd.f32 0.0, %v3224
      %v3226 = vpop.f32.mrb[0].mxu0
      %3227 = vdwg.mxu0
      %3230 = vrot.lane.b32.xlu0 %v2874, 96
      %v3231 = vpop.permute.xlu0 %3230
      %3232 = vrot.lane.b32.xlu0 %v2875, 96
      %v3233 = vpop.permute.xlu0 %3232
      %3236 = vxpose.xlu0.b32.start [1/16] %v3231, 128
      %3237 = vxpose.xlu0.b32.cont [2/16] %v3233, 128
      %3238 = vxpose.xlu0.b32.cont [3/16] 0.0, 128
      %3239 = vxpose.xlu0.b32.cont [4/16] 0.0, 128
      %3240 = vxpose.xlu0.b32.cont [5/16] 0.0, 128
      %3241 = vxpose.xlu0.b32.cont [6/16] 0.0, 128
      %3242 = vxpose.xlu0.b32.cont [7/16] 0.0, 128
      %3243 = vxpose.xlu0.b32.cont [8/16] 0.0, 128
      %3244 = vxpose.xlu0.b32.cont [9/16] 0.0, 128
      %3245 = vxpose.xlu0.b32.cont [10/16] 0.0, 128
      %3246 = vxpose.xlu0.b32.cont [11/16] 0.0, 128
      %3247 = vxpose.xlu0.b32.cont [12/16] 0.0, 128
      %3248 = vxpose.xlu0.b32.cont [13/16] 0.0, 128
      %3249 = vxpose.xlu0.b32.cont [14/16] 0.0, 128
      %3250 = vxpose.xlu0.b32.cont [15/16] 0.0, 128
      %3251 = vxpose.xlu0.b32.end [16/16] 0.0, 128
      %v3252 = vpop.trf.xlu0
      %v3253 = vpop.trf.xlu0
      %v3254 = vpop.trf.xlu0
      %v3255 = vpop.trf.xlu0
      %v3256 = vpop.trf.xlu0
      %v3257 = vpop.trf.xlu0
      %v3258 = vpop.trf.xlu0
      %v3259 = vpop.trf.xlu0
      %v3260 = vpop.trf.xlu0
      %v3261 = vpop.trf.xlu0
      %v3262 = vpop.trf.xlu0
      %v3263 = vpop.trf.xlu0
      %v3264 = vpop.trf.xlu0
      %v3265 = vpop.trf.xlu0
      %v3266 = vpop.trf.xlu0
      %v3267 = vpop.trf.xlu0
      %v3269 = vsel %vm2928, %v3252, 0
      %3271 = vmatprep.subr.mxu0 0.0
      %3272 = vmatpush1.msra.mxu0 %v2553
      %3273 = vmatprep.subr.mxu0 0.0
      %3274 = vmatpush1.msra.mxu0 %v2556
      %3275 = vmatprep.subr.mxu0 0.0
      %3276 = vmatpush1.msra.mxu0 0.0
      %3277 = vmatprep.subr.mxu0 0.0
      %3278 = vmatpush1.msra.mxu0 0.0
      %3279 = vmatprep.subr.mxu0 0.0
      %3280 = vmatpush1.msra.mxu0 0.0
      %3281 = vmatprep.subr.mxu0 0.0
      %3282 = vmatpush1.msra.mxu0 0.0
      %3283 = vmatprep.subr.mxu0 0.0
      %3284 = vmatpush1.msra.mxu0 0.0
      %3285 = vmatprep.subr.mxu0 0.0
      %3286 = vmatpush1.msra.mxu0 0.0
      %3287 = vmatprep.subr.mxu0 0.0
      %3288 = vmatpush1.msra.mxu0 0.0
      %3289 = vmatprep.subr.mxu0 0.0
      %3290 = vmatpush1.msra.mxu0 0.0
      %3291 = vmatprep.subr.mxu0 0.0
      %3292 = vmatpush1.msra.mxu0 0.0
      %3293 = vmatprep.subr.mxu0 0.0
      %3294 = vmatpush1.msra.mxu0 0.0
      %3295 = vmatprep.subr.mxu0 0.0
      %3296 = vmatpush1.msra.mxu0 0.0
      %3297 = vmatprep.subr.mxu0 0.0
      %3298 = vmatpush1.msra.mxu0 0.0
      %3299 = vmatprep.subr.mxu0 0.0
      %3300 = vmatpush1.msra.mxu0 0.0
      %3301 = vmatprep.subr.mxu0 0.0
      %3302 = vmatpush1.msra.mxu0 0.0
      %3303 = vmatprep.subr.mxu0 0.0
      %3304 = vmatpush1.msra.mxu0 0.0
      %3305 = vmatprep.subr.mxu0 0.0
      %3306 = vmatpush1.msra.mxu0 0.0
      %3307 = vmatprep.subr.mxu0 0.0
      %3308 = vmatpush1.msra.mxu0 0.0
      %3309 = vmatprep.subr.mxu0 0.0
      %3310 = vmatpush1.msra.mxu0 0.0
      %3311 = vmatprep.subr.mxu0 0.0
      %3312 = vmatpush1.msra.mxu0 0.0
      %3313 = vmatprep.subr.mxu0 0.0
      %3314 = vmatpush1.msra.mxu0 0.0
      %3315 = vmatprep.subr.mxu0 0.0
      %3316 = vmatpush1.msra.mxu0 0.0
      %3317 = vmatprep.subr.mxu0 0.0
      %3318 = vmatpush1.msra.mxu0 0.0
      %3319 = vmatprep.subr.mxu0 0.0
      %3320 = vmatpush1.msra.mxu0 0.0
      %3321 = vmatprep.subr.mxu0 0.0
      %3322 = vmatpush1.msra.mxu0 0.0
      %3323 = vmatprep.subr.mxu0 0.0
      %3324 = vmatpush1.msra.mxu0 0.0
      %3325 = vmatprep.subr.mxu0 0.0
      %3326 = vmatpush1.msra.mxu0 0.0
      %3327 = vmatprep.subr.mxu0 0.0
      %3328 = vmatpush1.msra.mxu0 0.0
      %3329 = vmatprep.subr.mxu0 0.0
      %3330 = vmatpush1.msra.mxu0 0.0
      %3331 = vmatprep.subr.mxu0 0.0
      %3332 = vmatpush1.msra.mxu0 0.0
      %3333 = vmatprep.subr.mxu0 0.0
      %3334 = vmatpush1.msra.mxu0 0.0
      %3335 = vmatprep.mubr.f32.mxu0 0.0
      %3336 = vmatmul.mubr.f32.gmra.mrb[0].mxu0 %v3269
      %v3337 = vpop.f32.mrb[0].mxu0
      %v3338 = vadd.f32 0.0, %v3337
      %v3339 = vpop.f32.mrb[0].mxu0
      %3340 = vdwg.mxu0
      %3343 = vrot.lane.b32.xlu0 %v2877, 96
      %v3344 = vpop.permute.xlu0 %3343
      %3345 = vrot.lane.b32.xlu0 %v2878, 96
      %v3346 = vpop.permute.xlu0 %3345
      %3349 = vxpose.xlu0.b32.start [1/16] %v3344, 128
      %3350 = vxpose.xlu0.b32.cont [2/16] %v3346, 128
      %3351 = vxpose.xlu0.b32.cont [3/16] 0.0, 128
      %3352 = vxpose.xlu0.b32.cont [4/16] 0.0, 128
      %3353 = vxpose.xlu0.b32.cont [5/16] 0.0, 128
      %3354 = vxpose.xlu0.b32.cont [6/16] 0.0, 128
      %3355 = vxpose.xlu0.b32.cont [7/16] 0.0, 128
      %3356 = vxpose.xlu0.b32.cont [8/16] 0.0, 128
      %3357 = vxpose.xlu0.b32.cont [9/16] 0.0, 128
      %3358 = vxpose.xlu0.b32.cont [10/16] 0.0, 128
      %3359 = vxpose.xlu0.b32.cont [11/16] 0.0, 128
      %3360 = vxpose.xlu0.b32.cont [12/16] 0.0, 128
      %3361 = vxpose.xlu0.b32.cont [13/16] 0.0, 128
      %3362 = vxpose.xlu0.b32.cont [14/16] 0.0, 128
      %3363 = vxpose.xlu0.b32.cont [15/16] 0.0, 128
      %3364 = vxpose.xlu0.b32.end [16/16] 0.0, 128
      %v3365 = vpop.trf.xlu0
      %v3366 = vpop.trf.xlu0
      %v3367 = vpop.trf.xlu0
      %v3368 = vpop.trf.xlu0
      %v3369 = vpop.trf.xlu0
      %v3370 = vpop.trf.xlu0
      %v3371 = vpop.trf.xlu0
      %v3372 = vpop.trf.xlu0
      %v3373 = vpop.trf.xlu0
      %v3374 = vpop.trf.xlu0
      %v3375 = vpop.trf.xlu0
      %v3376 = vpop.trf.xlu0
      %v3377 = vpop.trf.xlu0
      %v3378 = vpop.trf.xlu0
      %v3379 = vpop.trf.xlu0
      %v3380 = vpop.trf.xlu0
      %v3382 = vsel %vm2928, %v3365, 0
      %3384 = vmatprep.subr.mxu0 0.0
      %3385 = vmatpush1.msra.mxu0 %v2561
      %3386 = vmatprep.subr.mxu0 0.0
      %3387 = vmatpush1.msra.mxu0 %v2564
      %3388 = vmatprep.subr.mxu0 0.0
      %3389 = vmatpush1.msra.mxu0 0.0
      %3390 = vmatprep.subr.mxu0 0.0
      %3391 = vmatpush1.msra.mxu0 0.0
      %3392 = vmatprep.subr.mxu0 0.0
      %3393 = vmatpush1.msra.mxu0 0.0
      %3394 = vmatprep.subr.mxu0 0.0
      %3395 = vmatpush1.msra.mxu0 0.0
      %3396 = vmatprep.subr.mxu0 0.0
      %3397 = vmatpush1.msra.mxu0 0.0
      %3398 = vmatprep.subr.mxu0 0.0
      %3399 = vmatpush1.msra.mxu0 0.0
      %3400 = vmatprep.subr.mxu0 0.0
      %3401 = vmatpush1.msra.mxu0 0.0
      %3402 = vmatprep.subr.mxu0 0.0
      %3403 = vmatpush1.msra.mxu0 0.0
      %3404 = vmatprep.subr.mxu0 0.0
      %3405 = vmatpush1.msra.mxu0 0.0
      %3406 = vmatprep.subr.mxu0 0.0
      %3407 = vmatpush1.msra.mxu0 0.0
      %3408 = vmatprep.subr.mxu0 0.0
      %3409 = vmatpush1.msra.mxu0 0.0
      %3410 = vmatprep.subr.mxu0 0.0
      %3411 = vmatpush1.msra.mxu0 0.0
      %3412 = vmatprep.subr.mxu0 0.0
      %3413 = vmatpush1.msra.mxu0 0.0
      %3414 = vmatprep.subr.mxu0 0.0
      %3415 = vmatpush1.msra.mxu0 0.0
      %3416 = vmatprep.subr.mxu0 0.0
      %3417 = vmatpush1.msra.mxu0 0.0
      %3418 = vmatprep.subr.mxu0 0.0
      %3419 = vmatpush1.msra.mxu0 0.0
      %3420 = vmatprep.subr.mxu0 0.0
      %3421 = vmatpush1.msra.mxu0 0.0
      %3422 = vmatprep.subr.mxu0 0.0
      %3423 = vmatpush1.msra.mxu0 0.0
      %3424 = vmatprep.subr.mxu0 0.0
      %3425 = vmatpush1.msra.mxu0 0.0
      %3426 = vmatprep.subr.mxu0 0.0
      %3427 = vmatpush1.msra.mxu0 0.0
      %3428 = vmatprep.subr.mxu0 0.0
      %3429 = vmatpush1.msra.mxu0 0.0
      %3430 = vmatprep.subr.mxu0 0.0
      %3431 = vmatpush1.msra.mxu0 0.0
      %3432 = vmatprep.subr.mxu0 0.0
      %3433 = vmatpush1.msra.mxu0 0.0
      %3434 = vmatprep.subr.mxu0 0.0
      %3435 = vmatpush1.msra.mxu0 0.0
      %3436 = vmatprep.subr.mxu0 0.0
      %3437 = vmatpush1.msra.mxu0 0.0
      %3438 = vmatprep.subr.mxu0 0.0
      %3439 = vmatpush1.msra.mxu0 0.0
      %3440 = vmatprep.subr.mxu0 0.0
      %3441 = vmatpush1.msra.mxu0 0.0
      %3442 = vmatprep.subr.mxu0 0.0
      %3443 = vmatpush1.msra.mxu0 0.0
      %3444 = vmatprep.subr.mxu0 0.0
      %3445 = vmatpush1.msra.mxu0 0.0
      %3446 = vmatprep.subr.mxu0 0.0
      %3447 = vmatpush1.msra.mxu0 0.0
      %3448 = vmatprep.mubr.f32.mxu0 0.0
      %3449 = vmatmul.mubr.f32.gmra.mrb[0].mxu0 %v3382
      %v3450 = vpop.f32.mrb[0].mxu0
      %v3451 = vadd.f32 0.0, %v3450
      %v3452 = vpop.f32.mrb[0].mxu0
      %3453 = vdwg.mxu0
      %3456 = vrot.lane.b32.xlu0 %v2880, 96
      %v3457 = vpop.permute.xlu0 %3456
      %3458 = vrot.lane.b32.xlu0 %v2881, 96
      %v3459 = vpop.permute.xlu0 %3458
      %3462 = vxpose.xlu0.b32.start [1/16] %v3457, 128
      %3463 = vxpose.xlu0.b32.cont [2/16] %v3459, 128
      %3464 = vxpose.xlu0.b32.cont [3/16] 0.0, 128
      %3465 = vxpose.xlu0.b32.cont [4/16] 0.0, 128
      %3466 = vxpose.xlu0.b32.cont [5/16] 0.0, 128
      %3467 = vxpose.xlu0.b32.cont [6/16] 0.0, 128
      %3468 = vxpose.xlu0.b32.cont [7/16] 0.0, 128
      %3469 = vxpose.xlu0.b32.cont [8/16] 0.0, 128
      %3470 = vxpose.xlu0.b32.cont [9/16] 0.0, 128
      %3471 = vxpose.xlu0.b32.cont [10/16] 0.0, 128
      %3472 = vxpose.xlu0.b32.cont [11/16] 0.0, 128
      %3473 = vxpose.xlu0.b32.cont [12/16] 0.0, 128
      %3474 = vxpose.xlu0.b32.cont [13/16] 0.0, 128
      %3475 = vxpose.xlu0.b32.cont [14/16] 0.0, 128
      %3476 = vxpose.xlu0.b32.cont [15/16] 0.0, 128
      %3477 = vxpose.xlu0.b32.end [16/16] 0.0, 128
      %v3478 = vpop.trf.xlu0
      %v3479 = vpop.trf.xlu0
      %v3480 = vpop.trf.xlu0
      %v3481 = vpop.trf.xlu0
      %v3482 = vpop.trf.xlu0
      %v3483 = vpop.trf.xlu0
      %v3484 = vpop.trf.xlu0
      %v3485 = vpop.trf.xlu0
      %v3486 = vpop.trf.xlu0
      %v3487 = vpop.trf.xlu0
      %v3488 = vpop.trf.xlu0
      %v3489 = vpop.trf.xlu0
      %v3490 = vpop.trf.xlu0
      %v3491 = vpop.trf.xlu0
      %v3492 = vpop.trf.xlu0
      %v3493 = vpop.trf.xlu0
      %v3495 = vsel %vm2928, %v3478, 0
      %3497 = vmatprep.subr.mxu0 0.0
      %3498 = vmatpush1.msra.mxu0 %v2569
      %3499 = vmatprep.subr.mxu0 0.0
      %3500 = vmatpush1.msra.mxu0 %v2572
      %3501 = vmatprep.subr.mxu0 0.0
      %3502 = vmatpush1.msra.mxu0 0.0
      %3503 = vmatprep.subr.mxu0 0.0
      %3504 = vmatpush1.msra.mxu0 0.0
      %3505 = vmatprep.subr.mxu0 0.0
      %3506 = vmatpush1.msra.mxu0 0.0
      %3507 = vmatprep.subr.mxu0 0.0
      %3508 = vmatpush1.msra.mxu0 0.0
      %3509 = vmatprep.subr.mxu0 0.0
      %3510 = vmatpush1.msra.mxu0 0.0
      %3511 = vmatprep.subr.mxu0 0.0
      %3512 = vmatpush1.msra.mxu0 0.0
      %3513 = vmatprep.subr.mxu0 0.0
      %3514 = vmatpush1.msra.mxu0 0.0
      %3515 = vmatprep.subr.mxu0 0.0
      %3516 = vmatpush1.msra.mxu0 0.0
      %3517 = vmatprep.subr.mxu0 0.0
      %3518 = vmatpush1.msra.mxu0 0.0
      %3519 = vmatprep.subr.mxu0 0.0
      %3520 = vmatpush1.msra.mxu0 0.0
      %3521 = vmatprep.subr.mxu0 0.0
      %3522 = vmatpush1.msra.mxu0 0.0
      %3523 = vmatprep.subr.mxu0 0.0
      %3524 = vmatpush1.msra.mxu0 0.0
      %3525 = vmatprep.subr.mxu0 0.0
      %3526 = vmatpush1.msra.mxu0 0.0
      %3527 = vmatprep.subr.mxu0 0.0
      %3528 = vmatpush1.msra.mxu0 0.0
      %3529 = vmatprep.subr.mxu0 0.0
      %3530 = vmatpush1.msra.mxu0 0.0
      %3531 = vmatprep.subr.mxu0 0.0
      %3532 = vmatpush1.msra.mxu0 0.0
      %3533 = vmatprep.subr.mxu0 0.0
      %3534 = vmatpush1.msra.mxu0 0.0
      %3535 = vmatprep.subr.mxu0 0.0
      %3536 = vmatpush1.msra.mxu0 0.0
      %3537 = vmatprep.subr.mxu0 0.0
      %3538 = vmatpush1.msra.mxu0 0.0
      %3539 = vmatprep.subr.mxu0 0.0
      %3540 = vmatpush1.msra.mxu0 0.0
      %3541 = vmatprep.subr.mxu0 0.0
      %3542 = vmatpush1.msra.mxu0 0.0
      %3543 = vmatprep.subr.mxu0 0.0
      %3544 = vmatpush1.msra.mxu0 0.0
      %3545 = vmatprep.subr.mxu0 0.0
      %3546 = vmatpush1.msra.mxu0 0.0
      %3547 = vmatprep.subr.mxu0 0.0
      %3548 = vmatpush1.msra.mxu0 0.0
      %3549 = vmatprep.subr.mxu0 0.0
      %3550 = vmatpush1.msra.mxu0 0.0
      %3551 = vmatprep.subr.mxu0 0.0
      %3552 = vmatpush1.msra.mxu0 0.0
      %3553 = vmatprep.subr.mxu0 0.0
      %3554 = vmatpush1.msra.mxu0 0.0
      %3555 = vmatprep.subr.mxu0 0.0
      %3556 = vmatpush1.msra.mxu0 0.0
      %3557 = vmatprep.subr.mxu0 0.0
      %3558 = vmatpush1.msra.mxu0 0.0
      %3559 = vmatprep.subr.mxu0 0.0
      %3560 = vmatpush1.msra.mxu0 0.0
      %3561 = vmatprep.mubr.f32.mxu0 0.0
      %3562 = vmatmul.mubr.f32.gmra.mrb[0].mxu0 %v3495
      %v3563 = vpop.f32.mrb[0].mxu0
      %v3564 = vadd.f32 0.0, %v3563
      %v3565 = vpop.f32.mrb[0].mxu0
      %3566 = vdwg.mxu0
      %3569 = vrot.lane.b32.xlu0 %v2883, 96
      %v3570 = vpop.permute.xlu0 %3569
      %3571 = vrot.lane.b32.xlu0 %v2884, 96
      %v3572 = vpop.permute.xlu0 %3571
      %3575 = vxpose.xlu0.b32.start [1/16] %v3570, 128
      %3576 = vxpose.xlu0.b32.cont [2/16] %v3572, 128
      %3577 = vxpose.xlu0.b32.cont [3/16] 0.0, 128
      %3578 = vxpose.xlu0.b32.cont [4/16] 0.0, 128
      %3579 = vxpose.xlu0.b32.cont [5/16] 0.0, 128
      %3580 = vxpose.xlu0.b32.cont [6/16] 0.0, 128
      %3581 = vxpose.xlu0.b32.cont [7/16] 0.0, 128
      %3582 = vxpose.xlu0.b32.cont [8/16] 0.0, 128
      %3583 = vxpose.xlu0.b32.cont [9/16] 0.0, 128
      %3584 = vxpose.xlu0.b32.cont [10/16] 0.0, 128
      %3585 = vxpose.xlu0.b32.cont [11/16] 0.0, 128
      %3586 = vxpose.xlu0.b32.cont [12/16] 0.0, 128
      %3587 = vxpose.xlu0.b32.cont [13/16] 0.0, 128
      %3588 = vxpose.xlu0.b32.cont [14/16] 0.0, 128
      %3589 = vxpose.xlu0.b32.cont [15/16] 0.0, 128
      %3590 = vxpose.xlu0.b32.end [16/16] 0.0, 128
      %v3591 = vpop.trf.xlu0
      %v3592 = vpop.trf.xlu0
      %v3593 = vpop.trf.xlu0
      %v3594 = vpop.trf.xlu0
      %v3595 = vpop.trf.xlu0
      %v3596 = vpop.trf.xlu0
      %v3597 = vpop.trf.xlu0
      %v3598 = vpop.trf.xlu0
      %v3599 = vpop.trf.xlu0
      %v3600 = vpop.trf.xlu0
      %v3601 = vpop.trf.xlu0
      %v3602 = vpop.trf.xlu0
      %v3603 = vpop.trf.xlu0
      %v3604 = vpop.trf.xlu0
      %v3605 = vpop.trf.xlu0
      %v3606 = vpop.trf.xlu0
      %v3608 = vsel %vm2928, %v3591, 0
      %3610 = vmatprep.subr.mxu0 0.0
      %3611 = vmatpush1.msra.mxu0 %v2577
      %3612 = vmatprep.subr.mxu0 0.0
      %3613 = vmatpush1.msra.mxu0 %v2580
      %3614 = vmatprep.subr.mxu0 0.0
      %3615 = vmatpush1.msra.mxu0 0.0
      %3616 = vmatprep.subr.mxu0 0.0
      %3617 = vmatpush1.msra.mxu0 0.0
      %3618 = vmatprep.subr.mxu0 0.0
      %3619 = vmatpush1.msra.mxu0 0.0
      %3620 = vmatprep.subr.mxu0 0.0
      %3621 = vmatpush1.msra.mxu0 0.0
      %3622 = vmatprep.subr.mxu0 0.0
      %3623 = vmatpush1.msra.mxu0 0.0
      %3624 = vmatprep.subr.mxu0 0.0
      %3625 = vmatpush1.msra.mxu0 0.0
      %3626 = vmatprep.subr.mxu0 0.0
      %3627 = vmatpush1.msra.mxu0 0.0
      %3628 = vmatprep.subr.mxu0 0.0
      %3629 = vmatpush1.msra.mxu0 0.0
      %3630 = vmatprep.subr.mxu0 0.0
      %3631 = vmatpush1.msra.mxu0 0.0
      %3632 = vmatprep.subr.mxu0 0.0
      %3633 = vmatpush1.msra.mxu0 0.0
      %3634 = vmatprep.subr.mxu0 0.0
      %3635 = vmatpush1.msra.mxu0 0.0
      %3636 = vmatprep.subr.mxu0 0.0
      %3637 = vmatpush1.msra.mxu0 0.0
      %3638 = vmatprep.subr.mxu0 0.0
      %3639 = vmatpush1.msra.mxu0 0.0
      %3640 = vmatprep.subr.mxu0 0.0
      %3641 = vmatpush1.msra.mxu0 0.0
      %3642 = vmatprep.subr.mxu0 0.0
      %3643 = vmatpush1.msra.mxu0 0.0
      %3644 = vmatprep.subr.mxu0 0.0
      %3645 = vmatpush1.msra.mxu0 0.0
      %3646 = vmatprep.subr.mxu0 0.0
      %3647 = vmatpush1.msra.mxu0 0.0
      %3648 = vmatprep.subr.mxu0 0.0
      %3649 = vmatpush1.msra.mxu0 0.0
      %3650 = vmatprep.subr.mxu0 0.0
      %3651 = vmatpush1.msra.mxu0 0.0
      %3652 = vmatprep.subr.mxu0 0.0
      %3653 = vmatpush1.msra.mxu0 0.0
      %3654 = vmatprep.subr.mxu0 0.0
      %3655 = vmatpush1.msra.mxu0 0.0
      %3656 = vmatprep.subr.mxu0 0.0
      %3657 = vmatpush1.msra.mxu0 0.0
      %3658 = vmatprep.subr.mxu0 0.0
      %3659 = vmatpush1.msra.mxu0 0.0
      %3660 = vmatprep.subr.mxu0 0.0
      %3661 = vmatpush1.msra.mxu0 0.0
      %3662 = vmatprep.subr.mxu0 0.0
      %3663 = vmatpush1.msra.mxu0 0.0
      %3664 = vmatprep.subr.mxu0 0.0
      %3665 = vmatpush1.msra.mxu0 0.0
      %3666 = vmatprep.subr.mxu0 0.0
      %3667 = vmatpush1.msra.mxu0 0.0
      %3668 = vmatprep.subr.mxu0 0.0
      %3669 = vmatpush1.msra.mxu0 0.0
      %3670 = vmatprep.subr.mxu0 0.0
      %3671 = vmatpush1.msra.mxu0 0.0
      %3672 = vmatprep.subr.mxu0 0.0
      %3673 = vmatpush1.msra.mxu0 0.0
      %3674 = vmatprep.mubr.f32.mxu0 0.0
      %3675 = vmatmul.mubr.f32.gmra.mrb[0].mxu0 %v3608
      %v3676 = vpop.f32.mrb[0].mxu0
      %v3677 = vadd.f32 0.0, %v3676
      %v3678 = vpop.f32.mrb[0].mxu0
      %3679 = vdwg.mxu0
      %3682 = vrot.lane.b32.xlu0 %v2886, 96
      %v3683 = vpop.permute.xlu0 %3682
      %3684 = vrot.lane.b32.xlu0 %v2887, 96
      %v3685 = vpop.permute.xlu0 %3684
      %3688 = vxpose.xlu0.b32.start [1/16] %v3683, 128
      %3689 = vxpose.xlu0.b32.cont [2/16] %v3685, 128
      %3690 = vxpose.xlu0.b32.cont [3/16] 0.0, 128
      %3691 = vxpose.xlu0.b32.cont [4/16] 0.0, 128
      %3692 = vxpose.xlu0.b32.cont [5/16] 0.0, 128
      %3693 = vxpose.xlu0.b32.cont [6/16] 0.0, 128
      %3694 = vxpose.xlu0.b32.cont [7/16] 0.0, 128
      %3695 = vxpose.xlu0.b32.cont [8/16] 0.0, 128
      %3696 = vxpose.xlu0.b32.cont [9/16] 0.0, 128
      %3697 = vxpose.xlu0.b32.cont [10/16] 0.0, 128
      %3698 = vxpose.xlu0.b32.cont [11/16] 0.0, 128
      %3699 = vxpose.xlu0.b32.cont [12/16] 0.0, 128
      %3700 = vxpose.xlu0.b32.cont [13/16] 0.0, 128
      %3701 = vxpose.xlu0.b32.cont [14/16] 0.0, 128
      %3702 = vxpose.xlu0.b32.cont [15/16] 0.0, 128
      %3703 = vxpose.xlu0.b32.end [16/16] 0.0, 128
      %v3704 = vpop.trf.xlu0
      %v3705 = vpop.trf.xlu0
      %v3706 = vpop.trf.xlu0
      %v3707 = vpop.trf.xlu0
      %v3708 = vpop.trf.xlu0
      %v3709 = vpop.trf.xlu0
      %v3710 = vpop.trf.xlu0
      %v3711 = vpop.trf.xlu0
      %v3712 = vpop.trf.xlu0
      %v3713 = vpop.trf.xlu0
      %v3714 = vpop.trf.xlu0
      %v3715 = vpop.trf.xlu0
      %v3716 = vpop.trf.xlu0
      %v3717 = vpop.trf.xlu0
      %v3718 = vpop.trf.xlu0
      %v3719 = vpop.trf.xlu0
      %v3721 = vsel %vm2928, %v3704, 0
      %3723 = vmatprep.subr.mxu0 0.0
      %3724 = vmatpush1.msra.mxu0 %v2585
      %3725 = vmatprep.subr.mxu0 0.0
      %3726 = vmatpush1.msra.mxu0 %v2588
      %3727 = vmatprep.subr.mxu0 0.0
      %3728 = vmatpush1.msra.mxu0 0.0
      %3729 = vmatprep.subr.mxu0 0.0
      %3730 = vmatpush1.msra.mxu0 0.0
      %3731 = vmatprep.subr.mxu0 0.0
      %3732 = vmatpush1.msra.mxu0 0.0
      %3733 = vmatprep.subr.mxu0 0.0
      %3734 = vmatpush1.msra.mxu0 0.0
      %3735 = vmatprep.subr.mxu0 0.0
      %3736 = vmatpush1.msra.mxu0 0.0
      %3737 = vmatprep.subr.mxu0 0.0
      %3738 = vmatpush1.msra.mxu0 0.0
      %3739 = vmatprep.subr.mxu0 0.0
      %3740 = vmatpush1.msra.mxu0 0.0
      %3741 = vmatprep.subr.mxu0 0.0
      %3742 = vmatpush1.msra.mxu0 0.0
      %3743 = vmatprep.subr.mxu0 0.0
      %3744 = vmatpush1.msra.mxu0 0.0
      %3745 = vmatprep.subr.mxu0 0.0
      %3746 = vmatpush1.msra.mxu0 0.0
      %3747 = vmatprep.subr.mxu0 0.0
      %3748 = vmatpush1.msra.mxu0 0.0
      %3749 = vmatprep.subr.mxu0 0.0
      %3750 = vmatpush1.msra.mxu0 0.0
      %3751 = vmatprep.subr.mxu0 0.0
      %3752 = vmatpush1.msra.mxu0 0.0
      %3753 = vmatprep.subr.mxu0 0.0
      %3754 = vmatpush1.msra.mxu0 0.0
      %3755 = vmatprep.subr.mxu0 0.0
      %3756 = vmatpush1.msra.mxu0 0.0
      %3757 = vmatprep.subr.mxu0 0.0
      %3758 = vmatpush1.msra.mxu0 0.0
      %3759 = vmatprep.subr.mxu0 0.0
      %3760 = vmatpush1.msra.mxu0 0.0
      %3761 = vmatprep.subr.mxu0 0.0
      %3762 = vmatpush1.msra.mxu0 0.0
      %3763 = vmatprep.subr.mxu0 0.0
      %3764 = vmatpush1.msra.mxu0 0.0
      %3765 = vmatprep.subr.mxu0 0.0
      %3766 = vmatpush1.msra.mxu0 0.0
      %3767 = vmatprep.subr.mxu0 0.0
      %3768 = vmatpush1.msra.mxu0 0.0
      %3769 = vmatprep.subr.mxu0 0.0
      %3770 = vmatpush1.msra.mxu0 0.0
      %3771 = vmatprep.subr.mxu0 0.0
      %3772 = vmatpush1.msra.mxu0 0.0
      %3773 = vmatprep.subr.mxu0 0.0
      %3774 = vmatpush1.msra.mxu0 0.0
      %3775 = vmatprep.subr.mxu0 0.0
      %3776 = vmatpush1.msra.mxu0 0.0
      %3777 = vmatprep.subr.mxu0 0.0
      %3778 = vmatpush1.msra.mxu0 0.0
      %3779 = vmatprep.subr.mxu0 0.0
      %3780 = vmatpush1.msra.mxu0 0.0
      %3781 = vmatprep.subr.mxu0 0.0
      %3782 = vmatpush1.msra.mxu0 0.0
      %3783 = vmatprep.subr.mxu0 0.0
      %3784 = vmatpush1.msra.mxu0 0.0
      %3785 = vmatprep.subr.mxu0 0.0
      %3786 = vmatpush1.msra.mxu0 0.0
      %3787 = vmatprep.mubr.f32.mxu0 0.0
      %3788 = vmatmul.mubr.f32.gmra.mrb[0].mxu0 %v3721
      %v3789 = vpop.f32.mrb[0].mxu0
      %v3790 = vadd.f32 0.0, %v3789
      %v3791 = vpop.f32.mrb[0].mxu0
      %3792 = vdwg.mxu0
      %v3793 = vcombine.low %v2999, %v3225
      %v3795 = vunpack.c.l.s4 1983009808
      %v3796 = vunpack.c.0.s8 %v3795
      %v3797 = vlaneseq
      %v3798 = vshrl.u32 %v3797, 7
      %v3799 = vsub.s32 %v3796, %v3798
      %v3800 = vrot.slane %v3793, %v3799
      %v3801 = vcombine.low %v3112, %v3338
      %v3803 = vunpack.c.l.s4 1983009808
      %v3804 = vunpack.c.0.s8 %v3803
      %v3805 = vlaneseq
      %v3806 = vshrl.u32 %v3805, 7
      %v3807 = vsub.s32 %v3804, %v3806
      %v3808 = vrot.slane %v3801, %v3807
      %v3809 = vcombine.low %v3451, %v3677
      %v3811 = vunpack.c.l.s4 1983009808
      %v3812 = vunpack.c.0.s8 %v3811
      %v3813 = vlaneseq
      %v3814 = vshrl.u32 %v3813, 7
      %v3815 = vsub.s32 %v3812, %v3814
      %v3816 = vrot.slane %v3809, %v3815
      %v3817 = vcombine.low %v3564, %v3790
      %v3819 = vunpack.c.l.s4 1983009808
      %v3820 = vunpack.c.0.s8 %v3819
      %v3821 = vlaneseq
      %v3822 = vshrl.u32 %v3821, 7
      %v3823 = vsub.s32 %v3820, %v3822
      %v3824 = vrot.slane %v3817, %v3823
      %v3825 = vcombine.low %v3800, %v3808
      %v3826 = vcombine.high %v3800, %v3808
      %v3828 = vunpack.c.l.s4 1934713408
      %v3829 = vunpack.c.0.s8 %v3828
      %v3830 = vlaneseq
      %v3831 = vshrl.u32 %v3830, 7
      %v3832 = vsub.s32 %v3829, %v3831
      %v3833 = vrot.slane %v3825, %v3832
      %v3835 = vunpack.c.l.s4 1934713408
      %v3836 = vunpack.c.0.s8 %v3835
      %v3837 = vlaneseq
      %v3838 = vshrl.u32 %v3837, 7
      %v3839 = vsub.s32 %v3836, %v3838
      %v3840 = vrot.slane %v3826, %v3839
      %v3841 = vcombine.low %v3816, %v3824
      %v3842 = vcombine.high %v3816, %v3824
      %v3844 = vunpack.c.l.s4 1934713408
      %v3845 = vunpack.c.0.s8 %v3844
      %v3846 = vlaneseq
      %v3847 = vshrl.u32 %v3846, 7
      %v3848 = vsub.s32 %v3845, %v3847
      %v3849 = vrot.slane %v3841, %v3848
      %v3851 = vunpack.c.l.s4 1934713408
      %v3852 = vunpack.c.0.s8 %v3851
      %v3853 = vlaneseq
      %v3854 = vshrl.u32 %v3853, 7
      %v3855 = vsub.s32 %v3852, %v3854
      %v3856 = vrot.slane %v3842, %v3855
      %v3857 = vcombine.low %v3833, %v3849
      %v3858 = vcombine.high %v3833, %v3849
      %v3859 = vcombine.low %v3840, %v3856
      %v3860 = vcombine.high %v3840, %v3856
      %3862 = vrot.lane.b32.xlu0 %v3858, 32
      %v3863 = vpop.permute.xlu0 %3862
      %3866 = vrot.lane.b32.xlu0 %v3859, 64
      %v3867 = vpop.permute.xlu0 %3866
      %3870 = vrot.lane.b32.xlu0 %v3860, 96
      %v3871 = vpop.permute.xlu0 %3870
      %v3873 = vsel %vm1104, %v3857, %v3863
      %v3874 = vsel %vm1121, %v3873, %v3867
      %v3875 = vsel %vm1138, %v3874, %v3871
      %v3876 = vld [vmem:[%s6 + $0x4] ss:$0 sm:$0xff]
      %v3877 = vpack.c.bf16 %v3875, %v3875
      %v3878 = vld [vmem:[%s5] sm:$0xf]
      %v3879 = vld [vmem:[%s5 + $0x4] sm:$0xf]
      %v3880 = vld [vmem:[%s5 + $0x8] sm:$0xf]
      %v3881 = vld [vmem:[%s5 + $0xc] sm:$0xf]
      %v3882 = vld [vmem:[%s5 + $0x10] sm:$0xf]
      %v3883 = vld [vmem:[%s5 + $0x14] sm:$0xf]
      %v3884 = vld [vmem:[%s5 + $0x18] sm:$0xf]
      %v3885 = vld [vmem:[%s5 + $0x1c] sm:$0xf]
      %v3886 = vld [vmem:[%s5 + $0x20] sm:$0xf]
      %v3887 = vld [vmem:[%s5 + $0x24] sm:$0xf]
      %v3888 = vld [vmem:[%s5 + $0x28] sm:$0xf]
      %v3889 = vld [vmem:[%s5 + $0x2c] sm:$0xf]
      %v3890 = vld [vmem:[%s5 + $0x30] sm:$0xf]
      %v3891 = vld [vmem:[%s5 + $0x34] sm:$0xf]
      %v3892 = vld [vmem:[%s5 + $0x38] sm:$0xf]
      %v3893 = vld [vmem:[%s5 + $0x3c] sm:$0xf]
      %v3910 = vunpack.c.l.b16 %v3878
      %v3911 = vunpack.c.l.b16 %v3879
      %v3912 = vunpack.c.l.b16 %v3880
      %v3913 = vunpack.c.l.b16 %v3881
      %v3914 = vunpack.c.l.b16 %v3882
      %v3915 = vunpack.c.l.b16 %v3883
      %v3916 = vunpack.c.l.b16 %v3884
      %v3917 = vunpack.c.l.b16 %v3885
      %v3918 = vunpack.c.l.b16 %v3886
      %v3919 = vunpack.c.l.b16 %v3887
      %v3920 = vunpack.c.l.b16 %v3888
      %v3921 = vunpack.c.l.b16 %v3889
      %v3922 = vunpack.c.l.b16 %v3890
      %v3923 = vunpack.c.l.b16 %v3891
      %v3924 = vunpack.c.l.b16 %v3892
      %v3925 = vunpack.c.l.b16 %v3893
      %v3926 = vpack.c.b16 %v3911, %v3910
      %v3927 = vpack.c.b16 %v3913, %v3912
      %v3928 = vpack.c.b16 %v3915, %v3914
      %v3929 = vpack.c.b16 %v3917, %v3916
      %v3930 = vpack.c.b16 %v3919, %v3918
      %v3931 = vpack.c.b16 %v3921, %v3920
      %v3932 = vpack.c.b16 %v3923, %v3922
      %v3933 = vpack.c.b16 %v3925, %v3924
      %3942 = vmatprep.subr.bf16.mxu0 0
      %3943 = vmatpush1.bf16.msra.mxu0 %v3926
      %3944 = vmatprep.subr.bf16.mxu0 0
      %3945 = vmatpush1.bf16.msra.mxu0 %v3927
      %3946 = vmatprep.subr.bf16.mxu0 0
      %3947 = vmatpush1.bf16.msra.mxu0 %v3928
      %3948 = vmatprep.subr.bf16.mxu0 0
      %3949 = vmatpush1.bf16.msra.mxu0 %v3929
      %3950 = vmatprep.subr.bf16.mxu0 0
      %3951 = vmatpush1.bf16.msra.mxu0 %v3930
      %3952 = vmatprep.subr.bf16.mxu0 0
      %3953 = vmatpush1.bf16.msra.mxu0 %v3931
      %3954 = vmatprep.subr.bf16.mxu0 0
      %3955 = vmatpush1.bf16.msra.mxu0 %v3932
      %3956 = vmatprep.subr.bf16.mxu0 0
      %3957 = vmatpush1.bf16.msra.mxu0 %v3933
      %3958 = vmatprep.subr.bf16.mxu0 0
      %3959 = vmatpush1.bf16.msra.mxu0 0
      %3960 = vmatprep.subr.bf16.mxu0 0
      %3961 = vmatpush1.bf16.msra.mxu0 0
      %3962 = vmatprep.subr.bf16.mxu0 0
      %3963 = vmatpush1.bf16.msra.mxu0 0
      %3964 = vmatprep.subr.bf16.mxu0 0
      %3965 = vmatpush1.bf16.msra.mxu0 0
      %3966 = vmatprep.subr.bf16.mxu0 0
      %3967 = vmatpush1.bf16.msra.mxu0 0
      %3968 = vmatprep.subr.bf16.mxu0 0
      %3969 = vmatpush1.bf16.msra.mxu0 0
      %3970 = vmatprep.subr.bf16.mxu0 0
      %3971 = vmatpush1.bf16.msra.mxu0 0
      %3972 = vmatprep.subr.bf16.mxu0 0
      %3973 = vmatpush1.bf16.msra.mxu0 0
      %3974 = vmatprep.mubr.bf16.mxu0 0
      %3975 = vmatmul.mubr.bf16.gmra.mrb[0].mxu0 %v3877
      %v3976 = vpop.f32.mrb[0].mxu0
      %v3977 = vadd.f32 %v3876, %v3976
      %v3978 = vpop.f32.mrb[0].mxu0
      %v3979 = vpop.f32.mrb[0].mxu0
      %v3980 = vpop.f32.mrb[0].mxu0
      %3981 = vdwg.mxu0
      %vm3982 = vcmp.ge.f32.partialorder %v3977, 0.0
      %v3983 = vmul.f32 %v3977, 0.01
      %v3984 = vsel %vm3982, %v3977, %v3983
      %v3985 = vadd.f32 %v3875, %v3984
      %v3986 = vld [vmem:[%s6 + $0x5] ss:$0 sm:$0xff]
      %v3987 = vpack.c.bf16 %v3985, %v3985
      %s3988 = scalar_lea.vmem %s5, 64
      %v3989 = vld [vmem:[%s3988] sm:$0xf]
      %v3990 = vld [vmem:[%s3988 + $0x4] sm:$0xf]
      %v3991 = vld [vmem:[%s3988 + $0x8] sm:$0xf]
      %v3992 = vld [vmem:[%s3988 + $0xc] sm:$0xf]
      %v3993 = vld [vmem:[%s3988 + $0x10] sm:$0xf]
      %v3994 = vld [vmem:[%s3988 + $0x14] sm:$0xf]
      %v3995 = vld [vmem:[%s3988 + $0x18] sm:$0xf]
      %v3996 = vld [vmem:[%s3988 + $0x1c] sm:$0xf]
      %v3997 = vld [vmem:[%s3988 + $0x20] sm:$0xf]
      %v3998 = vld [vmem:[%s3988 + $0x24] sm:$0xf]
      %v3999 = vld [vmem:[%s3988 + $0x28] sm:$0xf]
      %v4000 = vld [vmem:[%s3988 + $0x2c] sm:$0xf]
      %v4001 = vld [vmem:[%s3988 + $0x30] sm:$0xf]
      %v4002 = vld [vmem:[%s3988 + $0x34] sm:$0xf]
      %v4003 = vld [vmem:[%s3988 + $0x38] sm:$0xf]
      %v4004 = vld [vmem:[%s3988 + $0x3c] sm:$0xf]
      %v4021 = vunpack.c.l.b16 %v3989
      %v4022 = vunpack.c.l.b16 %v3990
      %v4023 = vunpack.c.l.b16 %v3991
      %v4024 = vunpack.c.l.b16 %v3992
      %v4025 = vunpack.c.l.b16 %v3993
      %v4026 = vunpack.c.l.b16 %v3994
      %v4027 = vunpack.c.l.b16 %v3995
      %v4028 = vunpack.c.l.b16 %v3996
      %v4029 = vunpack.c.l.b16 %v3997
      %v4030 = vunpack.c.l.b16 %v3998
      %v4031 = vunpack.c.l.b16 %v3999
      %v4032 = vunpack.c.l.b16 %v4000
      %v4033 = vunpack.c.l.b16 %v4001
      %v4034 = vunpack.c.l.b16 %v4002
      %v4035 = vunpack.c.l.b16 %v4003
      %v4036 = vunpack.c.l.b16 %v4004
      %v4037 = vpack.c.b16 %v4022, %v4021
      %v4038 = vpack.c.b16 %v4024, %v4023
      %v4039 = vpack.c.b16 %v4026, %v4025
      %v4040 = vpack.c.b16 %v4028, %v4027
      %v4041 = vpack.c.b16 %v4030, %v4029
      %v4042 = vpack.c.b16 %v4032, %v4031
      %v4043 = vpack.c.b16 %v4034, %v4033
      %v4044 = vpack.c.b16 %v4036, %v4035
      %4053 = vmatprep.subr.bf16.mxu0 0
      %4054 = vmatpush1.bf16.msra.mxu0 %v4037
      %4055 = vmatprep.subr.bf16.mxu0 0
      %4056 = vmatpush1.bf16.msra.mxu0 %v4038
      %4057 = vmatprep.subr.bf16.mxu0 0
      %4058 = vmatpush1.bf16.msra.mxu0 %v4039
      %4059 = vmatprep.subr.bf16.mxu0 0
      %4060 = vmatpush1.bf16.msra.mxu0 %v4040
      %4061 = vmatprep.subr.bf16.mxu0 0
      %4062 = vmatpush1.bf16.msra.mxu0 %v4041
      %4063 = vmatprep.subr.bf16.mxu0 0
      %4064 = vmatpush1.bf16.msra.mxu0 %v4042
      %4065 = vmatprep.subr.bf16.mxu0 0
      %4066 = vmatpush1.bf16.msra.mxu0 %v4043
      %4067 = vmatprep.subr.bf16.mxu0 0
      %4068 = vmatpush1.bf16.msra.mxu0 %v4044
      %4069 = vmatprep.subr.bf16.mxu0 0
      %4070 = vmatpush1.bf16.msra.mxu0 0
      %4071 = vmatprep.subr.bf16.mxu0 0
      %4072 = vmatpush1.bf16.msra.mxu0 0
      %4073 = vmatprep.subr.bf16.mxu0 0
      %4074 = vmatpush1.bf16.msra.mxu0 0
      %4075 = vmatprep.subr.bf16.mxu0 0
      %4076 = vmatpush1.bf16.msra.mxu0 0
      %4077 = vmatprep.subr.bf16.mxu0 0
      %4078 = vmatpush1.bf16.msra.mxu0 0
      %4079 = vmatprep.subr.bf16.mxu0 0
      %4080 = vmatpush1.bf16.msra.mxu0 0
      %4081 = vmatprep.subr.bf16.mxu0 0
      %4082 = vmatpush1.bf16.msra.mxu0 0
      %4083 = vmatprep.subr.bf16.mxu0 0
      %4084 = vmatpush1.bf16.msra.mxu0 0
      %4085 = vmatprep.mubr.bf16.mxu0 0
      %4086 = vmatmul.mubr.bf16.gmra.mrb[0].mxu0 %v3987
      %v4087 = vpop.f32.mrb[0].mxu0
      %v4088 = vadd.f32 %v3986, %v4087
      %v4089 = vpop.f32.mrb[0].mxu0
      %v4090 = vpop.f32.mrb[0].mxu0
      %v4091 = vpop.f32.mrb[0].mxu0
      %4092 = vdwg.mxu0
      %vm4093 = vcmp.ge.f32.partialorder %v4088, 0.0
      %v4094 = vmul.f32 %v4088, 0.01
      %v4095 = vsel %vm4093, %v4088, %v4094
      %v4096 = vadd.f32 %v3985, %v4095
      %v4097 = vmul.f32 %v4096, %v304
      %4098 = vadd.xlane.f32.xlu0 %v4097
      %v4099 = vpop.xlane.xlu0 %4098
      %v4100 = vadd.f32 %v4099, %v305
      %v4102 = vcombine.high %v4100, %v4100
      %v4104 = vunpack.c.l.s4 1966171168
      %v4105 = vunpack.c.0.s8 %v4104
      %v4106 = vlaneseq
      %v4107 = vshrl.u32 %v4106, 7
      %v4108 = vsub.s32 %v4105, %v4107
      %v4109 = vrot.slane %v4100, %v4108
      %v4111 = vunpack.c.l.s4 1966171168
      %v4112 = vunpack.c.0.s8 %v4111
      %v4113 = vlaneseq
      %v4114 = vshrl.u32 %v4113, 7
      %v4115 = vsub.s32 %v4112, %v4114
      %v4116 = vrot.slane %v4102, %v4115
      %v4117 = vcombine.high %v4109, %v4109
      %v4118 = vcombine.high %v4116, %v4116
      %v4120 = vunpack.c.l.s4 1966171168
      %v4121 = vunpack.c.0.s8 %v4120
      %v4122 = vlaneseq
      %v4123 = vshrl.u32 %v4122, 7
      %v4124 = vsub.s32 %v4121, %v4123
      %v4125 = vrot.slane %v4109, %v4124
      %v4127 = vunpack.c.l.s4 1966171168
      %v4128 = vunpack.c.0.s8 %v4127
      %v4129 = vlaneseq
      %v4130 = vshrl.u32 %v4129, 7
      %v4131 = vsub.s32 %v4128, %v4130
      %v4132 = vrot.slane %v4116, %v4131
      %v4134 = vunpack.c.l.s4 1966171168
      %v4135 = vunpack.c.0.s8 %v4134
      %v4136 = vlaneseq
      %v4137 = vshrl.u32 %v4136, 7
      %v4138 = vsub.s32 %v4135, %v4137
      %v4139 = vrot.slane %v4117, %v4138
      %v4141 = vunpack.c.l.s4 1966171168
      %v4142 = vunpack.c.0.s8 %v4141
      %v4143 = vlaneseq
      %v4144 = vshrl.u32 %v4143, 7
      %v4145 = vsub.s32 %v4142, %v4144
      %v4146 = vrot.slane %v4118, %v4145
      %v4147 = vcombine.high %v4125, %v4125
      %v4148 = vcombine.high %v4132, %v4132
      %v4149 = vcombine.high %v4139, %v4139
      %v4150 = vcombine.high %v4146, %v4146
      %vm4159 = vcmask 0
      %4160 = vst.msk [vmem:[%s281] sm:$0x1] %vm4159, %v4125
      %4161 = vst.msk [vmem:[%s281 + $0x1] sm:$0x1] %vm4159, %v4139
      %4162 = vst.msk [vmem:[%s281 + $0x2] sm:$0x1] %vm4159, %v4147
      %4163 = vst.msk [vmem:[%s281 + $0x3] sm:$0x1] %vm4159, %v4149
      %4164 = vst.msk [vmem:[%s281 + $0x4] sm:$0x1] %vm4159, %v4132
      %4165 = vst.msk [vmem:[%s281 + $0x5] sm:$0x1] %vm4159, %v4146
      %4166 = vst.msk [vmem:[%s281 + $0x6] sm:$0x1] %vm4159, %v4148
      %4167 = vst.msk [vmem:[%s281 + $0x7] sm:$0x1] %vm4159, %v4150
      %s4168 = smul.u32 8, %s18
      %p4169 = scmp.lt.s32.totalorder %s4168, 15
      %s4170 = scalar_select %p4169, %s4168, 15
      %s4171 = scalar_lea.vmem %s7, %s4170
      // Predicated region
      $region49: #{tpu_custom_call.1} parent=47 // pred_check
        %p4172 = pneg %p188
      $region50: #{tpu_custom_call.1} parent=47 // pred_check_branch
        %4174 = sbr.rel (%p4172) target = $region52
      $region51: #{tpu_custom_call.1} parent=47 // pred_region
        %s4175 = smul.u32 8, %s18
      $region52: #{tpu_custom_call.1} parent=47 // pred_fallthru
        _
    $region48: #{tpu_custom_call.1} parent=5 // pred_fallthru
      _
    %p4176 = scmp.le.s32.totalorder 2, %s13
    // Predicated region
    $region53: #{tpu_custom_call.1} parent=5 // pred_check
      %p4177 = pneg %p4176
    $region54: #{tpu_custom_call.1} parent=5 // pred_check_branch
      %4179 = sbr.rel (%p4177) target = $region56
    $region55: #{tpu_custom_call.1} parent=5 // pred_region
      %s4180 = ssub.s32 %s13, 2
      // Predicated region
      $region57: #{tpu_custom_call.1} parent=55 // pred_check
        %p4181 = pneg %p194
      $region58: #{tpu_custom_call.1} parent=55 // pred_check_branch
        %4183 = sbr.rel (%p4181) target = $region60
      $region59: #{tpu_custom_call.1} parent=55 // pred_region
        %s4184 = smul.u32 8, %s19
        %p4185 = scmp.lt.s32.totalorder %s4184, 15
        %s4186 = scalar_select %p4185, %s4184, 15
        %s4187 = scalar_lea.vmem %s7, %s4186
      $region60: #{tpu_custom_call.1} parent=55 // pred_fallthru
        _
    $region56: #{tpu_custom_call.1} parent=5 // pred_fallthru
      _
  $region6: #{tpu_custom_call.1} parent=0 // loop_footer
    %s17 = sadd.s32 1, %s13
  $region7: #{tpu_custom_call.1} parent=0 // loop_footer_branch
    %12 = sbr.rel target = $region3
  $region8: #{tpu_custom_call.1} parent=0 // loop_exit
    _

</llo_original>
